<compile_context>
chip_gen: v7x
topology: tpu7x:2x2x1
jax: 0.10.0
libtpu: 0.0.40
codegen_flags: <defaults>
</compile_context>

<pallas_src>
import jax
import jax.numpy as jnp
from jax import lax
from jax.experimental import pallas as pl
from jax.experimental.pallas import tpu as pltpu


def temporal_kernel(x2d_ref, wih0_ref, whh0_ref, b0_ref,
                    w1_ref, b1_ref,
                    wq_ref, wk_ref, wv_ref,
                    atten_ref, y_ref, hall_ref):
    B, T, H = atten_ref.shape          # static python ints

    wih0 = wih0_ref[...]               # (H, 4H)
    whh0 = whh0_ref[...]               # (H, 4H)
    w1 = w1_ref[...]                   # (2H, 4H)  == concat([W_ih1.T, W_hh1.T], axis=0)

    # Layer-0 input projection for all time steps in one matmul; b0 folded in.
    # Rows are ordered (t, b) -> row t*B + b (time-major, done in the wrapper).
    pre0 = jnp.dot(x2d_ref[...], wih0,
                   preferred_element_type=jnp.float32) + b0_ref[...]      # (T*B, 4H)

    # Pre-broadcast layer-1 bias once (broadcast_in_dim is not CSE'd inside loops).
    b1 = jnp.broadcast_to(b1_ref[...], (B, 4 * H))

    def gates_to_hc(gates, c):
        i = jax.nn.sigmoid(gates[:, 0 * H:1 * H])
        f = jax.nn.sigmoid(gates[:, 1 * H:2 * H])
        g = jnp.tanh(gates[:, 2 * H:3 * H])
        o = jax.nn.sigmoid(gates[:, 3 * H:4 * H])
        c_new = f * c + i * g
        h_new = o * jnp.tanh(c_new)
        return h_new, c_new

    z = jnp.zeros((B, H), jnp.float32)
    h1, c1, h2, c2 = z, z, z, z

    # T is small and static -> full unroll of the recurrence.
    for t in range(T):
        # Layer 0: only the recurrent matmul remains on the serial path.
        g0 = pre0[t * B:(t + 1) * B, :] + jnp.dot(
            h1, whh0, preferred_element_type=jnp.float32)
        h1, c1 = gates_to_hc(g0, c1)
        # Layer 1: fused [x ; h] @ [W_ih ; W_hh] -> single MXU push per step.
        hx = jnp.concatenate([h1, h2], axis=1)                            # (B, 2H)
        g1 = jnp.dot(hx, w1, preferred_element_type=jnp.float32) + b1
        h2, c2 = gates_to_hc(g1, c2)
        hall_ref[:, t, :] = h2                                            # store LSTM output

    # y_long = lstm_out[:, -1, 0]  (h2 is the final-step layer-1 hidden state)
    y_ref[...] = h2[:, 0:1]                                               # (B, 1)

    wq = wq_ref[...]
    wk = wk_ref[...]
    wv = wv_ref[...]
    inv_h = 1.0 / float(H)

    # Self-attention, per batch (B small & static).  All operands kept lane-dense
    # (last dim = H); output written in (T, H) orientation.
    for b in range(B):
        xb = hall_ref[b]                                                  # (T, H)
        qb = jnp.dot(wq, xb, preferred_element_type=jnp.float32)          # (T, H) == Q[b].T
        kb = jnp.dot(wk, xb, preferred_element_type=jnp.float32)          # (T, H) == K[b]
        vb = jnp.dot(wv, xb, preferred_element_type=jnp.float32)          # (T, H) == V[b].T
        # alpha[b] = Q[b] @ K[b] / H = qb^T @ kb / H                      (H, H)
        alpha = lax.dot_general(qb, kb, (((0,), (0,)), ((), ())),
                                preferred_element_type=jnp.float32) * inv_h
        alpha = alpha - jnp.max(alpha, axis=-1, keepdims=True)
        e = jnp.exp(alpha)
        alpha = e * pl.reciprocal(jnp.sum(e, axis=-1, keepdims=True), approx=False)
        # ATTEN[b]^T = V[b]^T @ alpha^T = vb @ alpha^T                    (T, H)
        atten_ref[b] = lax.dot_general(vb, alpha, (((1,), (1,)), ((), ())),
                                       preferred_element_type=jnp.float32)


@jax.jit
def temporal_forward(x, params):
    """x: (B, T, H) float32.  Returns (ATTEN_out (B, H, T), y_long (B,))."""
    B, T, H = x.shape
    # Time-major, flattened for the hoisted layer-0 projection: row = t*B + b.
    x2d = jnp.transpose(x, (1, 0, 2)).reshape(T * B, H)

    # Fuse layer-1 weights once: [W_ih1.T ; W_hh1.T] -> (2H, 4H).
    w1cat = jnp.concatenate([params['w_ih_l1'].T, params['w_hh_l1'].T], axis=0)

    kernel_args = (
        x2d,
        params['w_ih_l0'].T, params['w_hh_l0'].T,
        (params['b_ih_l0'] + params['b_hh_l0'])[None, :],
        w1cat,
        (params['b_ih_l1'] + params['b_hh_l1'])[None, :],
        params['wq'], params['wk'], params['wv'],
    )

    vmem = pl.BlockSpec(memory_space=pltpu.MemorySpace.VMEM)
    atten_bth, y = pl.pallas_call(
        temporal_kernel,
        out_shape=(jax.ShapeDtypeStruct((B, T, H), jnp.float32),   # lane-dense (H=32) output
                   jax.ShapeDtypeStruct((B, 1), jnp.float32)),
        in_specs=[vmem] * len(kernel_args),
        out_specs=(vmem, vmem),
        scratch_shapes=[pltpu.VMEM((B, T, H), jnp.float32)],
    )(*kernel_args)
    # Final (B,T,H) -> (B,H,T) transpose done outside the kernel (cheap XLA op).
    return jnp.transpose(atten_bth, (0, 2, 1)), y[:, 0]


def ref_forward(x, params):
    """Pure-JAX reference matching PyTorch semantics."""
    B, T, H = x.shape

    def lstm_layer(inp, wih, whh, bih, bhh):
        def cell(carry, x_t):
            h, c = carry
            gates = x_t @ wih.T + bih + h @ whh.T + bhh
            i, f, g, o = jnp.split(gates, 4, axis=-1)
            i = jax.nn.sigmoid(i)
            f = jax.nn.sigmoid(f)
            g = jnp.tanh(g)
            o = jax.nn.sigmoid(o)
            c = f * c + i * g
            h = o * jnp.tanh(c)
            return (h, c), h
        z = jnp.zeros((B, H), jnp.float32)
        _, hs = lax.scan(cell, (z, z), jnp.transpose(inp, (1, 0, 2)))
        return jnp.transpose(hs, (1, 0, 2))

    out1 = lstm_layer(x, params['w_ih_l0'], params['w_hh_l0'],
                      params['b_ih_l0'], params['b_hh_l0'])
    out2 = lstm_layer(out1, params['w_ih_l1'], params['w_hh_l1'],
                      params['b_ih_l1'], params['b_hh_l1'])
    y_long = out2[:, -1, 0]
    x_long = jnp.transpose(out2, (0, 2, 1))                      # (B, H, T)
    Q = x_long @ params['wq'].T
    K = jnp.transpose(x_long @ params['wk'].T, (0, 2, 1))
    V = x_long @ params['wv'].T
    alpha = jnp.matmul(Q, K) / K.shape[2]
    alpha = jax.nn.softmax(alpha, axis=2)
    return jnp.matmul(alpha, V), y_long


def init_params(key, H, T):
    ks = jax.random.split(key, 11)
    k_lstm = 1.0 / float(H) ** 0.5
    k_lin = 1.0 / float(T) ** 0.5

    def u(k, shape, s):
        return jax.random.uniform(k, shape, jnp.float32, -s, s)

    return {
        'w_ih_l0': u(ks[0], (4 * H, H), k_lstm),
        'w_hh_l0': u(ks[1], (4 * H, H), k_lstm),
        'b_ih_l0': u(ks[2], (4 * H,), k_lstm),
        'b_hh_l0': u(ks[3], (4 * H,), k_lstm),
        'w_ih_l1': u(ks[4], (4 * H, H), k_lstm),
        'w_hh_l1': u(ks[5], (4 * H, H), k_lstm),
        'b_ih_l1': u(ks[6], (4 * H,), k_lstm),
        'b_hh_l1': u(ks[7], (4 * H,), k_lstm),
        'wq': u(ks[8], (T, T), k_lin),
        'wk': u(ks[9], (T, T), k_lin),
        'wv': u(ks[10], (T, T), k_lin),
    }


if __name__ == "__main__":
    # args: LOOK_BACK=16, kcnn=9 -> seq_len=8 ; layer=32 ; batch=2
    B, LOOK_BACK, KCNN, LAYER = 2, 16, 9, 32
    T = LOOK_BACK - KCNN + 1   # 8
    H = LAYER                  # 32

    key = jax.random.PRNGKey(0)
    kx, kp = jax.random.split(key)
    x = jax.random.normal(kx, (B, T, H), jnp.float32)   # (batch, seq_len, layer)
    params = init_params(kp, H, T)

    atten, y = temporal_forward(x, params)
    (atten, y) = jax.block_until_ready((atten, y))

    atten_ref, y_ref = ref_forward(x, params)
    assert atten.shape == (B, H, T) and y.shape == (B,)
    assert jnp.allclose(atten, atten_ref, atol=1e-4, rtol=1e-4)
    assert jnp.allclose(y, y_ref, atol=1e-4, rtol=1e-4)

    print("KERNEL_OK")
</pallas_src>

<mosaic_0001>
module attributes {stable_mosaic.version = 11 : i64} {
  func.func @temporal_kernel(%arg0: memref<16x32xf32, #tpu.memory_space<vmem>>, %arg1: memref<32x128xf32, #tpu.memory_space<vmem>>, %arg2: memref<32x128xf32, #tpu.memory_space<vmem>>, %arg3: memref<1x128xf32, #tpu.memory_space<vmem>>, %arg4: memref<64x128xf32, #tpu.memory_space<vmem>>, %arg5: memref<1x128xf32, #tpu.memory_space<vmem>>, %arg6: memref<8x8xf32, #tpu.memory_space<vmem>>, %arg7: memref<8x8xf32, #tpu.memory_space<vmem>>, %arg8: memref<8x8xf32, #tpu.memory_space<vmem>>, %arg9: memref<2x8x32xf32, #tpu.memory_space<vmem>>, %arg10: memref<2x1xf32, #tpu.memory_space<vmem>>, %arg11: memref<2x8x32xf32, #tpu.memory_space<vmem>>) attributes {dimension_semantics = [], scalar_prefetch = 0 : i64, scratch_operands = 1 : i64, tpu.core_type = #tpu.core_type<tc>} {
    %c0 = arith.constant 0 : index
    %c0_0 = arith.constant 0 : index
    %0 = vector.load %arg1[%c0, %c0_0] : memref<32x128xf32, #tpu.memory_space<vmem>>, vector<32x128xf32>
    %c0_1 = arith.constant 0 : index
    %c0_2 = arith.constant 0 : index
    %1 = vector.load %arg2[%c0_1, %c0_2] : memref<32x128xf32, #tpu.memory_space<vmem>>, vector<32x128xf32>
    %c0_3 = arith.constant 0 : index
    %c0_4 = arith.constant 0 : index
    %2 = vector.load %arg4[%c0_3, %c0_4] : memref<64x128xf32, #tpu.memory_space<vmem>>, vector<64x128xf32>
    %c0_5 = arith.constant 0 : index
    %c0_6 = arith.constant 0 : index
    %3 = vector.load %arg0[%c0_5, %c0_6] : memref<16x32xf32, #tpu.memory_space<vmem>>, vector<16x32xf32>
    %cst = arith.constant dense<0.000000e+00> : vector<16x128xf32>
    %4 = tpu.matmul %3, %0, %cst {dimension_numbers = #tpu.dot_dimension_numbers<[1], [0], [0], [1], [0, 0, 1, 1], [], []>} : vector<16x32xf32>, vector<32x128xf32>, vector<16x128xf32> -> vector<16x128xf32>
    %c0_7 = arith.constant 0 : index
    %c0_8 = arith.constant 0 : index
    %5 = vector.load %arg3[%c0_7, %c0_8] : memref<1x128xf32, #tpu.memory_space<vmem>>, vector<1x128xf32>
    %6 = vector.broadcast %5 : vector<1x128xf32> to vector<16x128xf32>
    %7 = arith.addf %4, %6 : vector<16x128xf32>
    %c0_9 = arith.constant 0 : index
    %c0_10 = arith.constant 0 : index
    %8 = vector.load %arg5[%c0_9, %c0_10] : memref<1x128xf32, #tpu.memory_space<vmem>>, vector<1x128xf32>
    %9 = vector.shape_cast %8 : vector<1x128xf32> to vector<1x128xf32>
    %10 = vector.broadcast %9 : vector<1x128xf32> to vector<2x128xf32>
    %cst_11 = arith.constant 0.000000e+00 : f32
    %11 = vector.broadcast %cst_11 : f32 to vector<2x32xf32>
    %12 = vector.extract_strided_slice %7 {offsets = [0, 0], sizes = [2, 128], strides = [1, 1]} : vector<16x128xf32> to vector<2x128xf32>
    %cst_12 = arith.constant dense<0.000000e+00> : vector<2x128xf32>
    %13 = tpu.matmul %11, %1, %cst_12 {dimension_numbers = #tpu.dot_dimension_numbers<[1], [0], [0], [1], [0, 0, 1, 1], [], []>} : vector<2x32xf32>, vector<32x128xf32>, vector<2x128xf32> -> vector<2x128xf32>
    %14 = arith.addf %12, %13 : vector<2x128xf32>
    %15 = vector.extract_strided_slice %14 {offsets = [0, 0], sizes = [2, 32], strides = [1, 1]} : vector<2x128xf32> to vector<2x32xf32>
    %16 = arith.negf %15 : vector<2x32xf32>
    %17 = math.exp %16 : vector<2x32xf32>
    %cst_13 = arith.constant 1.000000e+00 : f32
    %18 = vector.broadcast %cst_13 : f32 to vector<2x32xf32>
    %19 = arith.addf %18, %17 : vector<2x32xf32>
    %20 = arith.divf %18, %19 : vector<2x32xf32>
    %21 = vector.extract_strided_slice %14 {offsets = [0, 32], sizes = [2, 32], strides = [1, 1]} : vector<2x128xf32> to vector<2x32xf32>
    %22 = arith.negf %21 : vector<2x32xf32>
    %23 = math.exp %22 : vector<2x32xf32>
    %cst_14 = arith.constant 1.000000e+00 : f32
    %24 = vector.broadcast %cst_14 : f32 to vector<2x32xf32>
    %25 = arith.addf %24, %23 : vector<2x32xf32>
    %26 = arith.divf %24, %25 : vector<2x32xf32>
    %27 = vector.extract_strided_slice %14 {offsets = [0, 64], sizes = [2, 32], strides = [1, 1]} : vector<2x128xf32> to vector<2x32xf32>
    %28 = math.tanh %27 : vector<2x32xf32>
    %29 = vector.extract_strided_slice %14 {offsets = [0, 96], sizes = [2, 32], strides = [1, 1]} : vector<2x128xf32> to vector<2x32xf32>
    %30 = arith.negf %29 : vector<2x32xf32>
    %31 = math.exp %30 : vector<2x32xf32>
    %cst_15 = arith.constant 1.000000e+00 : f32
    %32 = vector.broadcast %cst_15 : f32 to vector<2x32xf32>
    %33 = arith.addf %32, %31 : vector<2x32xf32>
    %34 = arith.divf %32, %33 : vector<2x32xf32>
    %35 = arith.mulf %26, %11 : vector<2x32xf32>
    %36 = arith.mulf %20, %28 : vector<2x32xf32>
    %37 = arith.addf %35, %36 : vector<2x32xf32>
    %38 = math.tanh %37 : vector<2x32xf32>
    %39 = arith.mulf %34, %38 : vector<2x32xf32>
    %40 = tpu.concatenate %39, %11 in 1 : vector<2x32xf32>, vector<2x32xf32> -> vector<2x64xf32>
    %cst_16 = arith.constant dense<0.000000e+00> : vector<2x128xf32>
    %41 = tpu.matmul %40, %2, %cst_16 {dimension_numbers = #tpu.dot_dimension_numbers<[1], [0], [0], [1], [0, 0, 1, 1], [], []>} : vector<2x64xf32>, vector<64x128xf32>, vector<2x128xf32> -> vector<2x128xf32>
    %42 = arith.addf %41, %10 : vector<2x128xf32>
    %43 = vector.extract_strided_slice %42 {offsets = [0, 0], sizes = [2, 32], strides = [1, 1]} : vector<2x128xf32> to vector<2x32xf32>
    %44 = arith.negf %43 : vector<2x32xf32>
    %45 = math.exp %44 : vector<2x32xf32>
    %cst_17 = arith.constant 1.000000e+00 : f32
    %46 = vector.broadcast %cst_17 : f32 to vector<2x32xf32>
    %47 = arith.addf %46, %45 : vector<2x32xf32>
    %48 = arith.divf %46, %47 : vector<2x32xf32>
    %49 = vector.extract_strided_slice %42 {offsets = [0, 32], sizes = [2, 32], strides = [1, 1]} : vector<2x128xf32> to vector<2x32xf32>
    %50 = arith.negf %49 : vector<2x32xf32>
    %51 = math.exp %50 : vector<2x32xf32>
    %cst_18 = arith.constant 1.000000e+00 : f32
    %52 = vector.broadcast %cst_18 : f32 to vector<2x32xf32>
    %53 = arith.addf %52, %51 : vector<2x32xf32>
    %54 = arith.divf %52, %53 : vector<2x32xf32>
    %55 = vector.extract_strided_slice %42 {offsets = [0, 64], sizes = [2, 32], strides = [1, 1]} : vector<2x128xf32> to vector<2x32xf32>
    %56 = math.tanh %55 : vector<2x32xf32>
    %57 = vector.extract_strided_slice %42 {offsets = [0, 96], sizes = [2, 32], strides = [1, 1]} : vector<2x128xf32> to vector<2x32xf32>
    %58 = arith.negf %57 : vector<2x32xf32>
    %59 = math.exp %58 : vector<2x32xf32>
    %cst_19 = arith.constant 1.000000e+00 : f32
    %60 = vector.broadcast %cst_19 : f32 to vector<2x32xf32>
    %61 = arith.addf %60, %59 : vector<2x32xf32>
    %62 = arith.divf %60, %61 : vector<2x32xf32>
    %63 = arith.mulf %54, %11 : vector<2x32xf32>
    %64 = arith.mulf %48, %56 : vector<2x32xf32>
    %65 = arith.addf %63, %64 : vector<2x32xf32>
    %66 = math.tanh %65 : vector<2x32xf32>
    %67 = arith.mulf %62, %66 : vector<2x32xf32>
    %c0_20 = arith.constant 0 : index
    %c0_21 = arith.constant 0 : index
    %c0_22 = arith.constant 0 : index
    %68 = vector.load %arg11[%c0_20, %c0_21, %c0_22] : memref<2x8x32xf32, #tpu.memory_space<vmem>>, vector<2x1x32xf32>
    %69 = vector.shape_cast %68 : vector<2x1x32xf32> to vector<2x32xf32>
    %70 = vector.shape_cast %67 : vector<2x32xf32> to vector<2x1x32xf32>
    tpu.vector_store %arg11[%c0_20, %c0_21, %c0_22], %70 {strides = array<i32>} : memref<2x8x32xf32, #tpu.memory_space<vmem>>, vector<2x1x32xf32>,
    %71 = vector.extract_strided_slice %7 {offsets = [2, 0], sizes = [2, 128], strides = [1, 1]} : vector<16x128xf32> to vector<2x128xf32>
    %cst_23 = arith.constant dense<0.000000e+00> : vector<2x128xf32>
    %72 = tpu.matmul %39, %1, %cst_23 {dimension_numbers = #tpu.dot_dimension_numbers<[1], [0], [0], [1], [0, 0, 1, 1], [], []>} : vector<2x32xf32>, vector<32x128xf32>, vector<2x128xf32> -> vector<2x128xf32>
    %73 = arith.addf %71, %72 : vector<2x128xf32>
    %74 = vector.extract_strided_slice %73 {offsets = [0, 0], sizes = [2, 32], strides = [1, 1]} : vector<2x128xf32> to vector<2x32xf32>
    %75 = arith.negf %74 : vector<2x32xf32>
    %76 = math.exp %75 : vector<2x32xf32>
    %cst_24 = arith.constant 1.000000e+00 : f32
    %77 = vector.broadcast %cst_24 : f32 to vector<2x32xf32>
    %78 = arith.addf %77, %76 : vector<2x32xf32>
    %79 = arith.divf %77, %78 : vector<2x32xf32>
    %80 = vector.extract_strided_slice %73 {offsets = [0, 32], sizes = [2, 32], strides = [1, 1]} : vector<2x128xf32> to vector<2x32xf32>
    %81 = arith.negf %80 : vector<2x32xf32>
    %82 = math.exp %81 : vector<2x32xf32>
    %cst_25 = arith.constant 1.000000e+00 : f32
    %83 = vector.broadcast %cst_25 : f32 to vector<2x32xf32>
    %84 = arith.addf %83, %82 : vector<2x32xf32>
    %85 = arith.divf %83, %84 : vector<2x32xf32>
    %86 = vector.extract_strided_slice %73 {offsets = [0, 64], sizes = [2, 32], strides = [1, 1]} : vector<2x128xf32> to vector<2x32xf32>
    %87 = math.tanh %86 : vector<2x32xf32>
    %88 = vector.extract_strided_slice %73 {offsets = [0, 96], sizes = [2, 32], strides = [1, 1]} : vector<2x128xf32> to vector<2x32xf32>
    %89 = arith.negf %88 : vector<2x32xf32>
    %90 = math.exp %89 : vector<2x32xf32>
    %cst_26 = arith.constant 1.000000e+00 : f32
    %91 = vector.broadcast %cst_26 : f32 to vector<2x32xf32>
    %92 = arith.addf %91, %90 : vector<2x32xf32>
    %93 = arith.divf %91, %92 : vector<2x32xf32>
    %94 = arith.mulf %85, %37 : vector<2x32xf32>
    %95 = arith.mulf %79, %87 : vector<2x32xf32>
    %96 = arith.addf %94, %95 : vector<2x32xf32>
    %97 = math.tanh %96 : vector<2x32xf32>
    %98 = arith.mulf %93, %97 : vector<2x32xf32>
    %99 = tpu.concatenate %98, %67 in 1 : vector<2x32xf32>, vector<2x32xf32> -> vector<2x64xf32>
    %cst_27 = arith.constant dense<0.000000e+00> : vector<2x128xf32>
    %100 = tpu.matmul %99, %2, %cst_27 {dimension_numbers = #tpu.dot_dimension_numbers<[1], [0], [0], [1], [0, 0, 1, 1], [], []>} : vector<2x64xf32>, vector<64x128xf32>, vector<2x128xf32> -> vector<2x128xf32>
    %101 = arith.addf %100, %10 : vector<2x128xf32>
    %102 = vector.extract_strided_slice %101 {offsets = [0, 0], sizes = [2, 32], strides = [1, 1]} : vector<2x128xf32> to vector<2x32xf32>
    %103 = arith.negf %102 : vector<2x32xf32>
    %104 = math.exp %103 : vector<2x32xf32>
    %cst_28 = arith.constant 1.000000e+00 : f32
    %105 = vector.broadcast %cst_28 : f32 to vector<2x32xf32>
    %106 = arith.addf %105, %104 : vector<2x32xf32>
    %107 = arith.divf %105, %106 : vector<2x32xf32>
    %108 = vector.extract_strided_slice %101 {offsets = [0, 32], sizes = [2, 32], strides = [1, 1]} : vector<2x128xf32> to vector<2x32xf32>
    %109 = arith.negf %108 : vector<2x32xf32>
    %110 = math.exp %109 : vector<2x32xf32>
    %cst_29 = arith.constant 1.000000e+00 : f32
    %111 = vector.broadcast %cst_29 : f32 to vector<2x32xf32>
    %112 = arith.addf %111, %110 : vector<2x32xf32>
    %113 = arith.divf %111, %112 : vector<2x32xf32>
    %114 = vector.extract_strided_slice %101 {offsets = [0, 64], sizes = [2, 32], strides = [1, 1]} : vector<2x128xf32> to vector<2x32xf32>
    %115 = math.tanh %114 : vector<2x32xf32>
    %116 = vector.extract_strided_slice %101 {offsets = [0, 96], sizes = [2, 32], strides = [1, 1]} : vector<2x128xf32> to vector<2x32xf32>
    %117 = arith.negf %116 : vector<2x32xf32>
    %118 = math.exp %117 : vector<2x32xf32>
    %cst_30 = arith.constant 1.000000e+00 : f32
    %119 = vector.broadcast %cst_30 : f32 to vector<2x32xf32>
    %120 = arith.addf %119, %118 : vector<2x32xf32>
    %121 = arith.divf %119, %120 : vector<2x32xf32>
    %122 = arith.mulf %113, %65 : vector<2x32xf32>
    %123 = arith.mulf %107, %115 : vector<2x32xf32>
    %124 = arith.addf %122, %123 : vector<2x32xf32>
    %125 = math.tanh %124 : vector<2x32xf32>
    %126 = arith.mulf %121, %125 : vector<2x32xf32>
    %c0_31 = arith.constant 0 : index
    %c1 = arith.constant 1 : index
    %c0_32 = arith.constant 0 : index
    %127 = vector.load %arg11[%c0_31, %c1, %c0_32] : memref<2x8x32xf32, #tpu.memory_space<vmem>>, vector<2x1x32xf32>
    %128 = vector.shape_cast %127 : vector<2x1x32xf32> to vector<2x32xf32>
    %129 = vector.shape_cast %126 : vector<2x32xf32> to vector<2x1x32xf32>
    tpu.vector_store %arg11[%c0_31, %c1, %c0_32], %129 {strides = array<i32>} : memref<2x8x32xf32, #tpu.memory_space<vmem>>, vector<2x1x32xf32>,
    %130 = vector.extract_strided_slice %7 {offsets = [4, 0], sizes = [2, 128], strides = [1, 1]} : vector<16x128xf32> to vector<2x128xf32>
    %cst_33 = arith.constant dense<0.000000e+00> : vector<2x128xf32>
    %131 = tpu.matmul %98, %1, %cst_33 {dimension_numbers = #tpu.dot_dimension_numbers<[1], [0], [0], [1], [0, 0, 1, 1], [], []>} : vector<2x32xf32>, vector<32x128xf32>, vector<2x128xf32> -> vector<2x128xf32>
    %132 = arith.addf %130, %131 : vector<2x128xf32>
    %133 = vector.extract_strided_slice %132 {offsets = [0, 0], sizes = [2, 32], strides = [1, 1]} : vector<2x128xf32> to vector<2x32xf32>
    %134 = arith.negf %133 : vector<2x32xf32>
    %135 = math.exp %134 : vector<2x32xf32>
    %cst_34 = arith.constant 1.000000e+00 : f32
    %136 = vector.broadcast %cst_34 : f32 to vector<2x32xf32>
    %137 = arith.addf %136, %135 : vector<2x32xf32>
    %138 = arith.divf %136, %137 : vector<2x32xf32>
    %139 = vector.extract_strided_slice %132 {offsets = [0, 32], sizes = [2, 32], strides = [1, 1]} : vector<2x128xf32> to vector<2x32xf32>
    %140 = arith.negf %139 : vector<2x32xf32>
    %141 = math.exp %140 : vector<2x32xf32>
    %cst_35 = arith.constant 1.000000e+00 : f32
    %142 = vector.broadcast %cst_35 : f32 to vector<2x32xf32>
    %143 = arith.addf %142, %141 : vector<2x32xf32>
    %144 = arith.divf %142, %143 : vector<2x32xf32>
    %145 = vector.extract_strided_slice %132 {offsets = [0, 64], sizes = [2, 32], strides = [1, 1]} : vector<2x128xf32> to vector<2x32xf32>
    %146 = math.tanh %145 : vector<2x32xf32>
    %147 = vector.extract_strided_slice %132 {offsets = [0, 96], sizes = [2, 32], strides = [1, 1]} : vector<2x128xf32> to vector<2x32xf32>
    %148 = arith.negf %147 : vector<2x32xf32>
    %149 = math.exp %148 : vector<2x32xf32>
    %cst_36 = arith.constant 1.000000e+00 : f32
    %150 = vector.broadcast %cst_36 : f32 to vector<2x32xf32>
    %151 = arith.addf %150, %149 : vector<2x32xf32>
    %152 = arith.divf %150, %151 : vector<2x32xf32>
    %153 = arith.mulf %144, %96 : vector<2x32xf32>
    %154 = arith.mulf %138, %146 : vector<2x32xf32>
    %155 = arith.addf %153, %154 : vector<2x32xf32>
    %156 = math.tanh %155 : vector<2x32xf32>
    %157 = arith.mulf %152, %156 : vector<2x32xf32>
    %158 = tpu.concatenate %157, %126 in 1 : vector<2x32xf32>, vector<2x32xf32> -> vector<2x64xf32>
    %cst_37 = arith.constant dense<0.000000e+00> : vector<2x128xf32>
    %159 = tpu.matmul %158, %2, %cst_37 {dimension_numbers = #tpu.dot_dimension_numbers<[1], [0], [0], [1], [0, 0, 1, 1], [], []>} : vector<2x64xf32>, vector<64x128xf32>, vector<2x128xf32> -> vector<2x128xf32>
    %160 = arith.addf %159, %10 : vector<2x128xf32>
    %161 = vector.extract_strided_slice %160 {offsets = [0, 0], sizes = [2, 32], strides = [1, 1]} : vector<2x128xf32> to vector<2x32xf32>
    %162 = arith.negf %161 : vector<2x32xf32>
    %163 = math.exp %162 : vector<2x32xf32>
    %cst_38 = arith.constant 1.000000e+00 : f32
    %164 = vector.broadcast %cst_38 : f32 to vector<2x32xf32>
    %165 = arith.addf %164, %163 : vector<2x32xf32>
    %166 = arith.divf %164, %165 : vector<2x32xf32>
    %167 = vector.extract_strided_slice %160 {offsets = [0, 32], sizes = [2, 32], strides = [1, 1]} : vector<2x128xf32> to vector<2x32xf32>
    %168 = arith.negf %167 : vector<2x32xf32>
    %169 = math.exp %168 : vector<2x32xf32>
    %cst_39 = arith.constant 1.000000e+00 : f32
    %170 = vector.broadcast %cst_39 : f32 to vector<2x32xf32>
    %171 = arith.addf %170, %169 : vector<2x32xf32>
    %172 = arith.divf %170, %171 : vector<2x32xf32>
    %173 = vector.extract_strided_slice %160 {offsets = [0, 64], sizes = [2, 32], strides = [1, 1]} : vector<2x128xf32> to vector<2x32xf32>
    %174 = math.tanh %173 : vector<2x32xf32>
    %175 = vector.extract_strided_slice %160 {offsets = [0, 96], sizes = [2, 32], strides = [1, 1]} : vector<2x128xf32> to vector<2x32xf32>
    %176 = arith.negf %175 : vector<2x32xf32>
    %177 = math.exp %176 : vector<2x32xf32>
    %cst_40 = arith.constant 1.000000e+00 : f32
    %178 = vector.broadcast %cst_40 : f32 to vector<2x32xf32>
    %179 = arith.addf %178, %177 : vector<2x32xf32>
    %180 = arith.divf %178, %179 : vector<2x32xf32>
    %181 = arith.mulf %172, %124 : vector<2x32xf32>
    %182 = arith.mulf %166, %174 : vector<2x32xf32>
    %183 = arith.addf %181, %182 : vector<2x32xf32>
    %184 = math.tanh %183 : vector<2x32xf32>
    %185 = arith.mulf %180, %184 : vector<2x32xf32>
    %c0_41 = arith.constant 0 : index
    %c2 = arith.constant 2 : index
    %c0_42 = arith.constant 0 : index
    %186 = vector.load %arg11[%c0_41, %c2, %c0_42] : memref<2x8x32xf32, #tpu.memory_space<vmem>>, vector<2x1x32xf32>
    %187 = vector.shape_cast %186 : vector<2x1x32xf32> to vector<2x32xf32>
    %188 = vector.shape_cast %185 : vector<2x32xf32> to vector<2x1x32xf32>
    tpu.vector_store %arg11[%c0_41, %c2, %c0_42], %188 {strides = array<i32>} : memref<2x8x32xf32, #tpu.memory_space<vmem>>, vector<2x1x32xf32>,
    %189 = vector.extract_strided_slice %7 {offsets = [6, 0], sizes = [2, 128], strides = [1, 1]} : vector<16x128xf32> to vector<2x128xf32>
    %cst_43 = arith.constant dense<0.000000e+00> : vector<2x128xf32>
    %190 = tpu.matmul %157, %1, %cst_43 {dimension_numbers = #tpu.dot_dimension_numbers<[1], [0], [0], [1], [0, 0, 1, 1], [], []>} : vector<2x32xf32>, vector<32x128xf32>, vector<2x128xf32> -> vector<2x128xf32>
    %191 = arith.addf %189, %190 : vector<2x128xf32>
    %192 = vector.extract_strided_slice %191 {offsets = [0, 0], sizes = [2, 32], strides = [1, 1]} : vector<2x128xf32> to vector<2x32xf32>
    %193 = arith.negf %192 : vector<2x32xf32>
    %194 = math.exp %193 : vector<2x32xf32>
    %cst_44 = arith.constant 1.000000e+00 : f32
    %195 = vector.broadcast %cst_44 : f32 to vector<2x32xf32>
    %196 = arith.addf %195, %194 : vector<2x32xf32>
    %197 = arith.divf %195, %196 : vector<2x32xf32>
    %198 = vector.extract_strided_slice %191 {offsets = [0, 32], sizes = [2, 32], strides = [1, 1]} : vector<2x128xf32> to vector<2x32xf32>
    %199 = arith.negf %198 : vector<2x32xf32>
    %200 = math.exp %199 : vector<2x32xf32>
    %cst_45 = arith.constant 1.000000e+00 : f32
    %201 = vector.broadcast %cst_45 : f32 to vector<2x32xf32>
    %202 = arith.addf %201, %200 : vector<2x32xf32>
    %203 = arith.divf %201, %202 : vector<2x32xf32>
    %204 = vector.extract_strided_slice %191 {offsets = [0, 64], sizes = [2, 32], strides = [1, 1]} : vector<2x128xf32> to vector<2x32xf32>
    %205 = math.tanh %204 : vector<2x32xf32>
    %206 = vector.extract_strided_slice %191 {offsets = [0, 96], sizes = [2, 32], strides = [1, 1]} : vector<2x128xf32> to vector<2x32xf32>
    %207 = arith.negf %206 : vector<2x32xf32>
    %208 = math.exp %207 : vector<2x32xf32>
    %cst_46 = arith.constant 1.000000e+00 : f32
    %209 = vector.broadcast %cst_46 : f32 to vector<2x32xf32>
    %210 = arith.addf %209, %208 : vector<2x32xf32>
    %211 = arith.divf %209, %210 : vector<2x32xf32>
    %212 = arith.mulf %203, %155 : vector<2x32xf32>
    %213 = arith.mulf %197, %205 : vector<2x32xf32>
    %214 = arith.addf %212, %213 : vector<2x32xf32>
    %215 = math.tanh %214 : vector<2x32xf32>
    %216 = arith.mulf %211, %215 : vector<2x32xf32>
    %217 = tpu.concatenate %216, %185 in 1 : vector<2x32xf32>, vector<2x32xf32> -> vector<2x64xf32>
    %cst_47 = arith.constant dense<0.000000e+00> : vector<2x128xf32>
    %218 = tpu.matmul %217, %2, %cst_47 {dimension_numbers = #tpu.dot_dimension_numbers<[1], [0], [0], [1], [0, 0, 1, 1], [], []>} : vector<2x64xf32>, vector<64x128xf32>, vector<2x128xf32> -> vector<2x128xf32>
    %219 = arith.addf %218, %10 : vector<2x128xf32>
    %220 = vector.extract_strided_slice %219 {offsets = [0, 0], sizes = [2, 32], strides = [1, 1]} : vector<2x128xf32> to vector<2x32xf32>
    %221 = arith.negf %220 : vector<2x32xf32>
    %222 = math.exp %221 : vector<2x32xf32>
    %cst_48 = arith.constant 1.000000e+00 : f32
    %223 = vector.broadcast %cst_48 : f32 to vector<2x32xf32>
    %224 = arith.addf %223, %222 : vector<2x32xf32>
    %225 = arith.divf %223, %224 : vector<2x32xf32>
    %226 = vector.extract_strided_slice %219 {offsets = [0, 32], sizes = [2, 32], strides = [1, 1]} : vector<2x128xf32> to vector<2x32xf32>
    %227 = arith.negf %226 : vector<2x32xf32>
    %228 = math.exp %227 : vector<2x32xf32>
    %cst_49 = arith.constant 1.000000e+00 : f32
    %229 = vector.broadcast %cst_49 : f32 to vector<2x32xf32>
    %230 = arith.addf %229, %228 : vector<2x32xf32>
    %231 = arith.divf %229, %230 : vector<2x32xf32>
    %232 = vector.extract_strided_slice %219 {offsets = [0, 64], sizes = [2, 32], strides = [1, 1]} : vector<2x128xf32> to vector<2x32xf32>
    %233 = math.tanh %232 : vector<2x32xf32>
    %234 = vector.extract_strided_slice %219 {offsets = [0, 96], sizes = [2, 32], strides = [1, 1]} : vector<2x128xf32> to vector<2x32xf32>
    %235 = arith.negf %234 : vector<2x32xf32>
    %236 = math.exp %235 : vector<2x32xf32>
    %cst_50 = arith.constant 1.000000e+00 : f32
    %237 = vector.broadcast %cst_50 : f32 to vector<2x32xf32>
    %238 = arith.addf %237, %236 : vector<2x32xf32>
    %239 = arith.divf %237, %238 : vector<2x32xf32>
    %240 = arith.mulf %231, %183 : vector<2x32xf32>
    %241 = arith.mulf %225, %233 : vector<2x32xf32>
    %242 = arith.addf %240, %241 : vector<2x32xf32>
    %243 = math.tanh %242 : vector<2x32xf32>
    %244 = arith.mulf %239, %243 : vector<2x32xf32>
    %c0_51 = arith.constant 0 : index
    %c3 = arith.constant 3 : index
    %c0_52 = arith.constant 0 : index
    %245 = vector.load %arg11[%c0_51, %c3, %c0_52] : memref<2x8x32xf32, #tpu.memory_space<vmem>>, vector<2x1x32xf32>
    %246 = vector.shape_cast %245 : vector<2x1x32xf32> to vector<2x32xf32>
    %247 = vector.shape_cast %244 : vector<2x32xf32> to vector<2x1x32xf32>
    tpu.vector_store %arg11[%c0_51, %c3, %c0_52], %247 {strides = array<i32>} : memref<2x8x32xf32, #tpu.memory_space<vmem>>, vector<2x1x32xf32>,
    %248 = vector.extract_strided_slice %7 {offsets = [8, 0], sizes = [2, 128], strides = [1, 1]} : vector<16x128xf32> to vector<2x128xf32>
    %cst_53 = arith.constant dense<0.000000e+00> : vector<2x128xf32>
    %249 = tpu.matmul %216, %1, %cst_53 {dimension_numbers = #tpu.dot_dimension_numbers<[1], [0], [0], [1], [0, 0, 1, 1], [], []>} : vector<2x32xf32>, vector<32x128xf32>, vector<2x128xf32> -> vector<2x128xf32>
    %250 = arith.addf %248, %249 : vector<2x128xf32>
    %251 = vector.extract_strided_slice %250 {offsets = [0, 0], sizes = [2, 32], strides = [1, 1]} : vector<2x128xf32> to vector<2x32xf32>
    %252 = arith.negf %251 : vector<2x32xf32>
    %253 = math.exp %252 : vector<2x32xf32>
    %cst_54 = arith.constant 1.000000e+00 : f32
    %254 = vector.broadcast %cst_54 : f32 to vector<2x32xf32>
    %255 = arith.addf %254, %253 : vector<2x32xf32>
    %256 = arith.divf %254, %255 : vector<2x32xf32>
    %257 = vector.extract_strided_slice %250 {offsets = [0, 32], sizes = [2, 32], strides = [1, 1]} : vector<2x128xf32> to vector<2x32xf32>
    %258 = arith.negf %257 : vector<2x32xf32>
    %259 = math.exp %258 : vector<2x32xf32>
    %cst_55 = arith.constant 1.000000e+00 : f32
    %260 = vector.broadcast %cst_55 : f32 to vector<2x32xf32>
    %261 = arith.addf %260, %259 : vector<2x32xf32>
    %262 = arith.divf %260, %261 : vector<2x32xf32>
    %263 = vector.extract_strided_slice %250 {offsets = [0, 64], sizes = [2, 32], strides = [1, 1]} : vector<2x128xf32> to vector<2x32xf32>
    %264 = math.tanh %263 : vector<2x32xf32>
    %265 = vector.extract_strided_slice %250 {offsets = [0, 96], sizes = [2, 32], strides = [1, 1]} : vector<2x128xf32> to vector<2x32xf32>
    %266 = arith.negf %265 : vector<2x32xf32>
    %267 = math.exp %266 : vector<2x32xf32>
    %cst_56 = arith.constant 1.000000e+00 : f32
    %268 = vector.broadcast %cst_56 : f32 to vector<2x32xf32>
    %269 = arith.addf %268, %267 : vector<2x32xf32>
    %270 = arith.divf %268, %269 : vector<2x32xf32>
    %271 = arith.mulf %262, %214 : vector<2x32xf32>
    %272 = arith.mulf %256, %264 : vector<2x32xf32>
    %273 = arith.addf %271, %272 : vector<2x32xf32>
    %274 = math.tanh %273 : vector<2x32xf32>
    %275 = arith.mulf %270, %274 : vector<2x32xf32>
    %276 = tpu.concatenate %275, %244 in 1 : vector<2x32xf32>, vector<2x32xf32> -> vector<2x64xf32>
    %cst_57 = arith.constant dense<0.000000e+00> : vector<2x128xf32>
    %277 = tpu.matmul %276, %2, %cst_57 {dimension_numbers = #tpu.dot_dimension_numbers<[1], [0], [0], [1], [0, 0, 1, 1], [], []>} : vector<2x64xf32>, vector<64x128xf32>, vector<2x128xf32> -> vector<2x128xf32>
    %278 = arith.addf %277, %10 : vector<2x128xf32>
    %279 = vector.extract_strided_slice %278 {offsets = [0, 0], sizes = [2, 32], strides = [1, 1]} : vector<2x128xf32> to vector<2x32xf32>
    %280 = arith.negf %279 : vector<2x32xf32>
    %281 = math.exp %280 : vector<2x32xf32>
    %cst_58 = arith.constant 1.000000e+00 : f32
    %282 = vector.broadcast %cst_58 : f32 to vector<2x32xf32>
    %283 = arith.addf %282, %281 : vector<2x32xf32>
    %284 = arith.divf %282, %283 : vector<2x32xf32>
    %285 = vector.extract_strided_slice %278 {offsets = [0, 32], sizes = [2, 32], strides = [1, 1]} : vector<2x128xf32> to vector<2x32xf32>
    %286 = arith.negf %285 : vector<2x32xf32>
    %287 = math.exp %286 : vector<2x32xf32>
    %cst_59 = arith.constant 1.000000e+00 : f32
    %288 = vector.broadcast %cst_59 : f32 to vector<2x32xf32>
    %289 = arith.addf %288, %287 : vector<2x32xf32>
    %290 = arith.divf %288, %289 : vector<2x32xf32>
    %291 = vector.extract_strided_slice %278 {offsets = [0, 64], sizes = [2, 32], strides = [1, 1]} : vector<2x128xf32> to vector<2x32xf32>
    %292 = math.tanh %291 : vector<2x32xf32>
    %293 = vector.extract_strided_slice %278 {offsets = [0, 96], sizes = [2, 32], strides = [1, 1]} : vector<2x128xf32> to vector<2x32xf32>
    %294 = arith.negf %293 : vector<2x32xf32>
    %295 = math.exp %294 : vector<2x32xf32>
    %cst_60 = arith.constant 1.000000e+00 : f32
    %296 = vector.broadcast %cst_60 : f32 to vector<2x32xf32>
    %297 = arith.addf %296, %295 : vector<2x32xf32>
    %298 = arith.divf %296, %297 : vector<2x32xf32>
    %299 = arith.mulf %290, %242 : vector<2x32xf32>
    %300 = arith.mulf %284, %292 : vector<2x32xf32>
    %301 = arith.addf %299, %300 : vector<2x32xf32>
    %302 = math.tanh %301 : vector<2x32xf32>
    %303 = arith.mulf %298, %302 : vector<2x32xf32>
    %c0_61 = arith.constant 0 : index
    %c4 = arith.constant 4 : index
    %c0_62 = arith.constant 0 : index
    %304 = vector.load %arg11[%c0_61, %c4, %c0_62] : memref<2x8x32xf32, #tpu.memory_space<vmem>>, vector<2x1x32xf32>
    %305 = vector.shape_cast %304 : vector<2x1x32xf32> to vector<2x32xf32>
    %306 = vector.shape_cast %303 : vector<2x32xf32> to vector<2x1x32xf32>
    tpu.vector_store %arg11[%c0_61, %c4, %c0_62], %306 {strides = array<i32>} : memref<2x8x32xf32, #tpu.memory_space<vmem>>, vector<2x1x32xf32>,
    %307 = vector.extract_strided_slice %7 {offsets = [10, 0], sizes = [2, 128], strides = [1, 1]} : vector<16x128xf32> to vector<2x128xf32>
    %cst_63 = arith.constant dense<0.000000e+00> : vector<2x128xf32>
    %308 = tpu.matmul %275, %1, %cst_63 {dimension_numbers = #tpu.dot_dimension_numbers<[1], [0], [0], [1], [0, 0, 1, 1], [], []>} : vector<2x32xf32>, vector<32x128xf32>, vector<2x128xf32> -> vector<2x128xf32>
    %309 = arith.addf %307, %308 : vector<2x128xf32>
    %310 = vector.extract_strided_slice %309 {offsets = [0, 0], sizes = [2, 32], strides = [1, 1]} : vector<2x128xf32> to vector<2x32xf32>
    %311 = arith.negf %310 : vector<2x32xf32>
    %312 = math.exp %311 : vector<2x32xf32>
    %cst_64 = arith.constant 1.000000e+00 : f32
    %313 = vector.broadcast %cst_64 : f32 to vector<2x32xf32>
    %314 = arith.addf %313, %312 : vector<2x32xf32>
    %315 = arith.divf %313, %314 : vector<2x32xf32>
    %316 = vector.extract_strided_slice %309 {offsets = [0, 32], sizes = [2, 32], strides = [1, 1]} : vector<2x128xf32> to vector<2x32xf32>
    %317 = arith.negf %316 : vector<2x32xf32>
    %318 = math.exp %317 : vector<2x32xf32>
    %cst_65 = arith.constant 1.000000e+00 : f32
    %319 = vector.broadcast %cst_65 : f32 to vector<2x32xf32>
    %320 = arith.addf %319, %318 : vector<2x32xf32>
    %321 = arith.divf %319, %320 : vector<2x32xf32>
    %322 = vector.extract_strided_slice %309 {offsets = [0, 64], sizes = [2, 32], strides = [1, 1]} : vector<2x128xf32> to vector<2x32xf32>
    %323 = math.tanh %322 : vector<2x32xf32>
    %324 = vector.extract_strided_slice %309 {offsets = [0, 96], sizes = [2, 32], strides = [1, 1]} : vector<2x128xf32> to vector<2x32xf32>
    %325 = arith.negf %324 : vector<2x32xf32>
    %326 = math.exp %325 : vector<2x32xf32>
    %cst_66 = arith.constant 1.000000e+00 : f32
    %327 = vector.broadcast %cst_66 : f32 to vector<2x32xf32>
    %328 = arith.addf %327, %326 : vector<2x32xf32>
    %329 = arith.divf %327, %328 : vector<2x32xf32>
    %330 = arith.mulf %321, %273 : vector<2x32xf32>
    %331 = arith.mulf %315, %323 : vector<2x32xf32>
    %332 = arith.addf %330, %331 : vector<2x32xf32>
    %333 = math.tanh %332 : vector<2x32xf32>
    %334 = arith.mulf %329, %333 : vector<2x32xf32>
    %335 = tpu.concatenate %334, %303 in 1 : vector<2x32xf32>, vector<2x32xf32> -> vector<2x64xf32>
    %cst_67 = arith.constant dense<0.000000e+00> : vector<2x128xf32>
    %336 = tpu.matmul %335, %2, %cst_67 {dimension_numbers = #tpu.dot_dimension_numbers<[1], [0], [0], [1], [0, 0, 1, 1], [], []>} : vector<2x64xf32>, vector<64x128xf32>, vector<2x128xf32> -> vector<2x128xf32>
    %337 = arith.addf %336, %10 : vector<2x128xf32>
    %338 = vector.extract_strided_slice %337 {offsets = [0, 0], sizes = [2, 32], strides = [1, 1]} : vector<2x128xf32> to vector<2x32xf32>
    %339 = arith.negf %338 : vector<2x32xf32>
    %340 = math.exp %339 : vector<2x32xf32>
    %cst_68 = arith.constant 1.000000e+00 : f32
    %341 = vector.broadcast %cst_68 : f32 to vector<2x32xf32>
    %342 = arith.addf %341, %340 : vector<2x32xf32>
    %343 = arith.divf %341, %342 : vector<2x32xf32>
    %344 = vector.extract_strided_slice %337 {offsets = [0, 32], sizes = [2, 32], strides = [1, 1]} : vector<2x128xf32> to vector<2x32xf32>
    %345 = arith.negf %344 : vector<2x32xf32>
    %346 = math.exp %345 : vector<2x32xf32>
    %cst_69 = arith.constant 1.000000e+00 : f32
    %347 = vector.broadcast %cst_69 : f32 to vector<2x32xf32>
    %348 = arith.addf %347, %346 : vector<2x32xf32>
    %349 = arith.divf %347, %348 : vector<2x32xf32>
    %350 = vector.extract_strided_slice %337 {offsets = [0, 64], sizes = [2, 32], strides = [1, 1]} : vector<2x128xf32> to vector<2x32xf32>
    %351 = math.tanh %350 : vector<2x32xf32>
    %352 = vector.extract_strided_slice %337 {offsets = [0, 96], sizes = [2, 32], strides = [1, 1]} : vector<2x128xf32> to vector<2x32xf32>
    %353 = arith.negf %352 : vector<2x32xf32>
    %354 = math.exp %353 : vector<2x32xf32>
    %cst_70 = arith.constant 1.000000e+00 : f32
    %355 = vector.broadcast %cst_70 : f32 to vector<2x32xf32>
    %356 = arith.addf %355, %354 : vector<2x32xf32>
    %357 = arith.divf %355, %356 : vector<2x32xf32>
    %358 = arith.mulf %349, %301 : vector<2x32xf32>
    %359 = arith.mulf %343, %351 : vector<2x32xf32>
    %360 = arith.addf %358, %359 : vector<2x32xf32>
    %361 = math.tanh %360 : vector<2x32xf32>
    %362 = arith.mulf %357, %361 : vector<2x32xf32>
    %c0_71 = arith.constant 0 : index
    %c5 = arith.constant 5 : index
    %c0_72 = arith.constant 0 : index
    %363 = vector.load %arg11[%c0_71, %c5, %c0_72] : memref<2x8x32xf32, #tpu.memory_space<vmem>>, vector<2x1x32xf32>
    %364 = vector.shape_cast %363 : vector<2x1x32xf32> to vector<2x32xf32>
    %365 = vector.shape_cast %362 : vector<2x32xf32> to vector<2x1x32xf32>
    tpu.vector_store %arg11[%c0_71, %c5, %c0_72], %365 {strides = array<i32>} : memref<2x8x32xf32, #tpu.memory_space<vmem>>, vector<2x1x32xf32>,
    %366 = vector.extract_strided_slice %7 {offsets = [12, 0], sizes = [2, 128], strides = [1, 1]} : vector<16x128xf32> to vector<2x128xf32>
    %cst_73 = arith.constant dense<0.000000e+00> : vector<2x128xf32>
    %367 = tpu.matmul %334, %1, %cst_73 {dimension_numbers = #tpu.dot_dimension_numbers<[1], [0], [0], [1], [0, 0, 1, 1], [], []>} : vector<2x32xf32>, vector<32x128xf32>, vector<2x128xf32> -> vector<2x128xf32>
    %368 = arith.addf %366, %367 : vector<2x128xf32>
    %369 = vector.extract_strided_slice %368 {offsets = [0, 0], sizes = [2, 32], strides = [1, 1]} : vector<2x128xf32> to vector<2x32xf32>
    %370 = arith.negf %369 : vector<2x32xf32>
    %371 = math.exp %370 : vector<2x32xf32>
    %cst_74 = arith.constant 1.000000e+00 : f32
    %372 = vector.broadcast %cst_74 : f32 to vector<2x32xf32>
    %373 = arith.addf %372, %371 : vector<2x32xf32>
    %374 = arith.divf %372, %373 : vector<2x32xf32>
    %375 = vector.extract_strided_slice %368 {offsets = [0, 32], sizes = [2, 32], strides = [1, 1]} : vector<2x128xf32> to vector<2x32xf32>
    %376 = arith.negf %375 : vector<2x32xf32>
    %377 = math.exp %376 : vector<2x32xf32>
    %cst_75 = arith.constant 1.000000e+00 : f32
    %378 = vector.broadcast %cst_75 : f32 to vector<2x32xf32>
    %379 = arith.addf %378, %377 : vector<2x32xf32>
    %380 = arith.divf %378, %379 : vector<2x32xf32>
    %381 = vector.extract_strided_slice %368 {offsets = [0, 64], sizes = [2, 32], strides = [1, 1]} : vector<2x128xf32> to vector<2x32xf32>
    %382 = math.tanh %381 : vector<2x32xf32>
    %383 = vector.extract_strided_slice %368 {offsets = [0, 96], sizes = [2, 32], strides = [1, 1]} : vector<2x128xf32> to vector<2x32xf32>
    %384 = arith.negf %383 : vector<2x32xf32>
    %385 = math.exp %384 : vector<2x32xf32>
    %cst_76 = arith.constant 1.000000e+00 : f32
    %386 = vector.broadcast %cst_76 : f32 to vector<2x32xf32>
    %387 = arith.addf %386, %385 : vector<2x32xf32>
    %388 = arith.divf %386, %387 : vector<2x32xf32>
    %389 = arith.mulf %380, %332 : vector<2x32xf32>
    %390 = arith.mulf %374, %382 : vector<2x32xf32>
    %391 = arith.addf %389, %390 : vector<2x32xf32>
    %392 = math.tanh %391 : vector<2x32xf32>
    %393 = arith.mulf %388, %392 : vector<2x32xf32>
    %394 = tpu.concatenate %393, %362 in 1 : vector<2x32xf32>, vector<2x32xf32> -> vector<2x64xf32>
    %cst_77 = arith.constant dense<0.000000e+00> : vector<2x128xf32>
    %395 = tpu.matmul %394, %2, %cst_77 {dimension_numbers = #tpu.dot_dimension_numbers<[1], [0], [0], [1], [0, 0, 1, 1], [], []>} : vector<2x64xf32>, vector<64x128xf32>, vector<2x128xf32> -> vector<2x128xf32>
    %396 = arith.addf %395, %10 : vector<2x128xf32>
    %397 = vector.extract_strided_slice %396 {offsets = [0, 0], sizes = [2, 32], strides = [1, 1]} : vector<2x128xf32> to vector<2x32xf32>
    %398 = arith.negf %397 : vector<2x32xf32>
    %399 = math.exp %398 : vector<2x32xf32>
    %cst_78 = arith.constant 1.000000e+00 : f32
    %400 = vector.broadcast %cst_78 : f32 to vector<2x32xf32>
    %401 = arith.addf %400, %399 : vector<2x32xf32>
    %402 = arith.divf %400, %401 : vector<2x32xf32>
    %403 = vector.extract_strided_slice %396 {offsets = [0, 32], sizes = [2, 32], strides = [1, 1]} : vector<2x128xf32> to vector<2x32xf32>
    %404 = arith.negf %403 : vector<2x32xf32>
    %405 = math.exp %404 : vector<2x32xf32>
    %cst_79 = arith.constant 1.000000e+00 : f32
    %406 = vector.broadcast %cst_79 : f32 to vector<2x32xf32>
    %407 = arith.addf %406, %405 : vector<2x32xf32>
    %408 = arith.divf %406, %407 : vector<2x32xf32>
    %409 = vector.extract_strided_slice %396 {offsets = [0, 64], sizes = [2, 32], strides = [1, 1]} : vector<2x128xf32> to vector<2x32xf32>
    %410 = math.tanh %409 : vector<2x32xf32>
    %411 = vector.extract_strided_slice %396 {offsets = [0, 96], sizes = [2, 32], strides = [1, 1]} : vector<2x128xf32> to vector<2x32xf32>
    %412 = arith.negf %411 : vector<2x32xf32>
    %413 = math.exp %412 : vector<2x32xf32>
    %cst_80 = arith.constant 1.000000e+00 : f32
    %414 = vector.broadcast %cst_80 : f32 to vector<2x32xf32>
    %415 = arith.addf %414, %413 : vector<2x32xf32>
    %416 = arith.divf %414, %415 : vector<2x32xf32>
    %417 = arith.mulf %408, %360 : vector<2x32xf32>
    %418 = arith.mulf %402, %410 : vector<2x32xf32>
    %419 = arith.addf %417, %418 : vector<2x32xf32>
    %420 = math.tanh %419 : vector<2x32xf32>
    %421 = arith.mulf %416, %420 : vector<2x32xf32>
    %c0_81 = arith.constant 0 : index
    %c6 = arith.constant 6 : index
    %c0_82 = arith.constant 0 : index
    %422 = vector.load %arg11[%c0_81, %c6, %c0_82] : memref<2x8x32xf32, #tpu.memory_space<vmem>>, vector<2x1x32xf32>
    %423 = vector.shape_cast %422 : vector<2x1x32xf32> to vector<2x32xf32>
    %424 = vector.shape_cast %421 : vector<2x32xf32> to vector<2x1x32xf32>
    tpu.vector_store %arg11[%c0_81, %c6, %c0_82], %424 {strides = array<i32>} : memref<2x8x32xf32, #tpu.memory_space<vmem>>, vector<2x1x32xf32>,
    %425 = vector.extract_strided_slice %7 {offsets = [14, 0], sizes = [2, 128], strides = [1, 1]} : vector<16x128xf32> to vector<2x128xf32>
    %cst_83 = arith.constant dense<0.000000e+00> : vector<2x128xf32>
    %426 = tpu.matmul %393, %1, %cst_83 {dimension_numbers = #tpu.dot_dimension_numbers<[1], [0], [0], [1], [0, 0, 1, 1], [], []>} : vector<2x32xf32>, vector<32x128xf32>, vector<2x128xf32> -> vector<2x128xf32>
    %427 = arith.addf %425, %426 : vector<2x128xf32>
    %428 = vector.extract_strided_slice %427 {offsets = [0, 0], sizes = [2, 32], strides = [1, 1]} : vector<2x128xf32> to vector<2x32xf32>
    %429 = arith.negf %428 : vector<2x32xf32>
    %430 = math.exp %429 : vector<2x32xf32>
    %cst_84 = arith.constant 1.000000e+00 : f32
    %431 = vector.broadcast %cst_84 : f32 to vector<2x32xf32>
    %432 = arith.addf %431, %430 : vector<2x32xf32>
    %433 = arith.divf %431, %432 : vector<2x32xf32>
    %434 = vector.extract_strided_slice %427 {offsets = [0, 32], sizes = [2, 32], strides = [1, 1]} : vector<2x128xf32> to vector<2x32xf32>
    %435 = arith.negf %434 : vector<2x32xf32>
    %436 = math.exp %435 : vector<2x32xf32>
    %cst_85 = arith.constant 1.000000e+00 : f32
    %437 = vector.broadcast %cst_85 : f32 to vector<2x32xf32>
    %438 = arith.addf %437, %436 : vector<2x32xf32>
    %439 = arith.divf %437, %438 : vector<2x32xf32>
    %440 = vector.extract_strided_slice %427 {offsets = [0, 64], sizes = [2, 32], strides = [1, 1]} : vector<2x128xf32> to vector<2x32xf32>
    %441 = math.tanh %440 : vector<2x32xf32>
    %442 = vector.extract_strided_slice %427 {offsets = [0, 96], sizes = [2, 32], strides = [1, 1]} : vector<2x128xf32> to vector<2x32xf32>
    %443 = arith.negf %442 : vector<2x32xf32>
    %444 = math.exp %443 : vector<2x32xf32>
    %cst_86 = arith.constant 1.000000e+00 : f32
    %445 = vector.broadcast %cst_86 : f32 to vector<2x32xf32>
    %446 = arith.addf %445, %444 : vector<2x32xf32>
    %447 = arith.divf %445, %446 : vector<2x32xf32>
    %448 = arith.mulf %439, %391 : vector<2x32xf32>
    %449 = arith.mulf %433, %441 : vector<2x32xf32>
    %450 = arith.addf %448, %449 : vector<2x32xf32>
    %451 = math.tanh %450 : vector<2x32xf32>
    %452 = arith.mulf %447, %451 : vector<2x32xf32>
    %453 = tpu.concatenate %452, %421 in 1 : vector<2x32xf32>, vector<2x32xf32> -> vector<2x64xf32>
    %cst_87 = arith.constant dense<0.000000e+00> : vector<2x128xf32>
    %454 = tpu.matmul %453, %2, %cst_87 {dimension_numbers = #tpu.dot_dimension_numbers<[1], [0], [0], [1], [0, 0, 1, 1], [], []>} : vector<2x64xf32>, vector<64x128xf32>, vector<2x128xf32> -> vector<2x128xf32>
    %455 = arith.addf %454, %10 : vector<2x128xf32>
    %456 = vector.extract_strided_slice %455 {offsets = [0, 0], sizes = [2, 32], strides = [1, 1]} : vector<2x128xf32> to vector<2x32xf32>
    %457 = arith.negf %456 : vector<2x32xf32>
    %458 = math.exp %457 : vector<2x32xf32>
    %cst_88 = arith.constant 1.000000e+00 : f32
    %459 = vector.broadcast %cst_88 : f32 to vector<2x32xf32>
    %460 = arith.addf %459, %458 : vector<2x32xf32>
    %461 = arith.divf %459, %460 : vector<2x32xf32>
    %462 = vector.extract_strided_slice %455 {offsets = [0, 32], sizes = [2, 32], strides = [1, 1]} : vector<2x128xf32> to vector<2x32xf32>
    %463 = arith.negf %462 : vector<2x32xf32>
    %464 = math.exp %463 : vector<2x32xf32>
    %cst_89 = arith.constant 1.000000e+00 : f32
    %465 = vector.broadcast %cst_89 : f32 to vector<2x32xf32>
    %466 = arith.addf %465, %464 : vector<2x32xf32>
    %467 = arith.divf %465, %466 : vector<2x32xf32>
    %468 = vector.extract_strided_slice %455 {offsets = [0, 64], sizes = [2, 32], strides = [1, 1]} : vector<2x128xf32> to vector<2x32xf32>
    %469 = math.tanh %468 : vector<2x32xf32>
    %470 = vector.extract_strided_slice %455 {offsets = [0, 96], sizes = [2, 32], strides = [1, 1]} : vector<2x128xf32> to vector<2x32xf32>
    %471 = arith.negf %470 : vector<2x32xf32>
    %472 = math.exp %471 : vector<2x32xf32>
    %cst_90 = arith.constant 1.000000e+00 : f32
    %473 = vector.broadcast %cst_90 : f32 to vector<2x32xf32>
    %474 = arith.addf %473, %472 : vector<2x32xf32>
    %475 = arith.divf %473, %474 : vector<2x32xf32>
    %476 = arith.mulf %467, %419 : vector<2x32xf32>
    %477 = arith.mulf %461, %469 : vector<2x32xf32>
    %478 = arith.addf %476, %477 : vector<2x32xf32>
    %479 = math.tanh %478 : vector<2x32xf32>
    %480 = arith.mulf %475, %479 : vector<2x32xf32>
    %c0_91 = arith.constant 0 : index
    %c7 = arith.constant 7 : index
    %c0_92 = arith.constant 0 : index
    %481 = vector.load %arg11[%c0_91, %c7, %c0_92] : memref<2x8x32xf32, #tpu.memory_space<vmem>>, vector<2x1x32xf32>
    %482 = vector.shape_cast %481 : vector<2x1x32xf32> to vector<2x32xf32>
    %483 = vector.shape_cast %480 : vector<2x32xf32> to vector<2x1x32xf32>
    tpu.vector_store %arg11[%c0_91, %c7, %c0_92], %483 {strides = array<i32>} : memref<2x8x32xf32, #tpu.memory_space<vmem>>, vector<2x1x32xf32>,
    %484 = vector.extract_strided_slice %480 {offsets = [0, 0], sizes = [2, 1], strides = [1, 1]} : vector<2x32xf32> to vector<2x1xf32>
    %c0_93 = arith.constant 0 : index
    %c0_94 = arith.constant 0 : index
    %485 = vector.load %arg10[%c0_93, %c0_94] : memref<2x1xf32, #tpu.memory_space<vmem>>, vector<2x1xf32>
    tpu.vector_store %arg10[%c0_93, %c0_94], %484 {strides = array<i32>} : memref<2x1xf32, #tpu.memory_space<vmem>>, vector<2x1xf32>,
    %c0_95 = arith.constant 0 : index
    %c0_96 = arith.constant 0 : index
    %486 = vector.load %arg6[%c0_95, %c0_96] : memref<8x8xf32, #tpu.memory_space<vmem>>, vector<8x8xf32>
    %c0_97 = arith.constant 0 : index
    %c0_98 = arith.constant 0 : index
    %487 = vector.load %arg7[%c0_97, %c0_98] : memref<8x8xf32, #tpu.memory_space<vmem>>, vector<8x8xf32>
    %c0_99 = arith.constant 0 : index
    %c0_100 = arith.constant 0 : index
    %488 = vector.load %arg8[%c0_99, %c0_100] : memref<8x8xf32, #tpu.memory_space<vmem>>, vector<8x8xf32>
    %c0_101 = arith.constant 0 : index
    %c0_102 = arith.constant 0 : index
    %c0_103 = arith.constant 0 : index
    %489 = vector.load %arg11[%c0_101, %c0_102, %c0_103] : memref<2x8x32xf32, #tpu.memory_space<vmem>>, vector<1x8x32xf32>
    %490 = vector.shape_cast %489 : vector<1x8x32xf32> to vector<8x32xf32>
    %cst_104 = arith.constant dense<0.000000e+00> : vector<8x32xf32>
    %491 = tpu.matmul %486, %490, %cst_104 {dimension_numbers = #tpu.dot_dimension_numbers<[1], [0], [0], [1], [0, 0, 1, 1], [], []>} : vector<8x8xf32>, vector<8x32xf32>, vector<8x32xf32> -> vector<8x32xf32>
    %cst_105 = arith.constant dense<0.000000e+00> : vector<8x32xf32>
    %492 = tpu.matmul %487, %490, %cst_105 {dimension_numbers = #tpu.dot_dimension_numbers<[1], [0], [0], [1], [0, 0, 1, 1], [], []>} : vector<8x8xf32>, vector<8x32xf32>, vector<8x32xf32> -> vector<8x32xf32>
    %cst_106 = arith.constant dense<0.000000e+00> : vector<8x32xf32>
    %493 = tpu.matmul %488, %490, %cst_106 {dimension_numbers = #tpu.dot_dimension_numbers<[1], [0], [0], [1], [0, 0, 1, 1], [], []>} : vector<8x8xf32>, vector<8x32xf32>, vector<8x32xf32> -> vector<8x32xf32>
    %cst_107 = arith.constant dense<0.000000e+00> : vector<32x32xf32>
    %494 = tpu.matmul %491, %492, %cst_107 {dimension_numbers = #tpu.dot_dimension_numbers<[0], [0], [1], [1], [0, 1, 1, 1], [], []>} : vector<8x32xf32>, vector<8x32xf32>, vector<32x32xf32> -> vector<32x32xf32>
    %cst_108 = arith.constant 3.125000e-02 : f32
    %495 = vector.broadcast %cst_108 : f32 to vector<32x32xf32>
    %496 = arith.mulf %494, %495 : vector<32x32xf32>
    %cst_109 = arith.constant dense<0xFF800000> : vector<32xf32>
    %497 = vector.multi_reduction <maximumf>, %496, %cst_109 [1] : vector<32x32xf32> to vector<32xf32>
    %498 = vector.shape_cast %497 : vector<32xf32> to vector<32x1xf32>
    %499 = vector.broadcast %498 : vector<32x1xf32> to vector<32x32xf32>
    %500 = arith.subf %496, %499 : vector<32x32xf32>
    %501 = math.exp %500 : vector<32x32xf32>
    %cst_110 = arith.constant dense<0.000000e+00> : vector<32xf32>
    %502 = vector.multi_reduction <add>, %501, %cst_110 [1] : vector<32x32xf32> to vector<32xf32>
    %503 = vector.shape_cast %502 : vector<32xf32> to vector<32x1xf32>
    %504 = tpu.reciprocal %503 : vector<32x1xf32> -> vector<32x1xf32>
    %505 = vector.broadcast %504 : vector<32x1xf32> to vector<32x32xf32>
    %506 = arith.mulf %501, %505 : vector<32x32xf32>
    %cst_111 = arith.constant dense<0.000000e+00> : vector<8x32xf32>
    %507 = tpu.matmul %493, %506, %cst_111 {dimension_numbers = #tpu.dot_dimension_numbers<[1], [1], [0], [0], [0, 0, 1, 0], [], []>} : vector<8x32xf32>, vector<32x32xf32>, vector<8x32xf32> -> vector<8x32xf32>
    %c0_112 = arith.constant 0 : index
    %c0_113 = arith.constant 0 : index
    %c0_114 = arith.constant 0 : index
    %508 = vector.load %arg9[%c0_112, %c0_113, %c0_114] : memref<2x8x32xf32, #tpu.memory_space<vmem>>, vector<1x8x32xf32>
    %509 = vector.shape_cast %508 : vector<1x8x32xf32> to vector<8x32xf32>
    %510 = vector.shape_cast %507 : vector<8x32xf32> to vector<1x8x32xf32>
    tpu.vector_store %arg9[%c0_112, %c0_113, %c0_114], %510 {strides = array<i32>} : memref<2x8x32xf32, #tpu.memory_space<vmem>>, vector<1x8x32xf32>,
    %c1_115 = arith.constant 1 : index
    %c0_116 = arith.constant 0 : index
    %c0_117 = arith.constant 0 : index
    %511 = vector.load %arg11[%c1_115, %c0_116, %c0_117] : memref<2x8x32xf32, #tpu.memory_space<vmem>>, vector<1x8x32xf32>
    %512 = vector.shape_cast %511 : vector<1x8x32xf32> to vector<8x32xf32>
    %cst_118 = arith.constant dense<0.000000e+00> : vector<8x32xf32>
    %513 = tpu.matmul %486, %512, %cst_118 {dimension_numbers = #tpu.dot_dimension_numbers<[1], [0], [0], [1], [0, 0, 1, 1], [], []>} : vector<8x8xf32>, vector<8x32xf32>, vector<8x32xf32> -> vector<8x32xf32>
    %cst_119 = arith.constant dense<0.000000e+00> : vector<8x32xf32>
    %514 = tpu.matmul %487, %512, %cst_119 {dimension_numbers = #tpu.dot_dimension_numbers<[1], [0], [0], [1], [0, 0, 1, 1], [], []>} : vector<8x8xf32>, vector<8x32xf32>, vector<8x32xf32> -> vector<8x32xf32>
    %cst_120 = arith.constant dense<0.000000e+00> : vector<8x32xf32>
    %515 = tpu.matmul %488, %512, %cst_120 {dimension_numbers = #tpu.dot_dimension_numbers<[1], [0], [0], [1], [0, 0, 1, 1], [], []>} : vector<8x8xf32>, vector<8x32xf32>, vector<8x32xf32> -> vector<8x32xf32>
    %cst_121 = arith.constant dense<0.000000e+00> : vector<32x32xf32>
    %516 = tpu.matmul %513, %514, %cst_121 {dimension_numbers = #tpu.dot_dimension_numbers<[0], [0], [1], [1], [0, 1, 1, 1], [], []>} : vector<8x32xf32>, vector<8x32xf32>, vector<32x32xf32> -> vector<32x32xf32>
    %cst_122 = arith.constant 3.125000e-02 : f32
    %517 = vector.broadcast %cst_122 : f32 to vector<32x32xf32>
    %518 = arith.mulf %516, %517 : vector<32x32xf32>
    %cst_123 = arith.constant dense<0xFF800000> : vector<32xf32>
    %519 = vector.multi_reduction <maximumf>, %518, %cst_123 [1] : vector<32x32xf32> to vector<32xf32>
    %520 = vector.shape_cast %519 : vector<32xf32> to vector<32x1xf32>
    %521 = vector.broadcast %520 : vector<32x1xf32> to vector<32x32xf32>
    %522 = arith.subf %518, %521 : vector<32x32xf32>
    %523 = math.exp %522 : vector<32x32xf32>
    %cst_124 = arith.constant dense<0.000000e+00> : vector<32xf32>
    %524 = vector.multi_reduction <add>, %523, %cst_124 [1] : vector<32x32xf32> to vector<32xf32>
    %525 = vector.shape_cast %524 : vector<32xf32> to vector<32x1xf32>
    %526 = tpu.reciprocal %525 : vector<32x1xf32> -> vector<32x1xf32>
    %527 = vector.broadcast %526 : vector<32x1xf32> to vector<32x32xf32>
    %528 = arith.mulf %523, %527 : vector<32x32xf32>
    %cst_125 = arith.constant dense<0.000000e+00> : vector<8x32xf32>
    %529 = tpu.matmul %515, %528, %cst_125 {dimension_numbers = #tpu.dot_dimension_numbers<[1], [1], [0], [0], [0, 0, 1, 0], [], []>} : vector<8x32xf32>, vector<32x32xf32>, vector<8x32xf32> -> vector<8x32xf32>
    %c1_126 = arith.constant 1 : index
    %c0_127 = arith.constant 0 : index
    %c0_128 = arith.constant 0 : index
    %530 = vector.load %arg9[%c1_126, %c0_127, %c0_128] : memref<2x8x32xf32, #tpu.memory_space<vmem>>, vector<1x8x32xf32>
    %531 = vector.shape_cast %530 : vector<1x8x32xf32> to vector<8x32xf32>
    %532 = vector.shape_cast %529 : vector<8x32xf32> to vector<1x8x32xf32>
    tpu.vector_store %arg9[%c1_126, %c0_127, %c0_128], %532 {strides = array<i32>} : memref<2x8x32xf32, #tpu.memory_space<vmem>>, vector<1x8x32xf32>,
    return
  }
}

</mosaic_0001>

<llo_original>
// kernel: temporal_forward.1
$region0: #{temporal_forward.1}
  #allocation0 [shape = 'u32[]', space=smem, size = 0x4, offset = 0x4, fixed_abs, tag = 'smem constant byte address 0x4 - core index']
  #allocation1 [shape = 'u32[144,128]{1,0:T(1,128)}', space=vmem, size = 0x12000, scoped, tag = 'internal scratch']
  #allocation2 [shape = 'f32[2,8,32]{2,1,0:T(8,128)}', space=vmem, size = 0x2000, scoped, tag = 'scratch operand']
  %s0 = inlined_call_operand.vmem [shape: f32[16,32], index: 0, kind: input, shape index: {}]
  %s1 = inlined_call_operand.vmem [shape: f32[32,128], index: 1, kind: input, shape index: {}]
  %s2 = inlined_call_operand.vmem [shape: f32[32,128], index: 2, kind: input, shape index: {}]
  %s3 = inlined_call_operand.vmem [shape: f32[1,128], index: 3, kind: input, shape index: {}]
  %s4 = inlined_call_operand.vmem [shape: f32[64,128], index: 4, kind: input, shape index: {}]
  %s5 = inlined_call_operand.vmem [shape: f32[1,128], index: 5, kind: input, shape index: {}]
  %s6 = inlined_call_operand.vmem [shape: f32[8,8], index: 6, kind: input, shape index: {}]
  %s7 = inlined_call_operand.vmem [shape: f32[8,8], index: 7, kind: input, shape index: {}]
  %s8 = inlined_call_operand.vmem [shape: f32[8,8], index: 8, kind: input, shape index: {}]
  %s9 = inlined_call_operand.hbm [shape: f32[2,8,32], index: 9, kind: output, shape index: {0}]
  %s10 = inlined_call_operand.vmem [shape: f32[2,1], index: 10, kind: output, shape index: {1}]
  %11 = xla_tuple %s9, %s10
  %s12 = sld [smem:[#allocation0]]
  $region54: #{temporal_forward.1} parent=0
    _
  %s14 = ssub.s32 1, %s12
  %s15 = scalar_select 0, %s14, %s12
  $region1: #{temporal_forward.1} parent=0
    #allocation3 [shape = 'u8[8192]{0}', space=vmem, size = 0x2000, scoped, tag = 'output window, operand 0, single buffered']
    #allocation4 [shape = 's32[1]{0}', space=sflag, size = 0x4, scoped, tag = 'scoped memory for temporal_forward.1']
    %16 = vsyncpa [#allocation4], 0
    // Predicated region
    $region2: #{temporal_forward.1} parent=1 // pred_check
      _
    $region3: #{temporal_forward.1} parent=1 // pred_check_branch
      %18 = sbr.rel (0) target = $region5
    $region4: #{temporal_forward.1} parent=1 // pred_region
      _
    $region5: #{temporal_forward.1} parent=1 // pred_fallthru
      _
    // Predicated region
    $region6: #{temporal_forward.1} parent=1 // pred_check
      _
    $region7: #{temporal_forward.1} parent=1 // pred_check_branch
      %20 = sbr.rel (0) target = $region9
    $region8: #{temporal_forward.1} parent=1 // pred_region
      _
    $region9: #{temporal_forward.1} parent=1 // pred_fallthru
      _
    // Predicated region
    $region10: #{temporal_forward.1} parent=1 // pred_check
      _
    $region11: #{temporal_forward.1} parent=1 // pred_check_branch
      %22 = sbr.rel (0) target = $region13
    $region12: #{temporal_forward.1} parent=1 // pred_region
      _
    $region13: #{temporal_forward.1} parent=1 // pred_fallthru
      _
    // Predicated region
    $region14: #{temporal_forward.1} parent=1 // pred_check
      _
    $region15: #{temporal_forward.1} parent=1 // pred_check_branch
      %24 = sbr.rel (0) target = $region17
    $region16: #{temporal_forward.1} parent=1 // pred_region
      _
    $region17: #{temporal_forward.1} parent=1 // pred_fallthru
      _
    // Predicated region
    $region18: #{temporal_forward.1} parent=1 // pred_check
      _
    $region19: #{temporal_forward.1} parent=1 // pred_check_branch
      %26 = sbr.rel (0) target = $region21
    $region20: #{temporal_forward.1} parent=1 // pred_region
      _
    $region21: #{temporal_forward.1} parent=1 // pred_fallthru
      _
    // Predicated region
    $region22: #{temporal_forward.1} parent=1 // pred_check
      _
    $region23: #{temporal_forward.1} parent=1 // pred_check_branch
      %28 = sbr.rel (0) target = $region25
    $region24: #{temporal_forward.1} parent=1 // pred_region
      _
    $region25: #{temporal_forward.1} parent=1 // pred_fallthru
      _
    // Predicated region
    $region26: #{temporal_forward.1} parent=1 // pred_check
      _
    $region27: #{temporal_forward.1} parent=1 // pred_check_branch
      %30 = sbr.rel (0) target = $region29
    $region28: #{temporal_forward.1} parent=1 // pred_region
      _
    $region29: #{temporal_forward.1} parent=1 // pred_fallthru
      _
    // Predicated region
    $region30: #{temporal_forward.1} parent=1 // pred_check
      _
    $region31: #{temporal_forward.1} parent=1 // pred_check_branch
      %32 = sbr.rel (0) target = $region33
    $region32: #{temporal_forward.1} parent=1 // pred_region
      _
    $region33: #{temporal_forward.1} parent=1 // pred_fallthru
      _
    // Predicated region
    $region34: #{temporal_forward.1} parent=1 // pred_check
      _
    $region35: #{temporal_forward.1} parent=1 // pred_check_branch
      %34 = sbr.rel (0) target = $region37
    $region36: #{temporal_forward.1} parent=1 // pred_region
      _
    $region37: #{temporal_forward.1} parent=1 // pred_fallthru
      _
    %v35 = vld [vmem:[%s1] sm:$0xff]
    %v36 = vld [vmem:[%s1 + $0x8] sm:$0xff]
    %v37 = vld [vmem:[%s1 + $0x10] sm:$0xff]
    %v38 = vld [vmem:[%s1 + $0x18] sm:$0xff]
    %v39 = vld [vmem:[%s2] sm:$0xff]
    %v40 = vld [vmem:[%s2 + $0x8] sm:$0xff]
    %v41 = vld [vmem:[%s2 + $0x10] sm:$0xff]
    %v42 = vld [vmem:[%s2 + $0x18] sm:$0xff]
    %v43 = vld [vmem:[%s4] sm:$0xff]
    %v44 = vld [vmem:[%s4 + $0x8] sm:$0xff]
    %v45 = vld [vmem:[%s4 + $0x10] sm:$0xff]
    %v46 = vld [vmem:[%s4 + $0x18] sm:$0xff]
    %v47 = vld [vmem:[%s4 + $0x20] sm:$0xff]
    %v48 = vld [vmem:[%s4 + $0x28] sm:$0xff]
    %v49 = vld [vmem:[%s4 + $0x30] sm:$0xff]
    %v50 = vld [vmem:[%s4 + $0x38] sm:$0xff]
    %v51 = vld [vmem:[%s0] sm:$0xff]
    %v52 = vld [vmem:[%s0 + $0x8] sm:$0xff]
    %v53 = vld [vmem:[%s3] sm:$0x1]
    %v55 = vlaneseq
    %v56 = vshrl.u32 %v55, 7
    %v57 = vsub.s32 0, %v56
    %v58 = vrot.slane %v53, %v57
    %vm60 = vcmask 261120
    %v62 = vsel %vm60, %v51, 0
    %v65 = vsel %vm60, %v52, 0
    %67 = vmatprep.subr.mxu0 0.0
    %68 = vmatpush1.msra.mxu0 %v35
    %69 = vmatprep.subr.mxu0 0.0
    %70 = vmatpush1.msra.mxu0 %v36
    %71 = vmatprep.subr.mxu0 0.0
    %72 = vmatpush1.msra.mxu0 %v37
    %73 = vmatprep.subr.mxu0 0.0
    %74 = vmatpush1.msra.mxu0 %v38
    %75 = vmatprep.subr.mxu0 0.0
    %76 = vmatpush1.msra.mxu0 0.0
    %77 = vmatprep.subr.mxu0 0.0
    %78 = vmatpush1.msra.mxu0 0.0
    %79 = vmatprep.subr.mxu0 0.0
    %80 = vmatpush1.msra.mxu0 0.0
    %81 = vmatprep.subr.mxu0 0.0
    %82 = vmatpush1.msra.mxu0 0.0
    %83 = vmatprep.subr.mxu0 0.0
    %84 = vmatpush1.msra.mxu0 0.0
    %85 = vmatprep.subr.mxu0 0.0
    %86 = vmatpush1.msra.mxu0 0.0
    %87 = vmatprep.subr.mxu0 0.0
    %88 = vmatpush1.msra.mxu0 0.0
    %89 = vmatprep.subr.mxu0 0.0
    %90 = vmatpush1.msra.mxu0 0.0
    %91 = vmatprep.subr.mxu0 0.0
    %92 = vmatpush1.msra.mxu0 0.0
    %93 = vmatprep.subr.mxu0 0.0
    %94 = vmatpush1.msra.mxu0 0.0
    %95 = vmatprep.subr.mxu0 0.0
    %96 = vmatpush1.msra.mxu0 0.0
    %97 = vmatprep.subr.mxu0 0.0
    %98 = vmatpush1.msra.mxu0 0.0
    %99 = vmatprep.subr.mxu0 0.0
    %100 = vmatpush1.msra.mxu0 0.0
    %101 = vmatprep.subr.mxu0 0.0
    %102 = vmatpush1.msra.mxu0 0.0
    %103 = vmatprep.subr.mxu0 0.0
    %104 = vmatpush1.msra.mxu0 0.0
    %105 = vmatprep.subr.mxu0 0.0
    %106 = vmatpush1.msra.mxu0 0.0
    %107 = vmatprep.subr.mxu0 0.0
    %108 = vmatpush1.msra.mxu0 0.0
    %109 = vmatprep.subr.mxu0 0.0
    %110 = vmatpush1.msra.mxu0 0.0
    %111 = vmatprep.subr.mxu0 0.0
    %112 = vmatpush1.msra.mxu0 0.0
    %113 = vmatprep.subr.mxu0 0.0
    %114 = vmatpush1.msra.mxu0 0.0
    %115 = vmatprep.subr.mxu0 0.0
    %116 = vmatpush1.msra.mxu0 0.0
    %117 = vmatprep.subr.mxu0 0.0
    %118 = vmatpush1.msra.mxu0 0.0
    %119 = vmatprep.subr.mxu0 0.0
    %120 = vmatpush1.msra.mxu0 0.0
    %121 = vmatprep.subr.mxu0 0.0
    %122 = vmatpush1.msra.mxu0 0.0
    %123 = vmatprep.subr.mxu0 0.0
    %124 = vmatpush1.msra.mxu0 0.0
    %125 = vmatprep.subr.mxu0 0.0
    %126 = vmatpush1.msra.mxu0 0.0
    %127 = vmatprep.subr.mxu0 0.0
    %128 = vmatpush1.msra.mxu0 0.0
    %129 = vmatprep.subr.mxu0 0.0
    %130 = vmatpush1.msra.mxu0 0.0
    %131 = vmatprep.mubr.f32.mxu0 0.0
    %132 = vmatmul.mubr.f32.gmra.mrb[0].mxu0 %v62
    %v133 = vpop.f32.mrb[0].mxu0
    %v134 = vadd.f32 %v58, %v133
    %v135 = vpop.f32.mrb[0].mxu0
    %136 = vmatprep.mubr.f32.mxu0 0.0
    %137 = vmatmul.mubr.f32.gmra.mrb[0].mxu0 %v65
    %v138 = vpop.f32.mrb[0].mxu0
    %v139 = vadd.f32 %v58, %v138
    %v140 = vpop.f32.mrb[0].mxu0
    %141 = vdwg.mxu0
    %v142 = vld [vmem:[%s5] sm:$0x1]
    %v144 = vlaneseq
    %v145 = vshrl.u32 %v144, 7
    %v146 = vsub.s32 0, %v145
    %v147 = vrot.slane %v142, %v146
    %v150 = vsel %vm60, 0.0, 0
    %152 = vmatprep.subr.mxu0 0.0
    %153 = vmatpush1.msra.mxu0 %v39
    %154 = vmatprep.subr.mxu0 0.0
    %155 = vmatpush1.msra.mxu0 %v40
    %156 = vmatprep.subr.mxu0 0.0
    %157 = vmatpush1.msra.mxu0 %v41
    %158 = vmatprep.subr.mxu0 0.0
    %159 = vmatpush1.msra.mxu0 %v42
    %160 = vmatprep.subr.mxu0 0.0
    %161 = vmatpush1.msra.mxu0 0.0
    %162 = vmatprep.subr.mxu0 0.0
    %163 = vmatpush1.msra.mxu0 0.0
    %164 = vmatprep.subr.mxu0 0.0
    %165 = vmatpush1.msra.mxu0 0.0
    %166 = vmatprep.subr.mxu0 0.0
    %167 = vmatpush1.msra.mxu0 0.0
    %168 = vmatprep.subr.mxu0 0.0
    %169 = vmatpush1.msra.mxu0 0.0
    %170 = vmatprep.subr.mxu0 0.0
    %171 = vmatpush1.msra.mxu0 0.0
    %172 = vmatprep.subr.mxu0 0.0
    %173 = vmatpush1.msra.mxu0 0.0
    %174 = vmatprep.subr.mxu0 0.0
    %175 = vmatpush1.msra.mxu0 0.0
    %176 = vmatprep.subr.mxu0 0.0
    %177 = vmatpush1.msra.mxu0 0.0
    %178 = vmatprep.subr.mxu0 0.0
    %179 = vmatpush1.msra.mxu0 0.0
    %180 = vmatprep.subr.mxu0 0.0
    %181 = vmatpush1.msra.mxu0 0.0
    %182 = vmatprep.subr.mxu0 0.0
    %183 = vmatpush1.msra.mxu0 0.0
    %184 = vmatprep.subr.mxu0 0.0
    %185 = vmatpush1.msra.mxu0 0.0
    %186 = vmatprep.subr.mxu0 0.0
    %187 = vmatpush1.msra.mxu0 0.0
    %188 = vmatprep.subr.mxu0 0.0
    %189 = vmatpush1.msra.mxu0 0.0
    %190 = vmatprep.subr.mxu0 0.0
    %191 = vmatpush1.msra.mxu0 0.0
    %192 = vmatprep.subr.mxu0 0.0
    %193 = vmatpush1.msra.mxu0 0.0
    %194 = vmatprep.subr.mxu0 0.0
    %195 = vmatpush1.msra.mxu0 0.0
    %196 = vmatprep.subr.mxu0 0.0
    %197 = vmatpush1.msra.mxu0 0.0
    %198 = vmatprep.subr.mxu0 0.0
    %199 = vmatpush1.msra.mxu0 0.0
    %200 = vmatprep.subr.mxu0 0.0
    %201 = vmatpush1.msra.mxu0 0.0
    %202 = vmatprep.subr.mxu0 0.0
    %203 = vmatpush1.msra.mxu0 0.0
    %204 = vmatprep.subr.mxu0 0.0
    %205 = vmatpush1.msra.mxu0 0.0
    %206 = vmatprep.subr.mxu0 0.0
    %207 = vmatpush1.msra.mxu0 0.0
    %208 = vmatprep.subr.mxu0 0.0
    %209 = vmatpush1.msra.mxu0 0.0
    %210 = vmatprep.subr.mxu0 0.0
    %211 = vmatpush1.msra.mxu0 0.0
    %212 = vmatprep.subr.mxu0 0.0
    %213 = vmatpush1.msra.mxu0 0.0
    %214 = vmatprep.subr.mxu0 0.0
    %215 = vmatpush1.msra.mxu0 0.0
    %216 = vmatprep.mubr.f32.mxu0 0.0
    %217 = vmatmul.mubr.f32.gmra.mrb[0].mxu0 %v150
    %v218 = vpop.f32.mrb[0].mxu0
    %v219 = vadd.f32 0.0, %v218
    %v220 = vpop.f32.mrb[0].mxu0
    %221 = vdwg.mxu0
    %v222 = vadd.f32 %v134, %v219
    %v223 = vxor.u32 %v222, 2147483648
    %v224 = vmul.f32 %v223, 1.442695
    %v225 = vpow.pop %v224
    %v226 = vadd.f32 %v225, 1.0
    %v227 = vrcp.pop %v226
    %v228 = vmul.f32 1.0, %v227
    %v229 = vtanh.pop %v222
    %v230 = vmul.f32 %v228, 0.0
    %232 = vrot.lane.b32.xlu0 %v229, 64
    %v233 = vpop.permute.xlu0 %232
    %v235 = vmul.f32 %v228, %v233
    %237 = vrot.lane.b32.xlu0 %v235, 32
    %v238 = vpop.permute.xlu0 %237
    %v240 = vadd.f32 %v230, %v238
    %v241 = vtanh.pop %v240
    %243 = vrot.lane.b32.xlu0 %v241, 64
    %v244 = vpop.permute.xlu0 %243
    %v246 = vmul.f32 %v228, %v244
    %248 = vrot.lane.b32.xlu0 %v246, 32
    %v249 = vpop.permute.xlu0 %248
    %v251 = vsel %vm60, %v249, 0.0
    %vm252 = vcmask 523264
    %v254 = vsel %vm252, %v251, 0
    %256 = vmatprep.subr.mxu0 0.0
    %257 = vmatpush1.msra.mxu0 %v43
    %258 = vmatprep.subr.mxu0 0.0
    %259 = vmatpush1.msra.mxu0 %v44
    %260 = vmatprep.subr.mxu0 0.0
    %261 = vmatpush1.msra.mxu0 %v45
    %262 = vmatprep.subr.mxu0 0.0
    %263 = vmatpush1.msra.mxu0 %v46
    %264 = vmatprep.subr.mxu0 0.0
    %265 = vmatpush1.msra.mxu0 %v47
    %266 = vmatprep.subr.mxu0 0.0
    %267 = vmatpush1.msra.mxu0 %v48
    %268 = vmatprep.subr.mxu0 0.0
    %269 = vmatpush1.msra.mxu0 %v49
    %270 = vmatprep.subr.mxu0 0.0
    %271 = vmatpush1.msra.mxu0 %v50
    %272 = vmatprep.subr.mxu0 0.0
    %273 = vmatpush1.msra.mxu0 0.0
    %274 = vmatprep.subr.mxu0 0.0
    %275 = vmatpush1.msra.mxu0 0.0
    %276 = vmatprep.subr.mxu0 0.0
    %277 = vmatpush1.msra.mxu0 0.0
    %278 = vmatprep.subr.mxu0 0.0
    %279 = vmatpush1.msra.mxu0 0.0
    %280 = vmatprep.subr.mxu0 0.0
    %281 = vmatpush1.msra.mxu0 0.0
    %282 = vmatprep.subr.mxu0 0.0
    %283 = vmatpush1.msra.mxu0 0.0
    %284 = vmatprep.subr.mxu0 0.0
    %285 = vmatpush1.msra.mxu0 0.0
    %286 = vmatprep.subr.mxu0 0.0
    %287 = vmatpush1.msra.mxu0 0.0
    %288 = vmatprep.subr.mxu0 0.0
    %289 = vmatpush1.msra.mxu0 0.0
    %290 = vmatprep.subr.mxu0 0.0
    %291 = vmatpush1.msra.mxu0 0.0
    %292 = vmatprep.subr.mxu0 0.0
    %293 = vmatpush1.msra.mxu0 0.0
    %294 = vmatprep.subr.mxu0 0.0
    %295 = vmatpush1.msra.mxu0 0.0
    %296 = vmatprep.subr.mxu0 0.0
    %297 = vmatpush1.msra.mxu0 0.0
    %298 = vmatprep.subr.mxu0 0.0
    %299 = vmatpush1.msra.mxu0 0.0
    %300 = vmatprep.subr.mxu0 0.0
    %301 = vmatpush1.msra.mxu0 0.0
    %302 = vmatprep.subr.mxu0 0.0
    %303 = vmatpush1.msra.mxu0 0.0
    %304 = vmatprep.subr.mxu0 0.0
    %305 = vmatpush1.msra.mxu0 0.0
    %306 = vmatprep.subr.mxu0 0.0
    %307 = vmatpush1.msra.mxu0 0.0
    %308 = vmatprep.subr.mxu0 0.0
    %309 = vmatpush1.msra.mxu0 0.0
    %310 = vmatprep.subr.mxu0 0.0
    %311 = vmatpush1.msra.mxu0 0.0
    %312 = vmatprep.subr.mxu0 0.0
    %313 = vmatpush1.msra.mxu0 0.0
    %314 = vmatprep.subr.mxu0 0.0
    %315 = vmatpush1.msra.mxu0 0.0
    %316 = vmatprep.subr.mxu0 0.0
    %317 = vmatpush1.msra.mxu0 0.0
    %318 = vmatprep.subr.mxu0 0.0
    %319 = vmatpush1.msra.mxu0 0.0
    %320 = vmatprep.mubr.f32.mxu0 0.0
    %321 = vmatmul.mubr.f32.gmra.mrb[0].mxu0 %v254
    %v322 = vpop.f32.mrb[0].mxu0
    %v323 = vadd.f32 %v147, %v322
    %v324 = vpop.f32.mrb[0].mxu0
    %325 = vdwg.mxu0
    %v326 = vxor.u32 %v323, 2147483648
    %v327 = vmul.f32 %v326, 1.442695
    %v328 = vpow.pop %v327
    %v329 = vadd.f32 %v328, 1.0
    %v330 = vrcp.pop %v329
    %v331 = vmul.f32 1.0, %v330
    %v332 = vtanh.pop %v323
    %v333 = vmul.f32 %v331, 0.0
    %335 = vrot.lane.b32.xlu0 %v332, 64
    %v336 = vpop.permute.xlu0 %335
    %v338 = vmul.f32 %v331, %v336
    %340 = vrot.lane.b32.xlu0 %v338, 32
    %v341 = vpop.permute.xlu0 %340
    %v343 = vadd.f32 %v333, %v341
    %v344 = vtanh.pop %v343
    %346 = vrot.lane.b32.xlu0 %v344, 64
    %v347 = vpop.permute.xlu0 %346
    %v349 = vmul.f32 %v331, %v347
    %v352 = vunpack.c.l.s4 1966171168
    %v353 = vunpack.c.0.s8 %v352
    %v354 = vlaneseq
    %v355 = vshrl.u32 %v354, 7
    %v356 = vsub.s32 %v353, %v355
    %v357 = vrot.slane %v349, %v356
    %v358 = vcombine.high %v357, %v357
    %v360 = vunpack.c.l.s4 1966171168
    %v361 = vunpack.c.0.s8 %v360
    %v362 = vlaneseq
    %v363 = vshrl.u32 %v362, 7
    %v364 = vsub.s32 %v361, %v363
    %v365 = vrot.slane %v357, %v364
    %v367 = vunpack.c.l.s4 1966171168
    %v368 = vunpack.c.0.s8 %v367
    %v369 = vlaneseq
    %v370 = vshrl.u32 %v369, 7
    %v371 = vsub.s32 %v368, %v370
    %v372 = vrot.slane %v358, %v371
    %v373 = vlaneseq
    %v374 = vshrl.u32 %v373, 7
    %v375 = vsub.s32 0, %v374
    %v376 = vrot.slane %v365, %v375
    %v377 = vlaneseq
    %v378 = vshrl.u32 %v377, 7
    %v379 = vsub.s32 0, %v378
    %v380 = vrot.slane %v372, %v379
    %381 = vrot.lane.b32.xlu0 %v376, 32
    %v382 = vpop.permute.xlu0 %381
    %383 = vrot.lane.b32.xlu0 %v380, 32
    %v384 = vpop.permute.xlu0 %383
    %vm387 = vcmask 253952
    %388 = vst.msk [vmem:[#allocation2] sm:$0x1] %vm387, %v382
    %389 = vst.msk [vmem:[#allocation2 + $0x8] sm:$0x1] %vm387, %v384
    %v390 = vsel %vm60, %v249, 0
    %392 = vmatprep.subr.mxu0 0.0
    %393 = vmatpush1.msra.mxu0 %v39
    %394 = vmatprep.subr.mxu0 0.0
    %395 = vmatpush1.msra.mxu0 %v40
    %396 = vmatprep.subr.mxu0 0.0
    %397 = vmatpush1.msra.mxu0 %v41
    %398 = vmatprep.subr.mxu0 0.0
    %399 = vmatpush1.msra.mxu0 %v42
    %400 = vmatprep.subr.mxu0 0.0
    %401 = vmatpush1.msra.mxu0 0.0
    %402 = vmatprep.subr.mxu0 0.0
    %403 = vmatpush1.msra.mxu0 0.0
    %404 = vmatprep.subr.mxu0 0.0
    %405 = vmatpush1.msra.mxu0 0.0
    %406 = vmatprep.subr.mxu0 0.0
    %407 = vmatpush1.msra.mxu0 0.0
    %408 = vmatprep.subr.mxu0 0.0
    %409 = vmatpush1.msra.mxu0 0.0
    %410 = vmatprep.subr.mxu0 0.0
    %411 = vmatpush1.msra.mxu0 0.0
    %412 = vmatprep.subr.mxu0 0.0
    %413 = vmatpush1.msra.mxu0 0.0
    %414 = vmatprep.subr.mxu0 0.0
    %415 = vmatpush1.msra.mxu0 0.0
    %416 = vmatprep.subr.mxu0 0.0
    %417 = vmatpush1.msra.mxu0 0.0
    %418 = vmatprep.subr.mxu0 0.0
    %419 = vmatpush1.msra.mxu0 0.0
    %420 = vmatprep.subr.mxu0 0.0
    %421 = vmatpush1.msra.mxu0 0.0
    %422 = vmatprep.subr.mxu0 0.0
    %423 = vmatpush1.msra.mxu0 0.0
    %424 = vmatprep.subr.mxu0 0.0
    %425 = vmatpush1.msra.mxu0 0.0
    %426 = vmatprep.subr.mxu0 0.0
    %427 = vmatpush1.msra.mxu0 0.0
    %428 = vmatprep.subr.mxu0 0.0
    %429 = vmatpush1.msra.mxu0 0.0
    %430 = vmatprep.subr.mxu0 0.0
    %431 = vmatpush1.msra.mxu0 0.0
    %432 = vmatprep.subr.mxu0 0.0
    %433 = vmatpush1.msra.mxu0 0.0
    %434 = vmatprep.subr.mxu0 0.0
    %435 = vmatpush1.msra.mxu0 0.0
    %436 = vmatprep.subr.mxu0 0.0
    %437 = vmatpush1.msra.mxu0 0.0
    %438 = vmatprep.subr.mxu0 0.0
    %439 = vmatpush1.msra.mxu0 0.0
    %440 = vmatprep.subr.mxu0 0.0
    %441 = vmatpush1.msra.mxu0 0.0
    %442 = vmatprep.subr.mxu0 0.0
    %443 = vmatpush1.msra.mxu0 0.0
    %444 = vmatprep.subr.mxu0 0.0
    %445 = vmatpush1.msra.mxu0 0.0
    %446 = vmatprep.subr.mxu0 0.0
    %447 = vmatpush1.msra.mxu0 0.0
    %448 = vmatprep.subr.mxu0 0.0
    %449 = vmatpush1.msra.mxu0 0.0
    %450 = vmatprep.subr.mxu0 0.0
    %451 = vmatpush1.msra.mxu0 0.0
    %452 = vmatprep.subr.mxu0 0.0
    %453 = vmatpush1.msra.mxu0 0.0
    %454 = vmatprep.subr.mxu0 0.0
    %455 = vmatpush1.msra.mxu0 0.0
    %456 = vmatprep.mubr.f32.mxu0 0.0
    %457 = vmatmul.mubr.f32.gmra.mrb[0].mxu0 %v390
    %v458 = vpop.f32.mrb[0].mxu0
    %v459 = vadd.f32 0.0, %v458
    %v460 = vpop.f32.mrb[0].mxu0
    %461 = vdwg.mxu0
    %v463 = vrot.slane %v459, 6
    %v465 = vadd.f32 %v134, %v463
    %v466 = vxor.u32 %v465, 2147483648
    %v467 = vmul.f32 %v466, 1.442695
    %v468 = vpow.pop %v467
    %v469 = vadd.f32 %v468, 1.0
    %v470 = vrcp.pop %v469
    %v471 = vmul.f32 1.0, %v470
    %v472 = vtanh.pop %v465
    %v474 = vrot.slane %v240, 6
    %v476 = vmul.f32 %v471, %v474
    %478 = vrot.lane.b32.xlu0 %v472, 64
    %v479 = vpop.permute.xlu0 %478
    %v481 = vmul.f32 %v471, %v479
    %483 = vrot.lane.b32.xlu0 %v481, 32
    %v484 = vpop.permute.xlu0 %483
    %v486 = vadd.f32 %v476, %v484
    %v487 = vtanh.pop %v486
    %489 = vrot.lane.b32.xlu0 %v487, 64
    %v490 = vpop.permute.xlu0 %489
    %v492 = vmul.f32 %v471, %v490
    %494 = vrot.lane.b32.xlu0 %v492, 32
    %v495 = vpop.permute.xlu0 %494
    %v497 = vrot.slane %v349, 6
    %498 = vrot.lane.b32.xlu0 %v497, 64
    %v499 = vpop.permute.xlu0 %498
    %v501 = vsel %vm60, %v495, %v499
    %v503 = vrot.slane %v501, 2
    %v504 = vsel %vm252, %v503, 0
    %506 = vmatprep.subr.mxu0 0.0
    %507 = vmatpush1.msra.mxu0 %v43
    %508 = vmatprep.subr.mxu0 0.0
    %509 = vmatpush1.msra.mxu0 %v44
    %510 = vmatprep.subr.mxu0 0.0
    %511 = vmatpush1.msra.mxu0 %v45
    %512 = vmatprep.subr.mxu0 0.0
    %513 = vmatpush1.msra.mxu0 %v46
    %514 = vmatprep.subr.mxu0 0.0
    %515 = vmatpush1.msra.mxu0 %v47
    %516 = vmatprep.subr.mxu0 0.0
    %517 = vmatpush1.msra.mxu0 %v48
    %518 = vmatprep.subr.mxu0 0.0
    %519 = vmatpush1.msra.mxu0 %v49
    %520 = vmatprep.subr.mxu0 0.0
    %521 = vmatpush1.msra.mxu0 %v50
    %522 = vmatprep.subr.mxu0 0.0
    %523 = vmatpush1.msra.mxu0 0.0
    %524 = vmatprep.subr.mxu0 0.0
    %525 = vmatpush1.msra.mxu0 0.0
    %526 = vmatprep.subr.mxu0 0.0
    %527 = vmatpush1.msra.mxu0 0.0
    %528 = vmatprep.subr.mxu0 0.0
    %529 = vmatpush1.msra.mxu0 0.0
    %530 = vmatprep.subr.mxu0 0.0
    %531 = vmatpush1.msra.mxu0 0.0
    %532 = vmatprep.subr.mxu0 0.0
    %533 = vmatpush1.msra.mxu0 0.0
    %534 = vmatprep.subr.mxu0 0.0
    %535 = vmatpush1.msra.mxu0 0.0
    %536 = vmatprep.subr.mxu0 0.0
    %537 = vmatpush1.msra.mxu0 0.0
    %538 = vmatprep.subr.mxu0 0.0
    %539 = vmatpush1.msra.mxu0 0.0
    %540 = vmatprep.subr.mxu0 0.0
    %541 = vmatpush1.msra.mxu0 0.0
    %542 = vmatprep.subr.mxu0 0.0
    %543 = vmatpush1.msra.mxu0 0.0
    %544 = vmatprep.subr.mxu0 0.0
    %545 = vmatpush1.msra.mxu0 0.0
    %546 = vmatprep.subr.mxu0 0.0
    %547 = vmatpush1.msra.mxu0 0.0
    %548 = vmatprep.subr.mxu0 0.0
    %549 = vmatpush1.msra.mxu0 0.0
    %550 = vmatprep.subr.mxu0 0.0
    %551 = vmatpush1.msra.mxu0 0.0
    %552 = vmatprep.subr.mxu0 0.0
    %553 = vmatpush1.msra.mxu0 0.0
    %554 = vmatprep.subr.mxu0 0.0
    %555 = vmatpush1.msra.mxu0 0.0
    %556 = vmatprep.subr.mxu0 0.0
    %557 = vmatpush1.msra.mxu0 0.0
    %558 = vmatprep.subr.mxu0 0.0
    %559 = vmatpush1.msra.mxu0 0.0
    %560 = vmatprep.subr.mxu0 0.0
    %561 = vmatpush1.msra.mxu0 0.0
    %562 = vmatprep.subr.mxu0 0.0
    %563 = vmatpush1.msra.mxu0 0.0
    %564 = vmatprep.subr.mxu0 0.0
    %565 = vmatpush1.msra.mxu0 0.0
    %566 = vmatprep.subr.mxu0 0.0
    %567 = vmatpush1.msra.mxu0 0.0
    %568 = vmatprep.subr.mxu0 0.0
    %569 = vmatpush1.msra.mxu0 0.0
    %570 = vmatprep.mubr.f32.mxu0 0.0
    %571 = vmatmul.mubr.f32.gmra.mrb[0].mxu0 %v504
    %v572 = vpop.f32.mrb[0].mxu0
    %v573 = vadd.f32 %v147, %v572
    %v574 = vpop.f32.mrb[0].mxu0
    %575 = vdwg.mxu0
    %v576 = vxor.u32 %v573, 2147483648
    %v577 = vmul.f32 %v576, 1.442695
    %v578 = vpow.pop %v577
    %v579 = vadd.f32 %v578, 1.0
    %v580 = vrcp.pop %v579
    %v581 = vmul.f32 1.0, %v580
    %v582 = vtanh.pop %v573
    %v583 = vmul.f32 %v581, %v343
    %585 = vrot.lane.b32.xlu0 %v582, 64
    %v586 = vpop.permute.xlu0 %585
    %v588 = vmul.f32 %v581, %v586
    %590 = vrot.lane.b32.xlu0 %v588, 32
    %v591 = vpop.permute.xlu0 %590
    %v593 = vadd.f32 %v583, %v591
    %v594 = vtanh.pop %v593
    %596 = vrot.lane.b32.xlu0 %v594, 64
    %v597 = vpop.permute.xlu0 %596
    %v599 = vmul.f32 %v581, %v597
    %v602 = vunpack.c.l.s4 1966171168
    %v603 = vunpack.c.0.s8 %v602
    %v604 = vlaneseq
    %v605 = vshrl.u32 %v604, 7
    %v606 = vsub.s32 %v603, %v605
    %v607 = vrot.slane %v599, %v606
    %v608 = vcombine.high %v607, %v607
    %v610 = vunpack.c.l.s4 1966171168
    %v611 = vunpack.c.0.s8 %v610
    %v612 = vlaneseq
    %v613 = vshrl.u32 %v612, 7
    %v614 = vsub.s32 %v611, %v613
    %v615 = vrot.slane %v607, %v614
    %v617 = vunpack.c.l.s4 1966171168
    %v618 = vunpack.c.0.s8 %v617
    %v619 = vlaneseq
    %v620 = vshrl.u32 %v619, 7
    %v621 = vsub.s32 %v618, %v620
    %v622 = vrot.slane %v608, %v621
    %v623 = vlaneseq
    %v624 = vshrl.u32 %v623, 7
    %v625 = vsub.s32 0, %v624
    %v626 = vrot.slane %v615, %v625
    %v627 = vlaneseq
    %v628 = vshrl.u32 %v627, 7
    %v629 = vsub.s32 0, %v628
    %v630 = vrot.slane %v622, %v629
    %631 = vrot.lane.b32.xlu0 %v626, 32
    %v632 = vpop.permute.xlu0 %631
    %633 = vrot.lane.b32.xlu0 %v630, 32
    %v634 = vpop.permute.xlu0 %633
    %637 = vst.msk [vmem:[#allocation2 + $0x1] sm:$0x1] %vm387, %v632
    %638 = vst.msk [vmem:[#allocation2 + $0x9] sm:$0x1] %vm387, %v634
    %v639 = vrot.slane %v492, 2
    %640 = vrot.lane.b32.xlu0 %v639, 32
    %v641 = vpop.permute.xlu0 %640
    %v642 = vsel %vm60, %v641, 0
    %644 = vmatprep.subr.mxu0 0.0
    %645 = vmatpush1.msra.mxu0 %v39
    %646 = vmatprep.subr.mxu0 0.0
    %647 = vmatpush1.msra.mxu0 %v40
    %648 = vmatprep.subr.mxu0 0.0
    %649 = vmatpush1.msra.mxu0 %v41
    %650 = vmatprep.subr.mxu0 0.0
    %651 = vmatpush1.msra.mxu0 %v42
    %652 = vmatprep.subr.mxu0 0.0
    %653 = vmatpush1.msra.mxu0 0.0
    %654 = vmatprep.subr.mxu0 0.0
    %655 = vmatpush1.msra.mxu0 0.0
    %656 = vmatprep.subr.mxu0 0.0
    %657 = vmatpush1.msra.mxu0 0.0
    %658 = vmatprep.subr.mxu0 0.0
    %659 = vmatpush1.msra.mxu0 0.0
    %660 = vmatprep.subr.mxu0 0.0
    %661 = vmatpush1.msra.mxu0 0.0
    %662 = vmatprep.subr.mxu0 0.0
    %663 = vmatpush1.msra.mxu0 0.0
    %664 = vmatprep.subr.mxu0 0.0
    %665 = vmatpush1.msra.mxu0 0.0
    %666 = vmatprep.subr.mxu0 0.0
    %667 = vmatpush1.msra.mxu0 0.0
    %668 = vmatprep.subr.mxu0 0.0
    %669 = vmatpush1.msra.mxu0 0.0
    %670 = vmatprep.subr.mxu0 0.0
    %671 = vmatpush1.msra.mxu0 0.0
    %672 = vmatprep.subr.mxu0 0.0
    %673 = vmatpush1.msra.mxu0 0.0
    %674 = vmatprep.subr.mxu0 0.0
    %675 = vmatpush1.msra.mxu0 0.0
    %676 = vmatprep.subr.mxu0 0.0
    %677 = vmatpush1.msra.mxu0 0.0
    %678 = vmatprep.subr.mxu0 0.0
    %679 = vmatpush1.msra.mxu0 0.0
    %680 = vmatprep.subr.mxu0 0.0
    %681 = vmatpush1.msra.mxu0 0.0
    %682 = vmatprep.subr.mxu0 0.0
    %683 = vmatpush1.msra.mxu0 0.0
    %684 = vmatprep.subr.mxu0 0.0
    %685 = vmatpush1.msra.mxu0 0.0
    %686 = vmatprep.subr.mxu0 0.0
    %687 = vmatpush1.msra.mxu0 0.0
    %688 = vmatprep.subr.mxu0 0.0
    %689 = vmatpush1.msra.mxu0 0.0
    %690 = vmatprep.subr.mxu0 0.0
    %691 = vmatpush1.msra.mxu0 0.0
    %692 = vmatprep.subr.mxu0 0.0
    %693 = vmatpush1.msra.mxu0 0.0
    %694 = vmatprep.subr.mxu0 0.0
    %695 = vmatpush1.msra.mxu0 0.0
    %696 = vmatprep.subr.mxu0 0.0
    %697 = vmatpush1.msra.mxu0 0.0
    %698 = vmatprep.subr.mxu0 0.0
    %699 = vmatpush1.msra.mxu0 0.0
    %700 = vmatprep.subr.mxu0 0.0
    %701 = vmatpush1.msra.mxu0 0.0
    %702 = vmatprep.subr.mxu0 0.0
    %703 = vmatpush1.msra.mxu0 0.0
    %704 = vmatprep.subr.mxu0 0.0
    %705 = vmatpush1.msra.mxu0 0.0
    %706 = vmatprep.subr.mxu0 0.0
    %707 = vmatpush1.msra.mxu0 0.0
    %708 = vmatprep.mubr.f32.mxu0 0.0
    %709 = vmatmul.mubr.f32.gmra.mrb[0].mxu0 %v642
    %v710 = vpop.f32.mrb[0].mxu0
    %v711 = vadd.f32 0.0, %v710
    %v712 = vpop.f32.mrb[0].mxu0
    %713 = vdwg.mxu0
    %v715 = vrot.slane %v711, 4
    %v717 = vadd.f32 %v134, %v715
    %v718 = vxor.u32 %v717, 2147483648
    %v719 = vmul.f32 %v718, 1.442695
    %v720 = vpow.pop %v719
    %v721 = vadd.f32 %v720, 1.0
    %v722 = vrcp.pop %v721
    %v723 = vmul.f32 1.0, %v722
    %v724 = vtanh.pop %v717
    %v726 = vrot.slane %v486, 6
    %v728 = vmul.f32 %v723, %v726
    %730 = vrot.lane.b32.xlu0 %v724, 64
    %v731 = vpop.permute.xlu0 %730
    %v733 = vmul.f32 %v723, %v731
    %735 = vrot.lane.b32.xlu0 %v733, 32
    %v736 = vpop.permute.xlu0 %735
    %v738 = vadd.f32 %v728, %v736
    %v739 = vtanh.pop %v738
    %741 = vrot.lane.b32.xlu0 %v739, 64
    %v742 = vpop.permute.xlu0 %741
    %v744 = vmul.f32 %v723, %v742
    %746 = vrot.lane.b32.xlu0 %v744, 32
    %v747 = vpop.permute.xlu0 %746
    %v749 = vrot.slane %v599, 4
    %750 = vrot.lane.b32.xlu0 %v749, 64
    %v751 = vpop.permute.xlu0 %750
    %v753 = vsel %vm60, %v747, %v751
    %v755 = vrot.slane %v753, 4
    %v756 = vsel %vm252, %v755, 0
    %758 = vmatprep.subr.mxu0 0.0
    %759 = vmatpush1.msra.mxu0 %v43
    %760 = vmatprep.subr.mxu0 0.0
    %761 = vmatpush1.msra.mxu0 %v44
    %762 = vmatprep.subr.mxu0 0.0
    %763 = vmatpush1.msra.mxu0 %v45
    %764 = vmatprep.subr.mxu0 0.0
    %765 = vmatpush1.msra.mxu0 %v46
    %766 = vmatprep.subr.mxu0 0.0
    %767 = vmatpush1.msra.mxu0 %v47
    %768 = vmatprep.subr.mxu0 0.0
    %769 = vmatpush1.msra.mxu0 %v48
    %770 = vmatprep.subr.mxu0 0.0
    %771 = vmatpush1.msra.mxu0 %v49
    %772 = vmatprep.subr.mxu0 0.0
    %773 = vmatpush1.msra.mxu0 %v50
    %774 = vmatprep.subr.mxu0 0.0
    %775 = vmatpush1.msra.mxu0 0.0
    %776 = vmatprep.subr.mxu0 0.0
    %777 = vmatpush1.msra.mxu0 0.0
    %778 = vmatprep.subr.mxu0 0.0
    %779 = vmatpush1.msra.mxu0 0.0
    %780 = vmatprep.subr.mxu0 0.0
    %781 = vmatpush1.msra.mxu0 0.0
    %782 = vmatprep.subr.mxu0 0.0
    %783 = vmatpush1.msra.mxu0 0.0
    %784 = vmatprep.subr.mxu0 0.0
    %785 = vmatpush1.msra.mxu0 0.0
    %786 = vmatprep.subr.mxu0 0.0
    %787 = vmatpush1.msra.mxu0 0.0
    %788 = vmatprep.subr.mxu0 0.0
    %789 = vmatpush1.msra.mxu0 0.0
    %790 = vmatprep.subr.mxu0 0.0
    %791 = vmatpush1.msra.mxu0 0.0
    %792 = vmatprep.subr.mxu0 0.0
    %793 = vmatpush1.msra.mxu0 0.0
    %794 = vmatprep.subr.mxu0 0.0
    %795 = vmatpush1.msra.mxu0 0.0
    %796 = vmatprep.subr.mxu0 0.0
    %797 = vmatpush1.msra.mxu0 0.0
    %798 = vmatprep.subr.mxu0 0.0
    %799 = vmatpush1.msra.mxu0 0.0
    %800 = vmatprep.subr.mxu0 0.0
    %801 = vmatpush1.msra.mxu0 0.0
    %802 = vmatprep.subr.mxu0 0.0
    %803 = vmatpush1.msra.mxu0 0.0
    %804 = vmatprep.subr.mxu0 0.0
    %805 = vmatpush1.msra.mxu0 0.0
    %806 = vmatprep.subr.mxu0 0.0
    %807 = vmatpush1.msra.mxu0 0.0
    %808 = vmatprep.subr.mxu0 0.0
    %809 = vmatpush1.msra.mxu0 0.0
    %810 = vmatprep.subr.mxu0 0.0
    %811 = vmatpush1.msra.mxu0 0.0
    %812 = vmatprep.subr.mxu0 0.0
    %813 = vmatpush1.msra.mxu0 0.0
    %814 = vmatprep.subr.mxu0 0.0
    %815 = vmatpush1.msra.mxu0 0.0
    %816 = vmatprep.subr.mxu0 0.0
    %817 = vmatpush1.msra.mxu0 0.0
    %818 = vmatprep.subr.mxu0 0.0
    %819 = vmatpush1.msra.mxu0 0.0
    %820 = vmatprep.subr.mxu0 0.0
    %821 = vmatpush1.msra.mxu0 0.0
    %822 = vmatprep.mubr.f32.mxu0 0.0
    %823 = vmatmul.mubr.f32.gmra.mrb[0].mxu0 %v756
    %v824 = vpop.f32.mrb[0].mxu0
    %v825 = vadd.f32 %v147, %v824
    %v826 = vpop.f32.mrb[0].mxu0
    %827 = vdwg.mxu0
    %v828 = vxor.u32 %v825, 2147483648
    %v829 = vmul.f32 %v828, 1.442695
    %v830 = vpow.pop %v829
    %v831 = vadd.f32 %v830, 1.0
    %v832 = vrcp.pop %v831
    %v833 = vmul.f32 1.0, %v832
    %v834 = vtanh.pop %v825
    %v835 = vmul.f32 %v833, %v593
    %837 = vrot.lane.b32.xlu0 %v834, 64
    %v838 = vpop.permute.xlu0 %837
    %v840 = vmul.f32 %v833, %v838
    %842 = vrot.lane.b32.xlu0 %v840, 32
    %v843 = vpop.permute.xlu0 %842
    %v845 = vadd.f32 %v835, %v843
    %v846 = vtanh.pop %v845
    %848 = vrot.lane.b32.xlu0 %v846, 64
    %v849 = vpop.permute.xlu0 %848
    %v851 = vmul.f32 %v833, %v849
    %v854 = vunpack.c.l.s4 1966171168
    %v855 = vunpack.c.0.s8 %v854
    %v856 = vlaneseq
    %v857 = vshrl.u32 %v856, 7
    %v858 = vsub.s32 %v855, %v857
    %v859 = vrot.slane %v851, %v858
    %v860 = vcombine.high %v859, %v859
    %v862 = vunpack.c.l.s4 1966171168
    %v863 = vunpack.c.0.s8 %v862
    %v864 = vlaneseq
    %v865 = vshrl.u32 %v864, 7
    %v866 = vsub.s32 %v863, %v865
    %v867 = vrot.slane %v859, %v866
    %v869 = vunpack.c.l.s4 1966171168
    %v870 = vunpack.c.0.s8 %v869
    %v871 = vlaneseq
    %v872 = vshrl.u32 %v871, 7
    %v873 = vsub.s32 %v870, %v872
    %v874 = vrot.slane %v860, %v873
    %v875 = vlaneseq
    %v876 = vshrl.u32 %v875, 7
    %v877 = vsub.s32 0, %v876
    %v878 = vrot.slane %v867, %v877
    %v879 = vlaneseq
    %v880 = vshrl.u32 %v879, 7
    %v881 = vsub.s32 0, %v880
    %v882 = vrot.slane %v874, %v881
    %883 = vrot.lane.b32.xlu0 %v878, 32
    %v884 = vpop.permute.xlu0 %883
    %885 = vrot.lane.b32.xlu0 %v882, 32
    %v886 = vpop.permute.xlu0 %885
    %889 = vst.msk [vmem:[#allocation2 + $0x2] sm:$0x1] %vm387, %v884
    %890 = vst.msk [vmem:[#allocation2 + $0xa] sm:$0x1] %vm387, %v886
    %v891 = vrot.slane %v744, 4
    %892 = vrot.lane.b32.xlu0 %v891, 32
    %v893 = vpop.permute.xlu0 %892
    %v894 = vsel %vm60, %v893, 0
    %896 = vmatprep.subr.mxu0 0.0
    %897 = vmatpush1.msra.mxu0 %v39
    %898 = vmatprep.subr.mxu0 0.0
    %899 = vmatpush1.msra.mxu0 %v40
    %900 = vmatprep.subr.mxu0 0.0
    %901 = vmatpush1.msra.mxu0 %v41
    %902 = vmatprep.subr.mxu0 0.0
    %903 = vmatpush1.msra.mxu0 %v42
    %904 = vmatprep.subr.mxu0 0.0
    %905 = vmatpush1.msra.mxu0 0.0
    %906 = vmatprep.subr.mxu0 0.0
    %907 = vmatpush1.msra.mxu0 0.0
    %908 = vmatprep.subr.mxu0 0.0
    %909 = vmatpush1.msra.mxu0 0.0
    %910 = vmatprep.subr.mxu0 0.0
    %911 = vmatpush1.msra.mxu0 0.0
    %912 = vmatprep.subr.mxu0 0.0
    %913 = vmatpush1.msra.mxu0 0.0
    %914 = vmatprep.subr.mxu0 0.0
    %915 = vmatpush1.msra.mxu0 0.0
    %916 = vmatprep.subr.mxu0 0.0
    %917 = vmatpush1.msra.mxu0 0.0
    %918 = vmatprep.subr.mxu0 0.0
    %919 = vmatpush1.msra.mxu0 0.0
    %920 = vmatprep.subr.mxu0 0.0
    %921 = vmatpush1.msra.mxu0 0.0
    %922 = vmatprep.subr.mxu0 0.0
    %923 = vmatpush1.msra.mxu0 0.0
    %924 = vmatprep.subr.mxu0 0.0
    %925 = vmatpush1.msra.mxu0 0.0
    %926 = vmatprep.subr.mxu0 0.0
    %927 = vmatpush1.msra.mxu0 0.0
    %928 = vmatprep.subr.mxu0 0.0
    %929 = vmatpush1.msra.mxu0 0.0
    %930 = vmatprep.subr.mxu0 0.0
    %931 = vmatpush1.msra.mxu0 0.0
    %932 = vmatprep.subr.mxu0 0.0
    %933 = vmatpush1.msra.mxu0 0.0
    %934 = vmatprep.subr.mxu0 0.0
    %935 = vmatpush1.msra.mxu0 0.0
    %936 = vmatprep.subr.mxu0 0.0
    %937 = vmatpush1.msra.mxu0 0.0
    %938 = vmatprep.subr.mxu0 0.0
    %939 = vmatpush1.msra.mxu0 0.0
    %940 = vmatprep.subr.mxu0 0.0
    %941 = vmatpush1.msra.mxu0 0.0
    %942 = vmatprep.subr.mxu0 0.0
    %943 = vmatpush1.msra.mxu0 0.0
    %944 = vmatprep.subr.mxu0 0.0
    %945 = vmatpush1.msra.mxu0 0.0
    %946 = vmatprep.subr.mxu0 0.0
    %947 = vmatpush1.msra.mxu0 0.0
    %948 = vmatprep.subr.mxu0 0.0
    %949 = vmatpush1.msra.mxu0 0.0
    %950 = vmatprep.subr.mxu0 0.0
    %951 = vmatpush1.msra.mxu0 0.0
    %952 = vmatprep.subr.mxu0 0.0
    %953 = vmatpush1.msra.mxu0 0.0
    %954 = vmatprep.subr.mxu0 0.0
    %955 = vmatpush1.msra.mxu0 0.0
    %956 = vmatprep.subr.mxu0 0.0
    %957 = vmatpush1.msra.mxu0 0.0
    %958 = vmatprep.subr.mxu0 0.0
    %959 = vmatpush1.msra.mxu0 0.0
    %960 = vmatprep.mubr.f32.mxu0 0.0
    %961 = vmatmul.mubr.f32.gmra.mrb[0].mxu0 %v894
    %v962 = vpop.f32.mrb[0].mxu0
    %v963 = vadd.f32 0.0, %v962
    %v964 = vpop.f32.mrb[0].mxu0
    %965 = vdwg.mxu0
    %v967 = vrot.slane %v963, 2
    %v969 = vadd.f32 %v134, %v967
    %v970 = vxor.u32 %v969, 2147483648
    %v971 = vmul.f32 %v970, 1.442695
    %v972 = vpow.pop %v971
    %v973 = vadd.f32 %v972, 1.0
    %v974 = vrcp.pop %v973
    %v975 = vmul.f32 1.0, %v974
    %v976 = vtanh.pop %v969
    %v978 = vrot.slane %v738, 6
    %v980 = vmul.f32 %v975, %v978
    %982 = vrot.lane.b32.xlu0 %v976, 64
    %v983 = vpop.permute.xlu0 %982
    %v985 = vmul.f32 %v975, %v983
    %987 = vrot.lane.b32.xlu0 %v985, 32
    %v988 = vpop.permute.xlu0 %987
    %v990 = vadd.f32 %v980, %v988
    %v991 = vtanh.pop %v990
    %993 = vrot.lane.b32.xlu0 %v991, 64
    %v994 = vpop.permute.xlu0 %993
    %v996 = vmul.f32 %v975, %v994
    %998 = vrot.lane.b32.xlu0 %v996, 32
    %v999 = vpop.permute.xlu0 %998
    %v1001 = vrot.slane %v851, 2
    %1002 = vrot.lane.b32.xlu0 %v1001, 64
    %v1003 = vpop.permute.xlu0 %1002
    %v1005 = vsel %vm60, %v999, %v1003
    %v1007 = vrot.slane %v1005, 6
    %v1008 = vsel %vm252, %v1007, 0
    %1010 = vmatprep.subr.mxu0 0.0
    %1011 = vmatpush1.msra.mxu0 %v43
    %1012 = vmatprep.subr.mxu0 0.0
    %1013 = vmatpush1.msra.mxu0 %v44
    %1014 = vmatprep.subr.mxu0 0.0
    %1015 = vmatpush1.msra.mxu0 %v45
    %1016 = vmatprep.subr.mxu0 0.0
    %1017 = vmatpush1.msra.mxu0 %v46
    %1018 = vmatprep.subr.mxu0 0.0
    %1019 = vmatpush1.msra.mxu0 %v47
    %1020 = vmatprep.subr.mxu0 0.0
    %1021 = vmatpush1.msra.mxu0 %v48
    %1022 = vmatprep.subr.mxu0 0.0
    %1023 = vmatpush1.msra.mxu0 %v49
    %1024 = vmatprep.subr.mxu0 0.0
    %1025 = vmatpush1.msra.mxu0 %v50
    %1026 = vmatprep.subr.mxu0 0.0
    %1027 = vmatpush1.msra.mxu0 0.0
    %1028 = vmatprep.subr.mxu0 0.0
    %1029 = vmatpush1.msra.mxu0 0.0
    %1030 = vmatprep.subr.mxu0 0.0
    %1031 = vmatpush1.msra.mxu0 0.0
    %1032 = vmatprep.subr.mxu0 0.0
    %1033 = vmatpush1.msra.mxu0 0.0
    %1034 = vmatprep.subr.mxu0 0.0
    %1035 = vmatpush1.msra.mxu0 0.0
    %1036 = vmatprep.subr.mxu0 0.0
    %1037 = vmatpush1.msra.mxu0 0.0
    %1038 = vmatprep.subr.mxu0 0.0
    %1039 = vmatpush1.msra.mxu0 0.0
    %1040 = vmatprep.subr.mxu0 0.0
    %1041 = vmatpush1.msra.mxu0 0.0
    %1042 = vmatprep.subr.mxu0 0.0
    %1043 = vmatpush1.msra.mxu0 0.0
    %1044 = vmatprep.subr.mxu0 0.0
    %1045 = vmatpush1.msra.mxu0 0.0
    %1046 = vmatprep.subr.mxu0 0.0
    %1047 = vmatpush1.msra.mxu0 0.0
    %1048 = vmatprep.subr.mxu0 0.0
    %1049 = vmatpush1.msra.mxu0 0.0
    %1050 = vmatprep.subr.mxu0 0.0
    %1051 = vmatpush1.msra.mxu0 0.0
    %1052 = vmatprep.subr.mxu0 0.0
    %1053 = vmatpush1.msra.mxu0 0.0
    %1054 = vmatprep.subr.mxu0 0.0
    %1055 = vmatpush1.msra.mxu0 0.0
    %1056 = vmatprep.subr.mxu0 0.0
    %1057 = vmatpush1.msra.mxu0 0.0
    %1058 = vmatprep.subr.mxu0 0.0
    %1059 = vmatpush1.msra.mxu0 0.0
    %1060 = vmatprep.subr.mxu0 0.0
    %1061 = vmatpush1.msra.mxu0 0.0
    %1062 = vmatprep.subr.mxu0 0.0
    %1063 = vmatpush1.msra.mxu0 0.0
    %1064 = vmatprep.subr.mxu0 0.0
    %1065 = vmatpush1.msra.mxu0 0.0
    %1066 = vmatprep.subr.mxu0 0.0
    %1067 = vmatpush1.msra.mxu0 0.0
    %1068 = vmatprep.subr.mxu0 0.0
    %1069 = vmatpush1.msra.mxu0 0.0
    %1070 = vmatprep.subr.mxu0 0.0
    %1071 = vmatpush1.msra.mxu0 0.0
    %1072 = vmatprep.subr.mxu0 0.0
    %1073 = vmatpush1.msra.mxu0 0.0
    %1074 = vmatprep.mubr.f32.mxu0 0.0
    %1075 = vmatmul.mubr.f32.gmra.mrb[0].mxu0 %v1008
    %v1076 = vpop.f32.mrb[0].mxu0
    %v1077 = vadd.f32 %v147, %v1076
    %v1078 = vpop.f32.mrb[0].mxu0
    %1079 = vdwg.mxu0
    %v1080 = vxor.u32 %v1077, 2147483648
    %v1081 = vmul.f32 %v1080, 1.442695
    %v1082 = vpow.pop %v1081
    %v1083 = vadd.f32 %v1082, 1.0
    %v1084 = vrcp.pop %v1083
    %v1085 = vmul.f32 1.0, %v1084
    %v1086 = vtanh.pop %v1077
    %v1087 = vmul.f32 %v1085, %v845
    %1089 = vrot.lane.b32.xlu0 %v1086, 64
    %v1090 = vpop.permute.xlu0 %1089
    %v1092 = vmul.f32 %v1085, %v1090
    %1094 = vrot.lane.b32.xlu0 %v1092, 32
    %v1095 = vpop.permute.xlu0 %1094
    %v1097 = vadd.f32 %v1087, %v1095
    %v1098 = vtanh.pop %v1097
    %1100 = vrot.lane.b32.xlu0 %v1098, 64
    %v1101 = vpop.permute.xlu0 %1100
    %v1103 = vmul.f32 %v1085, %v1101
    %v1106 = vunpack.c.l.s4 1966171168
    %v1107 = vunpack.c.0.s8 %v1106
    %v1108 = vlaneseq
    %v1109 = vshrl.u32 %v1108, 7
    %v1110 = vsub.s32 %v1107, %v1109
    %v1111 = vrot.slane %v1103, %v1110
    %v1112 = vcombine.high %v1111, %v1111
    %v1114 = vunpack.c.l.s4 1966171168
    %v1115 = vunpack.c.0.s8 %v1114
    %v1116 = vlaneseq
    %v1117 = vshrl.u32 %v1116, 7
    %v1118 = vsub.s32 %v1115, %v1117
    %v1119 = vrot.slane %v1111, %v1118
    %v1121 = vunpack.c.l.s4 1966171168
    %v1122 = vunpack.c.0.s8 %v1121
    %v1123 = vlaneseq
    %v1124 = vshrl.u32 %v1123, 7
    %v1125 = vsub.s32 %v1122, %v1124
    %v1126 = vrot.slane %v1112, %v1125
    %v1127 = vlaneseq
    %v1128 = vshrl.u32 %v1127, 7
    %v1129 = vsub.s32 0, %v1128
    %v1130 = vrot.slane %v1119, %v1129
    %v1131 = vlaneseq
    %v1132 = vshrl.u32 %v1131, 7
    %v1133 = vsub.s32 0, %v1132
    %v1134 = vrot.slane %v1126, %v1133
    %1135 = vrot.lane.b32.xlu0 %v1130, 32
    %v1136 = vpop.permute.xlu0 %1135
    %1137 = vrot.lane.b32.xlu0 %v1134, 32
    %v1138 = vpop.permute.xlu0 %1137
    %1141 = vst.msk [vmem:[#allocation2 + $0x3] sm:$0x1] %vm387, %v1136
    %1142 = vst.msk [vmem:[#allocation2 + $0xb] sm:$0x1] %vm387, %v1138
    %v1143 = vrot.slane %v996, 6
    %1144 = vrot.lane.b32.xlu0 %v1143, 32
    %v1145 = vpop.permute.xlu0 %1144
    %v1146 = vsel %vm60, %v1145, 0
    %1148 = vmatprep.subr.mxu0 0.0
    %1149 = vmatpush1.msra.mxu0 %v39
    %1150 = vmatprep.subr.mxu0 0.0
    %1151 = vmatpush1.msra.mxu0 %v40
    %1152 = vmatprep.subr.mxu0 0.0
    %1153 = vmatpush1.msra.mxu0 %v41
    %1154 = vmatprep.subr.mxu0 0.0
    %1155 = vmatpush1.msra.mxu0 %v42
    %1156 = vmatprep.subr.mxu0 0.0
    %1157 = vmatpush1.msra.mxu0 0.0
    %1158 = vmatprep.subr.mxu0 0.0
    %1159 = vmatpush1.msra.mxu0 0.0
    %1160 = vmatprep.subr.mxu0 0.0
    %1161 = vmatpush1.msra.mxu0 0.0
    %1162 = vmatprep.subr.mxu0 0.0
    %1163 = vmatpush1.msra.mxu0 0.0
    %1164 = vmatprep.subr.mxu0 0.0
    %1165 = vmatpush1.msra.mxu0 0.0
    %1166 = vmatprep.subr.mxu0 0.0
    %1167 = vmatpush1.msra.mxu0 0.0
    %1168 = vmatprep.subr.mxu0 0.0
    %1169 = vmatpush1.msra.mxu0 0.0
    %1170 = vmatprep.subr.mxu0 0.0
    %1171 = vmatpush1.msra.mxu0 0.0
    %1172 = vmatprep.subr.mxu0 0.0
    %1173 = vmatpush1.msra.mxu0 0.0
    %1174 = vmatprep.subr.mxu0 0.0
    %1175 = vmatpush1.msra.mxu0 0.0
    %1176 = vmatprep.subr.mxu0 0.0
    %1177 = vmatpush1.msra.mxu0 0.0
    %1178 = vmatprep.subr.mxu0 0.0
    %1179 = vmatpush1.msra.mxu0 0.0
    %1180 = vmatprep.subr.mxu0 0.0
    %1181 = vmatpush1.msra.mxu0 0.0
    %1182 = vmatprep.subr.mxu0 0.0
    %1183 = vmatpush1.msra.mxu0 0.0
    %1184 = vmatprep.subr.mxu0 0.0
    %1185 = vmatpush1.msra.mxu0 0.0
    %1186 = vmatprep.subr.mxu0 0.0
    %1187 = vmatpush1.msra.mxu0 0.0
    %1188 = vmatprep.subr.mxu0 0.0
    %1189 = vmatpush1.msra.mxu0 0.0
    %1190 = vmatprep.subr.mxu0 0.0
    %1191 = vmatpush1.msra.mxu0 0.0
    %1192 = vmatprep.subr.mxu0 0.0
    %1193 = vmatpush1.msra.mxu0 0.0
    %1194 = vmatprep.subr.mxu0 0.0
    %1195 = vmatpush1.msra.mxu0 0.0
    %1196 = vmatprep.subr.mxu0 0.0
    %1197 = vmatpush1.msra.mxu0 0.0
    %1198 = vmatprep.subr.mxu0 0.0
    %1199 = vmatpush1.msra.mxu0 0.0
    %1200 = vmatprep.subr.mxu0 0.0
    %1201 = vmatpush1.msra.mxu0 0.0
    %1202 = vmatprep.subr.mxu0 0.0
    %1203 = vmatpush1.msra.mxu0 0.0
    %1204 = vmatprep.subr.mxu0 0.0
    %1205 = vmatpush1.msra.mxu0 0.0
    %1206 = vmatprep.subr.mxu0 0.0
    %1207 = vmatpush1.msra.mxu0 0.0
    %1208 = vmatprep.subr.mxu0 0.0
    %1209 = vmatpush1.msra.mxu0 0.0
    %1210 = vmatprep.subr.mxu0 0.0
    %1211 = vmatpush1.msra.mxu0 0.0
    %1212 = vmatprep.mubr.f32.mxu0 0.0
    %1213 = vmatmul.mubr.f32.gmra.mrb[0].mxu0 %v1146
    %v1214 = vpop.f32.mrb[0].mxu0
    %v1215 = vadd.f32 0.0, %v1214
    %v1216 = vpop.f32.mrb[0].mxu0
    %1217 = vdwg.mxu0
    %v1218 = vadd.f32 %v139, %v1215
    %v1219 = vxor.u32 %v1218, 2147483648
    %v1220 = vmul.f32 %v1219, 1.442695
    %v1221 = vpow.pop %v1220
    %v1222 = vadd.f32 %v1221, 1.0
    %v1223 = vrcp.pop %v1222
    %v1224 = vmul.f32 1.0, %v1223
    %v1225 = vtanh.pop %v1218
    %v1227 = vrot.slane %v990, 6
    %v1229 = vmul.f32 %v1224, %v1227
    %1231 = vrot.lane.b32.xlu0 %v1225, 64
    %v1232 = vpop.permute.xlu0 %1231
    %v1234 = vmul.f32 %v1224, %v1232
    %1236 = vrot.lane.b32.xlu0 %v1234, 32
    %v1237 = vpop.permute.xlu0 %1236
    %v1239 = vadd.f32 %v1229, %v1237
    %v1240 = vtanh.pop %v1239
    %1242 = vrot.lane.b32.xlu0 %v1240, 64
    %v1243 = vpop.permute.xlu0 %1242
    %v1245 = vmul.f32 %v1224, %v1243
    %1247 = vrot.lane.b32.xlu0 %v1245, 32
    %v1248 = vpop.permute.xlu0 %1247
    %1250 = vrot.lane.b32.xlu0 %v1103, 64
    %v1251 = vpop.permute.xlu0 %1250
    %v1253 = vsel %vm60, %v1248, %v1251
    %v1255 = vsel %vm252, %v1253, 0
    %1257 = vmatprep.subr.mxu0 0.0
    %1258 = vmatpush1.msra.mxu0 %v43
    %1259 = vmatprep.subr.mxu0 0.0
    %1260 = vmatpush1.msra.mxu0 %v44
    %1261 = vmatprep.subr.mxu0 0.0
    %1262 = vmatpush1.msra.mxu0 %v45
    %1263 = vmatprep.subr.mxu0 0.0
    %1264 = vmatpush1.msra.mxu0 %v46
    %1265 = vmatprep.subr.mxu0 0.0
    %1266 = vmatpush1.msra.mxu0 %v47
    %1267 = vmatprep.subr.mxu0 0.0
    %1268 = vmatpush1.msra.mxu0 %v48
    %1269 = vmatprep.subr.mxu0 0.0
    %1270 = vmatpush1.msra.mxu0 %v49
    %1271 = vmatprep.subr.mxu0 0.0
    %1272 = vmatpush1.msra.mxu0 %v50
    %1273 = vmatprep.subr.mxu0 0.0
    %1274 = vmatpush1.msra.mxu0 0.0
    %1275 = vmatprep.subr.mxu0 0.0
    %1276 = vmatpush1.msra.mxu0 0.0
    %1277 = vmatprep.subr.mxu0 0.0
    %1278 = vmatpush1.msra.mxu0 0.0
    %1279 = vmatprep.subr.mxu0 0.0
    %1280 = vmatpush1.msra.mxu0 0.0
    %1281 = vmatprep.subr.mxu0 0.0
    %1282 = vmatpush1.msra.mxu0 0.0
    %1283 = vmatprep.subr.mxu0 0.0
    %1284 = vmatpush1.msra.mxu0 0.0
    %1285 = vmatprep.subr.mxu0 0.0
    %1286 = vmatpush1.msra.mxu0 0.0
    %1287 = vmatprep.subr.mxu0 0.0
    %1288 = vmatpush1.msra.mxu0 0.0
    %1289 = vmatprep.subr.mxu0 0.0
    %1290 = vmatpush1.msra.mxu0 0.0
    %1291 = vmatprep.subr.mxu0 0.0
    %1292 = vmatpush1.msra.mxu0 0.0
    %1293 = vmatprep.subr.mxu0 0.0
    %1294 = vmatpush1.msra.mxu0 0.0
    %1295 = vmatprep.subr.mxu0 0.0
    %1296 = vmatpush1.msra.mxu0 0.0
    %1297 = vmatprep.subr.mxu0 0.0
    %1298 = vmatpush1.msra.mxu0 0.0
    %1299 = vmatprep.subr.mxu0 0.0
    %1300 = vmatpush1.msra.mxu0 0.0
    %1301 = vmatprep.subr.mxu0 0.0
    %1302 = vmatpush1.msra.mxu0 0.0
    %1303 = vmatprep.subr.mxu0 0.0
    %1304 = vmatpush1.msra.mxu0 0.0
    %1305 = vmatprep.subr.mxu0 0.0
    %1306 = vmatpush1.msra.mxu0 0.0
    %1307 = vmatprep.subr.mxu0 0.0
    %1308 = vmatpush1.msra.mxu0 0.0
    %1309 = vmatprep.subr.mxu0 0.0
    %1310 = vmatpush1.msra.mxu0 0.0
    %1311 = vmatprep.subr.mxu0 0.0
    %1312 = vmatpush1.msra.mxu0 0.0
    %1313 = vmatprep.subr.mxu0 0.0
    %1314 = vmatpush1.msra.mxu0 0.0
    %1315 = vmatprep.subr.mxu0 0.0
    %1316 = vmatpush1.msra.mxu0 0.0
    %1317 = vmatprep.subr.mxu0 0.0
    %1318 = vmatpush1.msra.mxu0 0.0
    %1319 = vmatprep.subr.mxu0 0.0
    %1320 = vmatpush1.msra.mxu0 0.0
    %1321 = vmatprep.mubr.f32.mxu0 0.0
    %1322 = vmatmul.mubr.f32.gmra.mrb[0].mxu0 %v1255
    %v1323 = vpop.f32.mrb[0].mxu0
    %v1324 = vadd.f32 %v147, %v1323
    %v1325 = vpop.f32.mrb[0].mxu0
    %1326 = vdwg.mxu0
    %v1327 = vxor.u32 %v1324, 2147483648
    %v1328 = vmul.f32 %v1327, 1.442695
    %v1329 = vpow.pop %v1328
    %v1330 = vadd.f32 %v1329, 1.0
    %v1331 = vrcp.pop %v1330
    %v1332 = vmul.f32 1.0, %v1331
    %v1333 = vtanh.pop %v1324
    %v1334 = vmul.f32 %v1332, %v1097
    %1336 = vrot.lane.b32.xlu0 %v1333, 64
    %v1337 = vpop.permute.xlu0 %1336
    %v1339 = vmul.f32 %v1332, %v1337
    %1341 = vrot.lane.b32.xlu0 %v1339, 32
    %v1342 = vpop.permute.xlu0 %1341
    %v1344 = vadd.f32 %v1334, %v1342
    %v1345 = vtanh.pop %v1344
    %1347 = vrot.lane.b32.xlu0 %v1345, 64
    %v1348 = vpop.permute.xlu0 %1347
    %v1350 = vmul.f32 %v1332, %v1348
    %v1353 = vunpack.c.l.s4 1966171168
    %v1354 = vunpack.c.0.s8 %v1353
    %v1355 = vlaneseq
    %v1356 = vshrl.u32 %v1355, 7
    %v1357 = vsub.s32 %v1354, %v1356
    %v1358 = vrot.slane %v1350, %v1357
    %v1359 = vcombine.high %v1358, %v1358
    %v1361 = vunpack.c.l.s4 1966171168
    %v1362 = vunpack.c.0.s8 %v1361
    %v1363 = vlaneseq
    %v1364 = vshrl.u32 %v1363, 7
    %v1365 = vsub.s32 %v1362, %v1364
    %v1366 = vrot.slane %v1358, %v1365
    %v1368 = vunpack.c.l.s4 1966171168
    %v1369 = vunpack.c.0.s8 %v1368
    %v1370 = vlaneseq
    %v1371 = vshrl.u32 %v1370, 7
    %v1372 = vsub.s32 %v1369, %v1371
    %v1373 = vrot.slane %v1359, %v1372
    %v1374 = vlaneseq
    %v1375 = vshrl.u32 %v1374, 7
    %v1376 = vsub.s32 0, %v1375
    %v1377 = vrot.slane %v1366, %v1376
    %v1378 = vlaneseq
    %v1379 = vshrl.u32 %v1378, 7
    %v1380 = vsub.s32 0, %v1379
    %v1381 = vrot.slane %v1373, %v1380
    %1382 = vrot.lane.b32.xlu0 %v1377, 32
    %v1383 = vpop.permute.xlu0 %1382
    %1384 = vrot.lane.b32.xlu0 %v1381, 32
    %v1385 = vpop.permute.xlu0 %1384
    %1388 = vst.msk [vmem:[#allocation2 + $0x4] sm:$0x1] %vm387, %v1383
    %1389 = vst.msk [vmem:[#allocation2 + $0xc] sm:$0x1] %vm387, %v1385
    %v1390 = vsel %vm60, %v1248, 0
    %1392 = vmatprep.subr.mxu0 0.0
    %1393 = vmatpush1.msra.mxu0 %v39
    %1394 = vmatprep.subr.mxu0 0.0
    %1395 = vmatpush1.msra.mxu0 %v40
    %1396 = vmatprep.subr.mxu0 0.0
    %1397 = vmatpush1.msra.mxu0 %v41
    %1398 = vmatprep.subr.mxu0 0.0
    %1399 = vmatpush1.msra.mxu0 %v42
    %1400 = vmatprep.subr.mxu0 0.0
    %1401 = vmatpush1.msra.mxu0 0.0
    %1402 = vmatprep.subr.mxu0 0.0
    %1403 = vmatpush1.msra.mxu0 0.0
    %1404 = vmatprep.subr.mxu0 0.0
    %1405 = vmatpush1.msra.mxu0 0.0
    %1406 = vmatprep.subr.mxu0 0.0
    %1407 = vmatpush1.msra.mxu0 0.0
    %1408 = vmatprep.subr.mxu0 0.0
    %1409 = vmatpush1.msra.mxu0 0.0
    %1410 = vmatprep.subr.mxu0 0.0
    %1411 = vmatpush1.msra.mxu0 0.0
    %1412 = vmatprep.subr.mxu0 0.0
    %1413 = vmatpush1.msra.mxu0 0.0
    %1414 = vmatprep.subr.mxu0 0.0
    %1415 = vmatpush1.msra.mxu0 0.0
    %1416 = vmatprep.subr.mxu0 0.0
    %1417 = vmatpush1.msra.mxu0 0.0
    %1418 = vmatprep.subr.mxu0 0.0
    %1419 = vmatpush1.msra.mxu0 0.0
    %1420 = vmatprep.subr.mxu0 0.0
    %1421 = vmatpush1.msra.mxu0 0.0
    %1422 = vmatprep.subr.mxu0 0.0
    %1423 = vmatpush1.msra.mxu0 0.0
    %1424 = vmatprep.subr.mxu0 0.0
    %1425 = vmatpush1.msra.mxu0 0.0
    %1426 = vmatprep.subr.mxu0 0.0
    %1427 = vmatpush1.msra.mxu0 0.0
    %1428 = vmatprep.subr.mxu0 0.0
    %1429 = vmatpush1.msra.mxu0 0.0
    %1430 = vmatprep.subr.mxu0 0.0
    %1431 = vmatpush1.msra.mxu0 0.0
    %1432 = vmatprep.subr.mxu0 0.0
    %1433 = vmatpush1.msra.mxu0 0.0
    %1434 = vmatprep.subr.mxu0 0.0
    %1435 = vmatpush1.msra.mxu0 0.0
    %1436 = vmatprep.subr.mxu0 0.0
    %1437 = vmatpush1.msra.mxu0 0.0
    %1438 = vmatprep.subr.mxu0 0.0
    %1439 = vmatpush1.msra.mxu0 0.0
    %1440 = vmatprep.subr.mxu0 0.0
    %1441 = vmatpush1.msra.mxu0 0.0
    %1442 = vmatprep.subr.mxu0 0.0
    %1443 = vmatpush1.msra.mxu0 0.0
    %1444 = vmatprep.subr.mxu0 0.0
    %1445 = vmatpush1.msra.mxu0 0.0
    %1446 = vmatprep.subr.mxu0 0.0
    %1447 = vmatpush1.msra.mxu0 0.0
    %1448 = vmatprep.subr.mxu0 0.0
    %1449 = vmatpush1.msra.mxu0 0.0
    %1450 = vmatprep.subr.mxu0 0.0
    %1451 = vmatpush1.msra.mxu0 0.0
    %1452 = vmatprep.subr.mxu0 0.0
    %1453 = vmatpush1.msra.mxu0 0.0
    %1454 = vmatprep.subr.mxu0 0.0
    %1455 = vmatpush1.msra.mxu0 0.0
    %1456 = vmatprep.mubr.f32.mxu0 0.0
    %1457 = vmatmul.mubr.f32.gmra.mrb[0].mxu0 %v1390
    %v1458 = vpop.f32.mrb[0].mxu0
    %v1459 = vadd.f32 0.0, %v1458
    %v1460 = vpop.f32.mrb[0].mxu0
    %1461 = vdwg.mxu0
    %v1463 = vrot.slane %v1459, 6
    %v1465 = vadd.f32 %v139, %v1463
    %v1466 = vxor.u32 %v1465, 2147483648
    %v1467 = vmul.f32 %v1466, 1.442695
    %v1468 = vpow.pop %v1467
    %v1469 = vadd.f32 %v1468, 1.0
    %v1470 = vrcp.pop %v1469
    %v1471 = vmul.f32 1.0, %v1470
    %v1472 = vtanh.pop %v1465
    %v1474 = vrot.slane %v1239, 6
    %v1476 = vmul.f32 %v1471, %v1474
    %1478 = vrot.lane.b32.xlu0 %v1472, 64
    %v1479 = vpop.permute.xlu0 %1478
    %v1481 = vmul.f32 %v1471, %v1479
    %1483 = vrot.lane.b32.xlu0 %v1481, 32
    %v1484 = vpop.permute.xlu0 %1483
    %v1486 = vadd.f32 %v1476, %v1484
    %v1487 = vtanh.pop %v1486
    %1489 = vrot.lane.b32.xlu0 %v1487, 64
    %v1490 = vpop.permute.xlu0 %1489
    %v1492 = vmul.f32 %v1471, %v1490
    %1494 = vrot.lane.b32.xlu0 %v1492, 32
    %v1495 = vpop.permute.xlu0 %1494
    %v1497 = vrot.slane %v1350, 6
    %1498 = vrot.lane.b32.xlu0 %v1497, 64
    %v1499 = vpop.permute.xlu0 %1498
    %v1501 = vsel %vm60, %v1495, %v1499
    %v1503 = vrot.slane %v1501, 2
    %v1504 = vsel %vm252, %v1503, 0
    %1506 = vmatprep.subr.mxu0 0.0
    %1507 = vmatpush1.msra.mxu0 %v43
    %1508 = vmatprep.subr.mxu0 0.0
    %1509 = vmatpush1.msra.mxu0 %v44
    %1510 = vmatprep.subr.mxu0 0.0
    %1511 = vmatpush1.msra.mxu0 %v45
    %1512 = vmatprep.subr.mxu0 0.0
    %1513 = vmatpush1.msra.mxu0 %v46
    %1514 = vmatprep.subr.mxu0 0.0
    %1515 = vmatpush1.msra.mxu0 %v47
    %1516 = vmatprep.subr.mxu0 0.0
    %1517 = vmatpush1.msra.mxu0 %v48
    %1518 = vmatprep.subr.mxu0 0.0
    %1519 = vmatpush1.msra.mxu0 %v49
    %1520 = vmatprep.subr.mxu0 0.0
    %1521 = vmatpush1.msra.mxu0 %v50
    %1522 = vmatprep.subr.mxu0 0.0
    %1523 = vmatpush1.msra.mxu0 0.0
    %1524 = vmatprep.subr.mxu0 0.0
    %1525 = vmatpush1.msra.mxu0 0.0
    %1526 = vmatprep.subr.mxu0 0.0
    %1527 = vmatpush1.msra.mxu0 0.0
    %1528 = vmatprep.subr.mxu0 0.0
    %1529 = vmatpush1.msra.mxu0 0.0
    %1530 = vmatprep.subr.mxu0 0.0
    %1531 = vmatpush1.msra.mxu0 0.0
    %1532 = vmatprep.subr.mxu0 0.0
    %1533 = vmatpush1.msra.mxu0 0.0
    %1534 = vmatprep.subr.mxu0 0.0
    %1535 = vmatpush1.msra.mxu0 0.0
    %1536 = vmatprep.subr.mxu0 0.0
    %1537 = vmatpush1.msra.mxu0 0.0
    %1538 = vmatprep.subr.mxu0 0.0
    %1539 = vmatpush1.msra.mxu0 0.0
    %1540 = vmatprep.subr.mxu0 0.0
    %1541 = vmatpush1.msra.mxu0 0.0
    %1542 = vmatprep.subr.mxu0 0.0
    %1543 = vmatpush1.msra.mxu0 0.0
    %1544 = vmatprep.subr.mxu0 0.0
    %1545 = vmatpush1.msra.mxu0 0.0
    %1546 = vmatprep.subr.mxu0 0.0
    %1547 = vmatpush1.msra.mxu0 0.0
    %1548 = vmatprep.subr.mxu0 0.0
    %1549 = vmatpush1.msra.mxu0 0.0
    %1550 = vmatprep.subr.mxu0 0.0
    %1551 = vmatpush1.msra.mxu0 0.0
    %1552 = vmatprep.subr.mxu0 0.0
    %1553 = vmatpush1.msra.mxu0 0.0
    %1554 = vmatprep.subr.mxu0 0.0
    %1555 = vmatpush1.msra.mxu0 0.0
    %1556 = vmatprep.subr.mxu0 0.0
    %1557 = vmatpush1.msra.mxu0 0.0
    %1558 = vmatprep.subr.mxu0 0.0
    %1559 = vmatpush1.msra.mxu0 0.0
    %1560 = vmatprep.subr.mxu0 0.0
    %1561 = vmatpush1.msra.mxu0 0.0
    %1562 = vmatprep.subr.mxu0 0.0
    %1563 = vmatpush1.msra.mxu0 0.0
    %1564 = vmatprep.subr.mxu0 0.0
    %1565 = vmatpush1.msra.mxu0 0.0
    %1566 = vmatprep.subr.mxu0 0.0
    %1567 = vmatpush1.msra.mxu0 0.0
    %1568 = vmatprep.subr.mxu0 0.0
    %1569 = vmatpush1.msra.mxu0 0.0
    %1570 = vmatprep.mubr.f32.mxu0 0.0
    %1571 = vmatmul.mubr.f32.gmra.mrb[0].mxu0 %v1504
    %v1572 = vpop.f32.mrb[0].mxu0
    %v1573 = vadd.f32 %v147, %v1572
    %v1574 = vpop.f32.mrb[0].mxu0
    %1575 = vdwg.mxu0
    %v1576 = vxor.u32 %v1573, 2147483648
    %v1577 = vmul.f32 %v1576, 1.442695
    %v1578 = vpow.pop %v1577
    %v1579 = vadd.f32 %v1578, 1.0
    %v1580 = vrcp.pop %v1579
    %v1581 = vmul.f32 1.0, %v1580
    %v1582 = vtanh.pop %v1573
    %v1583 = vmul.f32 %v1581, %v1344
    %1585 = vrot.lane.b32.xlu0 %v1582, 64
    %v1586 = vpop.permute.xlu0 %1585
    %v1588 = vmul.f32 %v1581, %v1586
    %1590 = vrot.lane.b32.xlu0 %v1588, 32
    %v1591 = vpop.permute.xlu0 %1590
    %v1593 = vadd.f32 %v1583, %v1591
    %v1594 = vtanh.pop %v1593
    %1596 = vrot.lane.b32.xlu0 %v1594, 64
    %v1597 = vpop.permute.xlu0 %1596
    %v1599 = vmul.f32 %v1581, %v1597
    %v1602 = vunpack.c.l.s4 1966171168
    %v1603 = vunpack.c.0.s8 %v1602
    %v1604 = vlaneseq
    %v1605 = vshrl.u32 %v1604, 7
    %v1606 = vsub.s32 %v1603, %v1605
    %v1607 = vrot.slane %v1599, %v1606
    %v1608 = vcombine.high %v1607, %v1607
    %v1610 = vunpack.c.l.s4 1966171168
    %v1611 = vunpack.c.0.s8 %v1610
    %v1612 = vlaneseq
    %v1613 = vshrl.u32 %v1612, 7
    %v1614 = vsub.s32 %v1611, %v1613
    %v1615 = vrot.slane %v1607, %v1614
    %v1617 = vunpack.c.l.s4 1966171168
    %v1618 = vunpack.c.0.s8 %v1617
    %v1619 = vlaneseq
    %v1620 = vshrl.u32 %v1619, 7
    %v1621 = vsub.s32 %v1618, %v1620
    %v1622 = vrot.slane %v1608, %v1621
    %v1623 = vlaneseq
    %v1624 = vshrl.u32 %v1623, 7
    %v1625 = vsub.s32 0, %v1624
    %v1626 = vrot.slane %v1615, %v1625
    %v1627 = vlaneseq
    %v1628 = vshrl.u32 %v1627, 7
    %v1629 = vsub.s32 0, %v1628
    %v1630 = vrot.slane %v1622, %v1629
    %1631 = vrot.lane.b32.xlu0 %v1626, 32
    %v1632 = vpop.permute.xlu0 %1631
    %1633 = vrot.lane.b32.xlu0 %v1630, 32
    %v1634 = vpop.permute.xlu0 %1633
    %1637 = vst.msk [vmem:[#allocation2 + $0x5] sm:$0x1] %vm387, %v1632
    %1638 = vst.msk [vmem:[#allocation2 + $0xd] sm:$0x1] %vm387, %v1634
    %v1639 = vrot.slane %v1492, 2
    %1640 = vrot.lane.b32.xlu0 %v1639, 32
    %v1641 = vpop.permute.xlu0 %1640
    %v1642 = vsel %vm60, %v1641, 0
    %1644 = vmatprep.subr.mxu0 0.0
    %1645 = vmatpush1.msra.mxu0 %v39
    %1646 = vmatprep.subr.mxu0 0.0
    %1647 = vmatpush1.msra.mxu0 %v40
    %1648 = vmatprep.subr.mxu0 0.0
    %1649 = vmatpush1.msra.mxu0 %v41
    %1650 = vmatprep.subr.mxu0 0.0
    %1651 = vmatpush1.msra.mxu0 %v42
    %1652 = vmatprep.subr.mxu0 0.0
    %1653 = vmatpush1.msra.mxu0 0.0
    %1654 = vmatprep.subr.mxu0 0.0
    %1655 = vmatpush1.msra.mxu0 0.0
    %1656 = vmatprep.subr.mxu0 0.0
    %1657 = vmatpush1.msra.mxu0 0.0
    %1658 = vmatprep.subr.mxu0 0.0
    %1659 = vmatpush1.msra.mxu0 0.0
    %1660 = vmatprep.subr.mxu0 0.0
    %1661 = vmatpush1.msra.mxu0 0.0
    %1662 = vmatprep.subr.mxu0 0.0
    %1663 = vmatpush1.msra.mxu0 0.0
    %1664 = vmatprep.subr.mxu0 0.0
    %1665 = vmatpush1.msra.mxu0 0.0
    %1666 = vmatprep.subr.mxu0 0.0
    %1667 = vmatpush1.msra.mxu0 0.0
    %1668 = vmatprep.subr.mxu0 0.0
    %1669 = vmatpush1.msra.mxu0 0.0
    %1670 = vmatprep.subr.mxu0 0.0
    %1671 = vmatpush1.msra.mxu0 0.0
    %1672 = vmatprep.subr.mxu0 0.0
    %1673 = vmatpush1.msra.mxu0 0.0
    %1674 = vmatprep.subr.mxu0 0.0
    %1675 = vmatpush1.msra.mxu0 0.0
    %1676 = vmatprep.subr.mxu0 0.0
    %1677 = vmatpush1.msra.mxu0 0.0
    %1678 = vmatprep.subr.mxu0 0.0
    %1679 = vmatpush1.msra.mxu0 0.0
    %1680 = vmatprep.subr.mxu0 0.0
    %1681 = vmatpush1.msra.mxu0 0.0
    %1682 = vmatprep.subr.mxu0 0.0
    %1683 = vmatpush1.msra.mxu0 0.0
    %1684 = vmatprep.subr.mxu0 0.0
    %1685 = vmatpush1.msra.mxu0 0.0
    %1686 = vmatprep.subr.mxu0 0.0
    %1687 = vmatpush1.msra.mxu0 0.0
    %1688 = vmatprep.subr.mxu0 0.0
    %1689 = vmatpush1.msra.mxu0 0.0
    %1690 = vmatprep.subr.mxu0 0.0
    %1691 = vmatpush1.msra.mxu0 0.0
    %1692 = vmatprep.subr.mxu0 0.0
    %1693 = vmatpush1.msra.mxu0 0.0
    %1694 = vmatprep.subr.mxu0 0.0
    %1695 = vmatpush1.msra.mxu0 0.0
    %1696 = vmatprep.subr.mxu0 0.0
    %1697 = vmatpush1.msra.mxu0 0.0
    %1698 = vmatprep.subr.mxu0 0.0
    %1699 = vmatpush1.msra.mxu0 0.0
    %1700 = vmatprep.subr.mxu0 0.0
    %1701 = vmatpush1.msra.mxu0 0.0
    %1702 = vmatprep.subr.mxu0 0.0
    %1703 = vmatpush1.msra.mxu0 0.0
    %1704 = vmatprep.subr.mxu0 0.0
    %1705 = vmatpush1.msra.mxu0 0.0
    %1706 = vmatprep.subr.mxu0 0.0
    %1707 = vmatpush1.msra.mxu0 0.0
    %1708 = vmatprep.mubr.f32.mxu0 0.0
    %1709 = vmatmul.mubr.f32.gmra.mrb[0].mxu0 %v1642
    %v1710 = vpop.f32.mrb[0].mxu0
    %v1711 = vadd.f32 0.0, %v1710
    %v1712 = vpop.f32.mrb[0].mxu0
    %1713 = vdwg.mxu0
    %v1715 = vrot.slane %v1711, 4
    %v1717 = vadd.f32 %v139, %v1715
    %v1718 = vxor.u32 %v1717, 2147483648
    %v1719 = vmul.f32 %v1718, 1.442695
    %v1720 = vpow.pop %v1719
    %v1721 = vadd.f32 %v1720, 1.0
    %v1722 = vrcp.pop %v1721
    %v1723 = vmul.f32 1.0, %v1722
    %v1724 = vtanh.pop %v1717
    %v1726 = vrot.slane %v1486, 6
    %v1728 = vmul.f32 %v1723, %v1726
    %1730 = vrot.lane.b32.xlu0 %v1724, 64
    %v1731 = vpop.permute.xlu0 %1730
    %v1733 = vmul.f32 %v1723, %v1731
    %1735 = vrot.lane.b32.xlu0 %v1733, 32
    %v1736 = vpop.permute.xlu0 %1735
    %v1738 = vadd.f32 %v1728, %v1736
    %v1739 = vtanh.pop %v1738
    %1741 = vrot.lane.b32.xlu0 %v1739, 64
    %v1742 = vpop.permute.xlu0 %1741
    %v1744 = vmul.f32 %v1723, %v1742
    %1746 = vrot.lane.b32.xlu0 %v1744, 32
    %v1747 = vpop.permute.xlu0 %1746
    %v1749 = vrot.slane %v1599, 4
    %1750 = vrot.lane.b32.xlu0 %v1749, 64
    %v1751 = vpop.permute.xlu0 %1750
    %v1753 = vsel %vm60, %v1747, %v1751
    %v1755 = vrot.slane %v1753, 4
    %v1756 = vsel %vm252, %v1755, 0
    %1758 = vmatprep.subr.mxu0 0.0
    %1759 = vmatpush1.msra.mxu0 %v43
    %1760 = vmatprep.subr.mxu0 0.0
    %1761 = vmatpush1.msra.mxu0 %v44
    %1762 = vmatprep.subr.mxu0 0.0
    %1763 = vmatpush1.msra.mxu0 %v45
    %1764 = vmatprep.subr.mxu0 0.0
    %1765 = vmatpush1.msra.mxu0 %v46
    %1766 = vmatprep.subr.mxu0 0.0
    %1767 = vmatpush1.msra.mxu0 %v47
    %1768 = vmatprep.subr.mxu0 0.0
    %1769 = vmatpush1.msra.mxu0 %v48
    %1770 = vmatprep.subr.mxu0 0.0
    %1771 = vmatpush1.msra.mxu0 %v49
    %1772 = vmatprep.subr.mxu0 0.0
    %1773 = vmatpush1.msra.mxu0 %v50
    %1774 = vmatprep.subr.mxu0 0.0
    %1775 = vmatpush1.msra.mxu0 0.0
    %1776 = vmatprep.subr.mxu0 0.0
    %1777 = vmatpush1.msra.mxu0 0.0
    %1778 = vmatprep.subr.mxu0 0.0
    %1779 = vmatpush1.msra.mxu0 0.0
    %1780 = vmatprep.subr.mxu0 0.0
    %1781 = vmatpush1.msra.mxu0 0.0
    %1782 = vmatprep.subr.mxu0 0.0
    %1783 = vmatpush1.msra.mxu0 0.0
    %1784 = vmatprep.subr.mxu0 0.0
    %1785 = vmatpush1.msra.mxu0 0.0
    %1786 = vmatprep.subr.mxu0 0.0
    %1787 = vmatpush1.msra.mxu0 0.0
    %1788 = vmatprep.subr.mxu0 0.0
    %1789 = vmatpush1.msra.mxu0 0.0
    %1790 = vmatprep.subr.mxu0 0.0
    %1791 = vmatpush1.msra.mxu0 0.0
    %1792 = vmatprep.subr.mxu0 0.0
    %1793 = vmatpush1.msra.mxu0 0.0
    %1794 = vmatprep.subr.mxu0 0.0
    %1795 = vmatpush1.msra.mxu0 0.0
    %1796 = vmatprep.subr.mxu0 0.0
    %1797 = vmatpush1.msra.mxu0 0.0
    %1798 = vmatprep.subr.mxu0 0.0
    %1799 = vmatpush1.msra.mxu0 0.0
    %1800 = vmatprep.subr.mxu0 0.0
    %1801 = vmatpush1.msra.mxu0 0.0
    %1802 = vmatprep.subr.mxu0 0.0
    %1803 = vmatpush1.msra.mxu0 0.0
    %1804 = vmatprep.subr.mxu0 0.0
    %1805 = vmatpush1.msra.mxu0 0.0
    %1806 = vmatprep.subr.mxu0 0.0
    %1807 = vmatpush1.msra.mxu0 0.0
    %1808 = vmatprep.subr.mxu0 0.0
    %1809 = vmatpush1.msra.mxu0 0.0
    %1810 = vmatprep.subr.mxu0 0.0
    %1811 = vmatpush1.msra.mxu0 0.0
    %1812 = vmatprep.subr.mxu0 0.0
    %1813 = vmatpush1.msra.mxu0 0.0
    %1814 = vmatprep.subr.mxu0 0.0
    %1815 = vmatpush1.msra.mxu0 0.0
    %1816 = vmatprep.subr.mxu0 0.0
    %1817 = vmatpush1.msra.mxu0 0.0
    %1818 = vmatprep.subr.mxu0 0.0
    %1819 = vmatpush1.msra.mxu0 0.0
    %1820 = vmatprep.subr.mxu0 0.0
    %1821 = vmatpush1.msra.mxu0 0.0
    %1822 = vmatprep.mubr.f32.mxu0 0.0
    %1823 = vmatmul.mubr.f32.gmra.mrb[0].mxu0 %v1756
    %v1824 = vpop.f32.mrb[0].mxu0
    %v1825 = vadd.f32 %v147, %v1824
    %v1826 = vpop.f32.mrb[0].mxu0
    %1827 = vdwg.mxu0
    %v1828 = vxor.u32 %v1825, 2147483648
    %v1829 = vmul.f32 %v1828, 1.442695
    %v1830 = vpow.pop %v1829
    %v1831 = vadd.f32 %v1830, 1.0
    %v1832 = vrcp.pop %v1831
    %v1833 = vmul.f32 1.0, %v1832
    %v1834 = vtanh.pop %v1825
    %v1835 = vmul.f32 %v1833, %v1593
    %1837 = vrot.lane.b32.xlu0 %v1834, 64
    %v1838 = vpop.permute.xlu0 %1837
    %v1840 = vmul.f32 %v1833, %v1838
    %1842 = vrot.lane.b32.xlu0 %v1840, 32
    %v1843 = vpop.permute.xlu0 %1842
    %v1845 = vadd.f32 %v1835, %v1843
    %v1846 = vtanh.pop %v1845
    %1848 = vrot.lane.b32.xlu0 %v1846, 64
    %v1849 = vpop.permute.xlu0 %1848
    %v1851 = vmul.f32 %v1833, %v1849
    %v1854 = vunpack.c.l.s4 1966171168
    %v1855 = vunpack.c.0.s8 %v1854
    %v1856 = vlaneseq
    %v1857 = vshrl.u32 %v1856, 7
    %v1858 = vsub.s32 %v1855, %v1857
    %v1859 = vrot.slane %v1851, %v1858
    %v1860 = vcombine.high %v1859, %v1859
    %v1862 = vunpack.c.l.s4 1966171168
    %v1863 = vunpack.c.0.s8 %v1862
    %v1864 = vlaneseq
    %v1865 = vshrl.u32 %v1864, 7
    %v1866 = vsub.s32 %v1863, %v1865
    %v1867 = vrot.slane %v1859, %v1866
    %v1869 = vunpack.c.l.s4 1966171168
    %v1870 = vunpack.c.0.s8 %v1869
    %v1871 = vlaneseq
    %v1872 = vshrl.u32 %v1871, 7
    %v1873 = vsub.s32 %v1870, %v1872
    %v1874 = vrot.slane %v1860, %v1873
    %v1875 = vlaneseq
    %v1876 = vshrl.u32 %v1875, 7
    %v1877 = vsub.s32 0, %v1876
    %v1878 = vrot.slane %v1867, %v1877
    %v1879 = vlaneseq
    %v1880 = vshrl.u32 %v1879, 7
    %v1881 = vsub.s32 0, %v1880
    %v1882 = vrot.slane %v1874, %v1881
    %1883 = vrot.lane.b32.xlu0 %v1878, 32
    %v1884 = vpop.permute.xlu0 %1883
    %1885 = vrot.lane.b32.xlu0 %v1882, 32
    %v1886 = vpop.permute.xlu0 %1885
    %1889 = vst.msk [vmem:[#allocation2 + $0x6] sm:$0x1] %vm387, %v1884
    %1890 = vst.msk [vmem:[#allocation2 + $0xe] sm:$0x1] %vm387, %v1886
    %v1891 = vrot.slane %v1744, 4
    %1892 = vrot.lane.b32.xlu0 %v1891, 32
    %v1893 = vpop.permute.xlu0 %1892
    %v1894 = vsel %vm60, %v1893, 0
    %1896 = vmatprep.subr.mxu0 0.0
    %1897 = vmatpush1.msra.mxu0 %v39
    %1898 = vmatprep.subr.mxu0 0.0
    %1899 = vmatpush1.msra.mxu0 %v40
    %1900 = vmatprep.subr.mxu0 0.0
    %1901 = vmatpush1.msra.mxu0 %v41
    %1902 = vmatprep.subr.mxu0 0.0
    %1903 = vmatpush1.msra.mxu0 %v42
    %1904 = vmatprep.subr.mxu0 0.0
    %1905 = vmatpush1.msra.mxu0 0.0
    %1906 = vmatprep.subr.mxu0 0.0
    %1907 = vmatpush1.msra.mxu0 0.0
    %1908 = vmatprep.subr.mxu0 0.0
    %1909 = vmatpush1.msra.mxu0 0.0
    %1910 = vmatprep.subr.mxu0 0.0
    %1911 = vmatpush1.msra.mxu0 0.0
    %1912 = vmatprep.subr.mxu0 0.0
    %1913 = vmatpush1.msra.mxu0 0.0
    %1914 = vmatprep.subr.mxu0 0.0
    %1915 = vmatpush1.msra.mxu0 0.0
    %1916 = vmatprep.subr.mxu0 0.0
    %1917 = vmatpush1.msra.mxu0 0.0
    %1918 = vmatprep.subr.mxu0 0.0
    %1919 = vmatpush1.msra.mxu0 0.0
    %1920 = vmatprep.subr.mxu0 0.0
    %1921 = vmatpush1.msra.mxu0 0.0
    %1922 = vmatprep.subr.mxu0 0.0
    %1923 = vmatpush1.msra.mxu0 0.0
    %1924 = vmatprep.subr.mxu0 0.0
    %1925 = vmatpush1.msra.mxu0 0.0
    %1926 = vmatprep.subr.mxu0 0.0
    %1927 = vmatpush1.msra.mxu0 0.0
    %1928 = vmatprep.subr.mxu0 0.0
    %1929 = vmatpush1.msra.mxu0 0.0
    %1930 = vmatprep.subr.mxu0 0.0
    %1931 = vmatpush1.msra.mxu0 0.0
    %1932 = vmatprep.subr.mxu0 0.0
    %1933 = vmatpush1.msra.mxu0 0.0
    %1934 = vmatprep.subr.mxu0 0.0
    %1935 = vmatpush1.msra.mxu0 0.0
    %1936 = vmatprep.subr.mxu0 0.0
    %1937 = vmatpush1.msra.mxu0 0.0
    %1938 = vmatprep.subr.mxu0 0.0
    %1939 = vmatpush1.msra.mxu0 0.0
    %1940 = vmatprep.subr.mxu0 0.0
    %1941 = vmatpush1.msra.mxu0 0.0
    %1942 = vmatprep.subr.mxu0 0.0
    %1943 = vmatpush1.msra.mxu0 0.0
    %1944 = vmatprep.subr.mxu0 0.0
    %1945 = vmatpush1.msra.mxu0 0.0
    %1946 = vmatprep.subr.mxu0 0.0
    %1947 = vmatpush1.msra.mxu0 0.0
    %1948 = vmatprep.subr.mxu0 0.0
    %1949 = vmatpush1.msra.mxu0 0.0
    %1950 = vmatprep.subr.mxu0 0.0
    %1951 = vmatpush1.msra.mxu0 0.0
    %1952 = vmatprep.subr.mxu0 0.0
    %1953 = vmatpush1.msra.mxu0 0.0
    %1954 = vmatprep.subr.mxu0 0.0
    %1955 = vmatpush1.msra.mxu0 0.0
    %1956 = vmatprep.subr.mxu0 0.0
    %1957 = vmatpush1.msra.mxu0 0.0
    %1958 = vmatprep.subr.mxu0 0.0
    %1959 = vmatpush1.msra.mxu0 0.0
    %1960 = vmatprep.mubr.f32.mxu0 0.0
    %1961 = vmatmul.mubr.f32.gmra.mrb[0].mxu0 %v1894
    %v1962 = vpop.f32.mrb[0].mxu0
    %v1963 = vadd.f32 0.0, %v1962
    %v1964 = vpop.f32.mrb[0].mxu0
    %1965 = vdwg.mxu0
    %v1967 = vrot.slane %v1963, 2
    %v1969 = vadd.f32 %v139, %v1967
    %v1970 = vxor.u32 %v1969, 2147483648
    %v1971 = vmul.f32 %v1970, 1.442695
    %v1972 = vpow.pop %v1971
    %v1973 = vadd.f32 %v1972, 1.0
    %v1974 = vrcp.pop %v1973
    %v1975 = vmul.f32 1.0, %v1974
    %v1976 = vtanh.pop %v1969
    %v1978 = vrot.slane %v1738, 6
    %v1980 = vmul.f32 %v1975, %v1978
    %1982 = vrot.lane.b32.xlu0 %v1976, 64
    %v1983 = vpop.permute.xlu0 %1982
    %v1985 = vmul.f32 %v1975, %v1983
    %1987 = vrot.lane.b32.xlu0 %v1985, 32
    %v1988 = vpop.permute.xlu0 %1987
    %v1990 = vadd.f32 %v1980, %v1988
    %v1991 = vtanh.pop %v1990
    %1993 = vrot.lane.b32.xlu0 %v1991, 64
    %v1994 = vpop.permute.xlu0 %1993
    %v1996 = vmul.f32 %v1975, %v1994
    %1998 = vrot.lane.b32.xlu0 %v1996, 32
    %v1999 = vpop.permute.xlu0 %1998
    %v2001 = vrot.slane %v1851, 2
    %2002 = vrot.lane.b32.xlu0 %v2001, 64
    %v2003 = vpop.permute.xlu0 %2002
    %v2005 = vsel %vm60, %v1999, %v2003
    %v2007 = vrot.slane %v2005, 6
    %v2008 = vsel %vm252, %v2007, 0
    %2010 = vmatprep.subr.mxu0 0.0
    %2011 = vmatpush1.msra.mxu0 %v43
    %2012 = vmatprep.subr.mxu0 0.0
    %2013 = vmatpush1.msra.mxu0 %v44
    %2014 = vmatprep.subr.mxu0 0.0
    %2015 = vmatpush1.msra.mxu0 %v45
    %2016 = vmatprep.subr.mxu0 0.0
    %2017 = vmatpush1.msra.mxu0 %v46
    %2018 = vmatprep.subr.mxu0 0.0
    %2019 = vmatpush1.msra.mxu0 %v47
    %2020 = vmatprep.subr.mxu0 0.0
    %2021 = vmatpush1.msra.mxu0 %v48
    %2022 = vmatprep.subr.mxu0 0.0
    %2023 = vmatpush1.msra.mxu0 %v49
    %2024 = vmatprep.subr.mxu0 0.0
    %2025 = vmatpush1.msra.mxu0 %v50
    %2026 = vmatprep.subr.mxu0 0.0
    %2027 = vmatpush1.msra.mxu0 0.0
    %2028 = vmatprep.subr.mxu0 0.0
    %2029 = vmatpush1.msra.mxu0 0.0
    %2030 = vmatprep.subr.mxu0 0.0
    %2031 = vmatpush1.msra.mxu0 0.0
    %2032 = vmatprep.subr.mxu0 0.0
    %2033 = vmatpush1.msra.mxu0 0.0
    %2034 = vmatprep.subr.mxu0 0.0
    %2035 = vmatpush1.msra.mxu0 0.0
    %2036 = vmatprep.subr.mxu0 0.0
    %2037 = vmatpush1.msra.mxu0 0.0
    %2038 = vmatprep.subr.mxu0 0.0
    %2039 = vmatpush1.msra.mxu0 0.0
    %2040 = vmatprep.subr.mxu0 0.0
    %2041 = vmatpush1.msra.mxu0 0.0
    %2042 = vmatprep.subr.mxu0 0.0
    %2043 = vmatpush1.msra.mxu0 0.0
    %2044 = vmatprep.subr.mxu0 0.0
    %2045 = vmatpush1.msra.mxu0 0.0
    %2046 = vmatprep.subr.mxu0 0.0
    %2047 = vmatpush1.msra.mxu0 0.0
    %2048 = vmatprep.subr.mxu0 0.0
    %2049 = vmatpush1.msra.mxu0 0.0
    %2050 = vmatprep.subr.mxu0 0.0
    %2051 = vmatpush1.msra.mxu0 0.0
    %2052 = vmatprep.subr.mxu0 0.0
    %2053 = vmatpush1.msra.mxu0 0.0
    %2054 = vmatprep.subr.mxu0 0.0
    %2055 = vmatpush1.msra.mxu0 0.0
    %2056 = vmatprep.subr.mxu0 0.0
    %2057 = vmatpush1.msra.mxu0 0.0
    %2058 = vmatprep.subr.mxu0 0.0
    %2059 = vmatpush1.msra.mxu0 0.0
    %2060 = vmatprep.subr.mxu0 0.0
    %2061 = vmatpush1.msra.mxu0 0.0
    %2062 = vmatprep.subr.mxu0 0.0
    %2063 = vmatpush1.msra.mxu0 0.0
    %2064 = vmatprep.subr.mxu0 0.0
    %2065 = vmatpush1.msra.mxu0 0.0
    %2066 = vmatprep.subr.mxu0 0.0
    %2067 = vmatpush1.msra.mxu0 0.0
    %2068 = vmatprep.subr.mxu0 0.0
    %2069 = vmatpush1.msra.mxu0 0.0
    %2070 = vmatprep.subr.mxu0 0.0
    %2071 = vmatpush1.msra.mxu0 0.0
    %2072 = vmatprep.subr.mxu0 0.0
    %2073 = vmatpush1.msra.mxu0 0.0
    %2074 = vmatprep.mubr.f32.mxu0 0.0
    %2075 = vmatmul.mubr.f32.gmra.mrb[0].mxu0 %v2008
    %v2076 = vpop.f32.mrb[0].mxu0
    %v2077 = vadd.f32 %v147, %v2076
    %v2078 = vpop.f32.mrb[0].mxu0
    %2079 = vdwg.mxu0
    %v2080 = vxor.u32 %v2077, 2147483648
    %v2081 = vmul.f32 %v2080, 1.442695
    %v2082 = vpow.pop %v2081
    %v2083 = vadd.f32 %v2082, 1.0
    %v2084 = vrcp.pop %v2083
    %v2085 = vmul.f32 1.0, %v2084
    %v2086 = vtanh.pop %v2077
    %v2087 = vmul.f32 %v2085, %v1845
    %2089 = vrot.lane.b32.xlu0 %v2086, 64
    %v2090 = vpop.permute.xlu0 %2089
    %v2092 = vmul.f32 %v2085, %v2090
    %2094 = vrot.lane.b32.xlu0 %v2092, 32
    %v2095 = vpop.permute.xlu0 %2094
    %v2097 = vadd.f32 %v2087, %v2095
    %v2098 = vtanh.pop %v2097
    %2100 = vrot.lane.b32.xlu0 %v2098, 64
    %v2101 = vpop.permute.xlu0 %2100
    %v2103 = vmul.f32 %v2085, %v2101
    %v2106 = vunpack.c.l.s4 1966171168
    %v2107 = vunpack.c.0.s8 %v2106
    %v2108 = vlaneseq
    %v2109 = vshrl.u32 %v2108, 7
    %v2110 = vsub.s32 %v2107, %v2109
    %v2111 = vrot.slane %v2103, %v2110
    %v2112 = vcombine.high %v2111, %v2111
    %v2114 = vunpack.c.l.s4 1966171168
    %v2115 = vunpack.c.0.s8 %v2114
    %v2116 = vlaneseq
    %v2117 = vshrl.u32 %v2116, 7
    %v2118 = vsub.s32 %v2115, %v2117
    %v2119 = vrot.slane %v2111, %v2118
    %v2121 = vunpack.c.l.s4 1966171168
    %v2122 = vunpack.c.0.s8 %v2121
    %v2123 = vlaneseq
    %v2124 = vshrl.u32 %v2123, 7
    %v2125 = vsub.s32 %v2122, %v2124
    %v2126 = vrot.slane %v2112, %v2125
    %v2127 = vlaneseq
    %v2128 = vshrl.u32 %v2127, 7
    %v2129 = vsub.s32 0, %v2128
    %v2130 = vrot.slane %v2119, %v2129
    %v2131 = vlaneseq
    %v2132 = vshrl.u32 %v2131, 7
    %v2133 = vsub.s32 0, %v2132
    %v2134 = vrot.slane %v2126, %v2133
    %2135 = vrot.lane.b32.xlu0 %v2130, 32
    %v2136 = vpop.permute.xlu0 %2135
    %2137 = vrot.lane.b32.xlu0 %v2134, 32
    %v2138 = vpop.permute.xlu0 %2137
    %2141 = vst.msk [vmem:[#allocation2 + $0x7] sm:$0x1] %vm387, %v2136
    %2142 = vst.msk [vmem:[#allocation2 + $0xf] sm:$0x1] %vm387, %v2138
    %2143 = vrot.lane.b32.xlu0 %v2103, 32
    %v2144 = vpop.permute.xlu0 %2143
    %vm2146 = vcmask 1024
    %2147 = vst.msk [vmem:[%s10] sm:$0x3] %vm2146, %v2144
    %v2148 = vld [vmem:[%s6] sm:$0xff]
    %v2149 = vld [vmem:[%s7] sm:$0xff]
    %v2150 = vld [vmem:[%s8] sm:$0xff]
    %v2151 = vld [vmem:[#allocation2] sm:$0xff]
    %vm2152 = vcmask 64512
    %v2154 = vsel %vm2152, %v2148, 0
    %2156 = vmatprep.subr.mxu0 0.0
    %2157 = vmatpush1.msra.mxu0 %v2151
    %2158 = vmatprep.subr.mxu0 0.0
    %2159 = vmatpush1.msra.mxu0 0.0
    %2160 = vmatprep.subr.mxu0 0.0
    %2161 = vmatpush1.msra.mxu0 0.0
    %2162 = vmatprep.subr.mxu0 0.0
    %2163 = vmatpush1.msra.mxu0 0.0
    %2164 = vmatprep.subr.mxu0 0.0
    %2165 = vmatpush1.msra.mxu0 0.0
    %2166 = vmatprep.subr.mxu0 0.0
    %2167 = vmatpush1.msra.mxu0 0.0
    %2168 = vmatprep.subr.mxu0 0.0
    %2169 = vmatpush1.msra.mxu0 0.0
    %2170 = vmatprep.subr.mxu0 0.0
    %2171 = vmatpush1.msra.mxu0 0.0
    %2172 = vmatprep.subr.mxu0 0.0
    %2173 = vmatpush1.msra.mxu0 0.0
    %2174 = vmatprep.subr.mxu0 0.0
    %2175 = vmatpush1.msra.mxu0 0.0
    %2176 = vmatprep.subr.mxu0 0.0
    %2177 = vmatpush1.msra.mxu0 0.0
    %2178 = vmatprep.subr.mxu0 0.0
    %2179 = vmatpush1.msra.mxu0 0.0
    %2180 = vmatprep.subr.mxu0 0.0
    %2181 = vmatpush1.msra.mxu0 0.0
    %2182 = vmatprep.subr.mxu0 0.0
    %2183 = vmatpush1.msra.mxu0 0.0
    %2184 = vmatprep.subr.mxu0 0.0
    %2185 = vmatpush1.msra.mxu0 0.0
    %2186 = vmatprep.subr.mxu0 0.0
    %2187 = vmatpush1.msra.mxu0 0.0
    %2188 = vmatprep.subr.mxu0 0.0
    %2189 = vmatpush1.msra.mxu0 0.0
    %2190 = vmatprep.subr.mxu0 0.0
    %2191 = vmatpush1.msra.mxu0 0.0
    %2192 = vmatprep.subr.mxu0 0.0
    %2193 = vmatpush1.msra.mxu0 0.0
    %2194 = vmatprep.subr.mxu0 0.0
    %2195 = vmatpush1.msra.mxu0 0.0
    %2196 = vmatprep.subr.mxu0 0.0
    %2197 = vmatpush1.msra.mxu0 0.0
    %2198 = vmatprep.subr.mxu0 0.0
    %2199 = vmatpush1.msra.mxu0 0.0
    %2200 = vmatprep.subr.mxu0 0.0
    %2201 = vmatpush1.msra.mxu0 0.0
    %2202 = vmatprep.subr.mxu0 0.0
    %2203 = vmatpush1.msra.mxu0 0.0
    %2204 = vmatprep.subr.mxu0 0.0
    %2205 = vmatpush1.msra.mxu0 0.0
    %2206 = vmatprep.subr.mxu0 0.0
    %2207 = vmatpush1.msra.mxu0 0.0
    %2208 = vmatprep.subr.mxu0 0.0
    %2209 = vmatpush1.msra.mxu0 0.0
    %2210 = vmatprep.subr.mxu0 0.0
    %2211 = vmatpush1.msra.mxu0 0.0
    %2212 = vmatprep.subr.mxu0 0.0
    %2213 = vmatpush1.msra.mxu0 0.0
    %2214 = vmatprep.subr.mxu0 0.0
    %2215 = vmatpush1.msra.mxu0 0.0
    %2216 = vmatprep.subr.mxu0 0.0
    %2217 = vmatpush1.msra.mxu0 0.0
    %2218 = vmatprep.subr.mxu0 0.0
    %2219 = vmatpush1.msra.mxu0 0.0
    %2220 = vmatprep.mubr.f32.mxu0 0.0
    %2221 = vmatmul.mubr.f32.gmra.mrb[0].mxu0 %v2154
    %v2222 = vpop.f32.mrb[0].mxu0
    %v2223 = vadd.f32 0.0, %v2222
    %v2224 = vpop.f32.mrb[0].mxu0
    %2225 = vdwg.mxu0
    %v2227 = vsel %vm2152, %v2149, 0
    %2229 = vmatprep.subr.mxu0 0.0
    %2230 = vmatpush1.msra.mxu0 %v2151
    %2231 = vmatprep.subr.mxu0 0.0
    %2232 = vmatpush1.msra.mxu0 0.0
    %2233 = vmatprep.subr.mxu0 0.0
    %2234 = vmatpush1.msra.mxu0 0.0
    %2235 = vmatprep.subr.mxu0 0.0
    %2236 = vmatpush1.msra.mxu0 0.0
    %2237 = vmatprep.subr.mxu0 0.0
    %2238 = vmatpush1.msra.mxu0 0.0
    %2239 = vmatprep.subr.mxu0 0.0
    %2240 = vmatpush1.msra.mxu0 0.0
    %2241 = vmatprep.subr.mxu0 0.0
    %2242 = vmatpush1.msra.mxu0 0.0
    %2243 = vmatprep.subr.mxu0 0.0
    %2244 = vmatpush1.msra.mxu0 0.0
    %2245 = vmatprep.subr.mxu0 0.0
    %2246 = vmatpush1.msra.mxu0 0.0
    %2247 = vmatprep.subr.mxu0 0.0
    %2248 = vmatpush1.msra.mxu0 0.0
    %2249 = vmatprep.subr.mxu0 0.0
    %2250 = vmatpush1.msra.mxu0 0.0
    %2251 = vmatprep.subr.mxu0 0.0
    %2252 = vmatpush1.msra.mxu0 0.0
    %2253 = vmatprep.subr.mxu0 0.0
    %2254 = vmatpush1.msra.mxu0 0.0
    %2255 = vmatprep.subr.mxu0 0.0
    %2256 = vmatpush1.msra.mxu0 0.0
    %2257 = vmatprep.subr.mxu0 0.0
    %2258 = vmatpush1.msra.mxu0 0.0
    %2259 = vmatprep.subr.mxu0 0.0
    %2260 = vmatpush1.msra.mxu0 0.0
    %2261 = vmatprep.subr.mxu0 0.0
    %2262 = vmatpush1.msra.mxu0 0.0
    %2263 = vmatprep.subr.mxu0 0.0
    %2264 = vmatpush1.msra.mxu0 0.0
    %2265 = vmatprep.subr.mxu0 0.0
    %2266 = vmatpush1.msra.mxu0 0.0
    %2267 = vmatprep.subr.mxu0 0.0
    %2268 = vmatpush1.msra.mxu0 0.0
    %2269 = vmatprep.subr.mxu0 0.0
    %2270 = vmatpush1.msra.mxu0 0.0
    %2271 = vmatprep.subr.mxu0 0.0
    %2272 = vmatpush1.msra.mxu0 0.0
    %2273 = vmatprep.subr.mxu0 0.0
    %2274 = vmatpush1.msra.mxu0 0.0
    %2275 = vmatprep.subr.mxu0 0.0
    %2276 = vmatpush1.msra.mxu0 0.0
    %2277 = vmatprep.subr.mxu0 0.0
    %2278 = vmatpush1.msra.mxu0 0.0
    %2279 = vmatprep.subr.mxu0 0.0
    %2280 = vmatpush1.msra.mxu0 0.0
    %2281 = vmatprep.subr.mxu0 0.0
    %2282 = vmatpush1.msra.mxu0 0.0
    %2283 = vmatprep.subr.mxu0 0.0
    %2284 = vmatpush1.msra.mxu0 0.0
    %2285 = vmatprep.subr.mxu0 0.0
    %2286 = vmatpush1.msra.mxu0 0.0
    %2287 = vmatprep.subr.mxu0 0.0
    %2288 = vmatpush1.msra.mxu0 0.0
    %2289 = vmatprep.subr.mxu0 0.0
    %2290 = vmatpush1.msra.mxu0 0.0
    %2291 = vmatprep.subr.mxu0 0.0
    %2292 = vmatpush1.msra.mxu0 0.0
    %2293 = vmatprep.mubr.f32.mxu0 0.0
    %2294 = vmatmul.mubr.f32.gmra.mrb[0].mxu0 %v2227
    %v2295 = vpop.f32.mrb[0].mxu0
    %v2296 = vadd.f32 0.0, %v2295
    %v2297 = vpop.f32.mrb[0].mxu0
    %2298 = vdwg.mxu0
    %v2300 = vsel %vm2152, %v2150, 0
    %2302 = vmatprep.subr.mxu0 0.0
    %2303 = vmatpush1.msra.mxu0 %v2151
    %2304 = vmatprep.subr.mxu0 0.0
    %2305 = vmatpush1.msra.mxu0 0.0
    %2306 = vmatprep.subr.mxu0 0.0
    %2307 = vmatpush1.msra.mxu0 0.0
    %2308 = vmatprep.subr.mxu0 0.0
    %2309 = vmatpush1.msra.mxu0 0.0
    %2310 = vmatprep.subr.mxu0 0.0
    %2311 = vmatpush1.msra.mxu0 0.0
    %2312 = vmatprep.subr.mxu0 0.0
    %2313 = vmatpush1.msra.mxu0 0.0
    %2314 = vmatprep.subr.mxu0 0.0
    %2315 = vmatpush1.msra.mxu0 0.0
    %2316 = vmatprep.subr.mxu0 0.0
    %2317 = vmatpush1.msra.mxu0 0.0
    %2318 = vmatprep.subr.mxu0 0.0
    %2319 = vmatpush1.msra.mxu0 0.0
    %2320 = vmatprep.subr.mxu0 0.0
    %2321 = vmatpush1.msra.mxu0 0.0
    %2322 = vmatprep.subr.mxu0 0.0
    %2323 = vmatpush1.msra.mxu0 0.0
    %2324 = vmatprep.subr.mxu0 0.0
    %2325 = vmatpush1.msra.mxu0 0.0
    %2326 = vmatprep.subr.mxu0 0.0
    %2327 = vmatpush1.msra.mxu0 0.0
    %2328 = vmatprep.subr.mxu0 0.0
    %2329 = vmatpush1.msra.mxu0 0.0
    %2330 = vmatprep.subr.mxu0 0.0
    %2331 = vmatpush1.msra.mxu0 0.0
    %2332 = vmatprep.subr.mxu0 0.0
    %2333 = vmatpush1.msra.mxu0 0.0
    %2334 = vmatprep.subr.mxu0 0.0
    %2335 = vmatpush1.msra.mxu0 0.0
    %2336 = vmatprep.subr.mxu0 0.0
    %2337 = vmatpush1.msra.mxu0 0.0
    %2338 = vmatprep.subr.mxu0 0.0
    %2339 = vmatpush1.msra.mxu0 0.0
    %2340 = vmatprep.subr.mxu0 0.0
    %2341 = vmatpush1.msra.mxu0 0.0
    %2342 = vmatprep.subr.mxu0 0.0
    %2343 = vmatpush1.msra.mxu0 0.0
    %2344 = vmatprep.subr.mxu0 0.0
    %2345 = vmatpush1.msra.mxu0 0.0
    %2346 = vmatprep.subr.mxu0 0.0
    %2347 = vmatpush1.msra.mxu0 0.0
    %2348 = vmatprep.subr.mxu0 0.0
    %2349 = vmatpush1.msra.mxu0 0.0
    %2350 = vmatprep.subr.mxu0 0.0
    %2351 = vmatpush1.msra.mxu0 0.0
    %2352 = vmatprep.subr.mxu0 0.0
    %2353 = vmatpush1.msra.mxu0 0.0
    %2354 = vmatprep.subr.mxu0 0.0
    %2355 = vmatpush1.msra.mxu0 0.0
    %2356 = vmatprep.subr.mxu0 0.0
    %2357 = vmatpush1.msra.mxu0 0.0
    %2358 = vmatprep.subr.mxu0 0.0
    %2359 = vmatpush1.msra.mxu0 0.0
    %2360 = vmatprep.subr.mxu0 0.0
    %2361 = vmatpush1.msra.mxu0 0.0
    %2362 = vmatprep.subr.mxu0 0.0
    %2363 = vmatpush1.msra.mxu0 0.0
    %2364 = vmatprep.subr.mxu0 0.0
    %2365 = vmatpush1.msra.mxu0 0.0
    %2366 = vmatprep.mubr.f32.mxu0 0.0
    %2367 = vmatmul.mubr.f32.gmra.mrb[0].mxu0 %v2300
    %v2368 = vpop.f32.mrb[0].mxu0
    %v2369 = vadd.f32 0.0, %v2368
    %v2370 = vpop.f32.mrb[0].mxu0
    %2371 = vdwg.mxu0
    %2372 = vxpose.xlu0.b32.start [1/16] %v2223, 128
    %2373 = vxpose.xlu0.b32.cont [2/16] 0.0, 128
    %2374 = vxpose.xlu0.b32.cont [3/16] 0.0, 128
    %2375 = vxpose.xlu0.b32.cont [4/16] 0.0, 128
    %2376 = vxpose.xlu0.b32.cont [5/16] 0.0, 128
    %2377 = vxpose.xlu0.b32.cont [6/16] 0.0, 128
    %2378 = vxpose.xlu0.b32.cont [7/16] 0.0, 128
    %2379 = vxpose.xlu0.b32.cont [8/16] 0.0, 128
    %2380 = vxpose.xlu0.b32.cont [9/16] 0.0, 128
    %2381 = vxpose.xlu0.b32.cont [10/16] 0.0, 128
    %2382 = vxpose.xlu0.b32.cont [11/16] 0.0, 128
    %2383 = vxpose.xlu0.b32.cont [12/16] 0.0, 128
    %2384 = vxpose.xlu0.b32.cont [13/16] 0.0, 128
    %2385 = vxpose.xlu0.b32.cont [14/16] 0.0, 128
    %2386 = vxpose.xlu0.b32.cont [15/16] 0.0, 128
    %2387 = vxpose.xlu0.b32.end [16/16] 0.0, 128
    %v2388 = vpop.trf.xlu0
    %v2389 = vpop.trf.xlu0
    %v2390 = vpop.trf.xlu0
    %v2391 = vpop.trf.xlu0
    %v2392 = vpop.trf.xlu0
    %v2393 = vpop.trf.xlu0
    %v2394 = vpop.trf.xlu0
    %v2395 = vpop.trf.xlu0
    %v2396 = vpop.trf.xlu0
    %v2397 = vpop.trf.xlu0
    %v2398 = vpop.trf.xlu0
    %v2399 = vpop.trf.xlu0
    %v2400 = vpop.trf.xlu0
    %v2401 = vpop.trf.xlu0
    %v2402 = vpop.trf.xlu0
    %v2403 = vpop.trf.xlu0
    %v2405 = vsel %vm2152, %v2388, 0
    %v2408 = vsel %vm2152, %v2389, 0
    %v2411 = vsel %vm2152, %v2390, 0
    %v2414 = vsel %vm2152, %v2391, 0
    %2416 = vmatprep.subr.mxu0 0.0
    %2417 = vmatpush1.msra.mxu0 %v2296
    %2418 = vmatprep.subr.mxu0 0.0
    %2419 = vmatpush1.msra.mxu0 0.0
    %2420 = vmatprep.subr.mxu0 0.0
    %2421 = vmatpush1.msra.mxu0 0.0
    %2422 = vmatprep.subr.mxu0 0.0
    %2423 = vmatpush1.msra.mxu0 0.0
    %2424 = vmatprep.subr.mxu0 0.0
    %2425 = vmatpush1.msra.mxu0 0.0
    %2426 = vmatprep.subr.mxu0 0.0
    %2427 = vmatpush1.msra.mxu0 0.0
    %2428 = vmatprep.subr.mxu0 0.0
    %2429 = vmatpush1.msra.mxu0 0.0
    %2430 = vmatprep.subr.mxu0 0.0
    %2431 = vmatpush1.msra.mxu0 0.0
    %2432 = vmatprep.subr.mxu0 0.0
    %2433 = vmatpush1.msra.mxu0 0.0
    %2434 = vmatprep.subr.mxu0 0.0
    %2435 = vmatpush1.msra.mxu0 0.0
    %2436 = vmatprep.subr.mxu0 0.0
    %2437 = vmatpush1.msra.mxu0 0.0
    %2438 = vmatprep.subr.mxu0 0.0
    %2439 = vmatpush1.msra.mxu0 0.0
    %2440 = vmatprep.subr.mxu0 0.0
    %2441 = vmatpush1.msra.mxu0 0.0
    %2442 = vmatprep.subr.mxu0 0.0
    %2443 = vmatpush1.msra.mxu0 0.0
    %2444 = vmatprep.subr.mxu0 0.0
    %2445 = vmatpush1.msra.mxu0 0.0
    %2446 = vmatprep.subr.mxu0 0.0
    %2447 = vmatpush1.msra.mxu0 0.0
    %2448 = vmatprep.subr.mxu0 0.0
    %2449 = vmatpush1.msra.mxu0 0.0
    %2450 = vmatprep.subr.mxu0 0.0
    %2451 = vmatpush1.msra.mxu0 0.0
    %2452 = vmatprep.subr.mxu0 0.0
    %2453 = vmatpush1.msra.mxu0 0.0
    %2454 = vmatprep.subr.mxu0 0.0
    %2455 = vmatpush1.msra.mxu0 0.0
    %2456 = vmatprep.subr.mxu0 0.0
    %2457 = vmatpush1.msra.mxu0 0.0
    %2458 = vmatprep.subr.mxu0 0.0
    %2459 = vmatpush1.msra.mxu0 0.0
    %2460 = vmatprep.subr.mxu0 0.0
    %2461 = vmatpush1.msra.mxu0 0.0
    %2462 = vmatprep.subr.mxu0 0.0
    %2463 = vmatpush1.msra.mxu0 0.0
    %2464 = vmatprep.subr.mxu0 0.0
    %2465 = vmatpush1.msra.mxu0 0.0
    %2466 = vmatprep.subr.mxu0 0.0
    %2467 = vmatpush1.msra.mxu0 0.0
    %2468 = vmatprep.subr.mxu0 0.0
    %2469 = vmatpush1.msra.mxu0 0.0
    %2470 = vmatprep.subr.mxu0 0.0
    %2471 = vmatpush1.msra.mxu0 0.0
    %2472 = vmatprep.subr.mxu0 0.0
    %2473 = vmatpush1.msra.mxu0 0.0
    %2474 = vmatprep.subr.mxu0 0.0
    %2475 = vmatpush1.msra.mxu0 0.0
    %2476 = vmatprep.subr.mxu0 0.0
    %2477 = vmatpush1.msra.mxu0 0.0
    %2478 = vmatprep.subr.mxu0 0.0
    %2479 = vmatpush1.msra.mxu0 0.0
    %2480 = vmatprep.mubr.f32.mxu0 0.0
    %2481 = vmatmul.mubr.f32.gmra.mrb[0].mxu0 %v2405
    %v2482 = vpop.f32.mrb[0].mxu0
    %v2483 = vadd.f32 0.0, %v2482
    %v2484 = vpop.f32.mrb[0].mxu0
    %2485 = vmatprep.mubr.f32.mxu0 0.0
    %2486 = vmatmul.mubr.f32.gmra.mrb[0].mxu0 %v2408
    %v2487 = vpop.f32.mrb[0].mxu0
    %v2488 = vadd.f32 0.0, %v2487
    %v2489 = vpop.f32.mrb[0].mxu0
    %2490 = vmatprep.mubr.f32.mxu0 0.0
    %2491 = vmatmul.mubr.f32.gmra.mrb[0].mxu0 %v2411
    %v2492 = vpop.f32.mrb[0].mxu0
    %v2493 = vadd.f32 0.0, %v2492
    %v2494 = vpop.f32.mrb[0].mxu0
    %2495 = vmatprep.mubr.f32.mxu0 0.0
    %2496 = vmatmul.mubr.f32.gmra.mrb[0].mxu0 %v2414
    %v2497 = vpop.f32.mrb[0].mxu0
    %v2498 = vadd.f32 0.0, %v2497
    %v2499 = vpop.f32.mrb[0].mxu0
    %2500 = vdwg.mxu0
    %v2501 = vmul.f32 %v2483, 0.03125
    %v2502 = vmul.f32 %v2488, 0.03125
    %v2503 = vmul.f32 %v2493, 0.03125
    %v2504 = vmul.f32 %v2498, 0.03125
    %v2505 = vsel %vm60, %v2501, -inf
    %2506 = vmax.xlane.f32.xlu0 %v2505
    %v2507 = vpop.xlane.xlu0 %2506
    %v2508 = vsel %vm60, %v2502, -inf
    %2509 = vmax.xlane.f32.xlu0 %v2508
    %v2510 = vpop.xlane.xlu0 %2509
    %v2511 = vsel %vm60, %v2503, -inf
    %2512 = vmax.xlane.f32.xlu0 %v2511
    %v2513 = vpop.xlane.xlu0 %2512
    %v2514 = vsel %vm60, %v2504, -inf
    %2515 = vmax.xlane.f32.xlu0 %v2514
    %v2516 = vpop.xlane.xlu0 %2515
    %v2517 = vsub.f32 %v2501, %v2507
    %v2518 = vsub.f32 %v2502, %v2510
    %v2519 = vsub.f32 %v2503, %v2513
    %v2520 = vsub.f32 %v2504, %v2516
    %v2521 = vmul.f32 %v2517, 1.442695
    %v2522 = vpow.pop %v2521
    %v2523 = vmul.f32 %v2518, 1.442695
    %v2524 = vpow.pop %v2523
    %v2525 = vmul.f32 %v2519, 1.442695
    %v2526 = vpow.pop %v2525
    %v2527 = vmul.f32 %v2520, 1.442695
    %v2528 = vpow.pop %v2527
    %v2529 = vsel %vm60, %v2522, 0.0
    %2530 = vadd.xlane.f32.xlu0 %v2529
    %v2531 = vpop.xlane.xlu0 %2530
    %v2532 = vsel %vm60, %v2524, 0.0
    %2533 = vadd.xlane.f32.xlu0 %v2532
    %v2534 = vpop.xlane.xlu0 %2533
    %v2535 = vsel %vm60, %v2526, 0.0
    %2536 = vadd.xlane.f32.xlu0 %v2535
    %v2537 = vpop.xlane.xlu0 %2536
    %v2538 = vsel %vm60, %v2528, 0.0
    %2539 = vadd.xlane.f32.xlu0 %v2538
    %v2540 = vpop.xlane.xlu0 %2539
    %v2541 = vrcp.pop %v2531
    %v2542 = vrcp.pop %v2534
    %v2543 = vrcp.pop %v2537
    %v2544 = vrcp.pop %v2540
    %v2545 = vmul.f32 %v2522, %v2541
    %v2546 = vmul.f32 %v2524, %v2542
    %v2547 = vmul.f32 %v2526, %v2543
    %v2548 = vmul.f32 %v2528, %v2544
    %v2550 = vsel %vm60, %v2369, 0
    %v2553 = vsel %vm60, %v2545, 0
    %v2556 = vsel %vm60, %v2546, 0
    %v2559 = vsel %vm60, %v2547, 0
    %v2562 = vsel %vm60, %v2548, 0
    %2564 = vmatprep.subr.mxu0 0.0
    %2565 = vmatpush1.xpose.msra.mxu0 %v2553
    %2566 = vmatprep.subr.mxu0 0.0
    %2567 = vmatpush1.xpose.msra.mxu0 %v2556
    %2568 = vmatprep.subr.mxu0 0.0
    %2569 = vmatpush1.xpose.msra.mxu0 %v2559
    %2570 = vmatprep.subr.mxu0 0.0
    %2571 = vmatpush1.xpose.msra.mxu0 %v2562
    %2572 = vmatprep.subr.mxu0 0.0
    %2573 = vmatpush1.xpose.msra.mxu0 0.0
    %2574 = vmatprep.subr.mxu0 0.0
    %2575 = vmatpush1.xpose.msra.mxu0 0.0
    %2576 = vmatprep.subr.mxu0 0.0
    %2577 = vmatpush1.xpose.msra.mxu0 0.0
    %2578 = vmatprep.subr.mxu0 0.0
    %2579 = vmatpush1.xpose.msra.mxu0 0.0
    %2580 = vmatprep.subr.mxu0 0.0
    %2581 = vmatpush1.xpose.msra.mxu0 0.0
    %2582 = vmatprep.subr.mxu0 0.0
    %2583 = vmatpush1.xpose.msra.mxu0 0.0
    %2584 = vmatprep.subr.mxu0 0.0
    %2585 = vmatpush1.xpose.msra.mxu0 0.0
    %2586 = vmatprep.subr.mxu0 0.0
    %2587 = vmatpush1.xpose.msra.mxu0 0.0
    %2588 = vmatprep.subr.mxu0 0.0
    %2589 = vmatpush1.xpose.msra.mxu0 0.0
    %2590 = vmatprep.subr.mxu0 0.0
    %2591 = vmatpush1.xpose.msra.mxu0 0.0
    %2592 = vmatprep.subr.mxu0 0.0
    %2593 = vmatpush1.xpose.msra.mxu0 0.0
    %2594 = vmatprep.subr.mxu0 0.0
    %2595 = vmatpush1.xpose.msra.mxu0 0.0
    %2596 = vmatprep.subr.mxu0 0.0
    %2597 = vmatpush1.xpose.msra.mxu0 0.0
    %2598 = vmatprep.subr.mxu0 0.0
    %2599 = vmatpush1.xpose.msra.mxu0 0.0
    %2600 = vmatprep.subr.mxu0 0.0
    %2601 = vmatpush1.xpose.msra.mxu0 0.0
    %2602 = vmatprep.subr.mxu0 0.0
    %2603 = vmatpush1.xpose.msra.mxu0 0.0
    %2604 = vmatprep.subr.mxu0 0.0
    %2605 = vmatpush1.xpose.msra.mxu0 0.0
    %2606 = vmatprep.subr.mxu0 0.0
    %2607 = vmatpush1.xpose.msra.mxu0 0.0
    %2608 = vmatprep.subr.mxu0 0.0
    %2609 = vmatpush1.xpose.msra.mxu0 0.0
    %2610 = vmatprep.subr.mxu0 0.0
    %2611 = vmatpush1.xpose.msra.mxu0 0.0
    %2612 = vmatprep.subr.mxu0 0.0
    %2613 = vmatpush1.xpose.msra.mxu0 0.0
    %2614 = vmatprep.subr.mxu0 0.0
    %2615 = vmatpush1.xpose.msra.mxu0 0.0
    %2616 = vmatprep.subr.mxu0 0.0
    %2617 = vmatpush1.xpose.msra.mxu0 0.0
    %2618 = vmatprep.subr.mxu0 0.0
    %2619 = vmatpush1.xpose.msra.mxu0 0.0
    %2620 = vmatprep.subr.mxu0 0.0
    %2621 = vmatpush1.xpose.msra.mxu0 0.0
    %2622 = vmatprep.subr.mxu0 0.0
    %2623 = vmatpush1.xpose.msra.mxu0 0.0
    %2624 = vmatprep.subr.mxu0 0.0
    %2625 = vmatpush1.xpose.msra.mxu0 0.0
    %2626 = vmatprep.subr.mxu0 0.0
    %2627 = vmatpush1.xpose.msra.mxu0 0.0
    %2628 = vmatprep.mubr.f32.mxu0 0.0
    %2629 = vmatmul.mubr.f32.gmra.mrb[0].mxu0 %v2550
    %v2630 = vpop.f32.mrb[0].mxu0
    %v2631 = vadd.f32 0.0, %v2630
    %v2632 = vpop.f32.mrb[0].mxu0
    %2633 = vdwg.mxu0
    %2634 = vst.msk [vmem:[#allocation3] sm:$0xff] %vm60, %v2631
    %s2635 = scalar_lea.vmem [#allocation2], 8
    %v2636 = vld [vmem:[%s2635] sm:$0xff]
    %2637 = vmatprep.subr.mxu0 0.0
    %2638 = vmatpush1.msra.mxu0 %v2636
    %2639 = vmatprep.subr.mxu0 0.0
    %2640 = vmatpush1.msra.mxu0 0.0
    %2641 = vmatprep.subr.mxu0 0.0
    %2642 = vmatpush1.msra.mxu0 0.0
    %2643 = vmatprep.subr.mxu0 0.0
    %2644 = vmatpush1.msra.mxu0 0.0
    %2645 = vmatprep.subr.mxu0 0.0
    %2646 = vmatpush1.msra.mxu0 0.0
    %2647 = vmatprep.subr.mxu0 0.0
    %2648 = vmatpush1.msra.mxu0 0.0
    %2649 = vmatprep.subr.mxu0 0.0
    %2650 = vmatpush1.msra.mxu0 0.0
    %2651 = vmatprep.subr.mxu0 0.0
    %2652 = vmatpush1.msra.mxu0 0.0
    %2653 = vmatprep.subr.mxu0 0.0
    %2654 = vmatpush1.msra.mxu0 0.0
    %2655 = vmatprep.subr.mxu0 0.0
    %2656 = vmatpush1.msra.mxu0 0.0
    %2657 = vmatprep.subr.mxu0 0.0
    %2658 = vmatpush1.msra.mxu0 0.0
    %2659 = vmatprep.subr.mxu0 0.0
    %2660 = vmatpush1.msra.mxu0 0.0
    %2661 = vmatprep.subr.mxu0 0.0
    %2662 = vmatpush1.msra.mxu0 0.0
    %2663 = vmatprep.subr.mxu0 0.0
    %2664 = vmatpush1.msra.mxu0 0.0
    %2665 = vmatprep.subr.mxu0 0.0
    %2666 = vmatpush1.msra.mxu0 0.0
    %2667 = vmatprep.subr.mxu0 0.0
    %2668 = vmatpush1.msra.mxu0 0.0
    %2669 = vmatprep.subr.mxu0 0.0
    %2670 = vmatpush1.msra.mxu0 0.0
    %2671 = vmatprep.subr.mxu0 0.0
    %2672 = vmatpush1.msra.mxu0 0.0
    %2673 = vmatprep.subr.mxu0 0.0
    %2674 = vmatpush1.msra.mxu0 0.0
    %2675 = vmatprep.subr.mxu0 0.0
    %2676 = vmatpush1.msra.mxu0 0.0
    %2677 = vmatprep.subr.mxu0 0.0
    %2678 = vmatpush1.msra.mxu0 0.0
    %2679 = vmatprep.subr.mxu0 0.0
    %2680 = vmatpush1.msra.mxu0 0.0
    %2681 = vmatprep.subr.mxu0 0.0
    %2682 = vmatpush1.msra.mxu0 0.0
    %2683 = vmatprep.subr.mxu0 0.0
    %2684 = vmatpush1.msra.mxu0 0.0
    %2685 = vmatprep.subr.mxu0 0.0
    %2686 = vmatpush1.msra.mxu0 0.0
    %2687 = vmatprep.subr.mxu0 0.0
    %2688 = vmatpush1.msra.mxu0 0.0
    %2689 = vmatprep.subr.mxu0 0.0
    %2690 = vmatpush1.msra.mxu0 0.0
    %2691 = vmatprep.subr.mxu0 0.0
    %2692 = vmatpush1.msra.mxu0 0.0
    %2693 = vmatprep.subr.mxu0 0.0
    %2694 = vmatpush1.msra.mxu0 0.0
    %2695 = vmatprep.subr.mxu0 0.0
    %2696 = vmatpush1.msra.mxu0 0.0
    %2697 = vmatprep.subr.mxu0 0.0
    %2698 = vmatpush1.msra.mxu0 0.0
    %2699 = vmatprep.subr.mxu0 0.0
    %2700 = vmatpush1.msra.mxu0 0.0
    %2701 = vmatprep.mubr.f32.mxu0 0.0
    %2702 = vmatmul.mubr.f32.gmra.mrb[0].mxu0 %v2154
    %v2703 = vpop.f32.mrb[0].mxu0
    %v2704 = vadd.f32 0.0, %v2703
    %v2705 = vpop.f32.mrb[0].mxu0
    %2706 = vdwg.mxu0
    %2707 = vmatprep.subr.mxu0 0.0
    %2708 = vmatpush1.msra.mxu0 %v2636
    %2709 = vmatprep.subr.mxu0 0.0
    %2710 = vmatpush1.msra.mxu0 0.0
    %2711 = vmatprep.subr.mxu0 0.0
    %2712 = vmatpush1.msra.mxu0 0.0
    %2713 = vmatprep.subr.mxu0 0.0
    %2714 = vmatpush1.msra.mxu0 0.0
    %2715 = vmatprep.subr.mxu0 0.0
    %2716 = vmatpush1.msra.mxu0 0.0
    %2717 = vmatprep.subr.mxu0 0.0
    %2718 = vmatpush1.msra.mxu0 0.0
    %2719 = vmatprep.subr.mxu0 0.0
    %2720 = vmatpush1.msra.mxu0 0.0
    %2721 = vmatprep.subr.mxu0 0.0
    %2722 = vmatpush1.msra.mxu0 0.0
    %2723 = vmatprep.subr.mxu0 0.0
    %2724 = vmatpush1.msra.mxu0 0.0
    %2725 = vmatprep.subr.mxu0 0.0
    %2726 = vmatpush1.msra.mxu0 0.0
    %2727 = vmatprep.subr.mxu0 0.0
    %2728 = vmatpush1.msra.mxu0 0.0
    %2729 = vmatprep.subr.mxu0 0.0
    %2730 = vmatpush1.msra.mxu0 0.0
    %2731 = vmatprep.subr.mxu0 0.0
    %2732 = vmatpush1.msra.mxu0 0.0
    %2733 = vmatprep.subr.mxu0 0.0
    %2734 = vmatpush1.msra.mxu0 0.0
    %2735 = vmatprep.subr.mxu0 0.0
    %2736 = vmatpush1.msra.mxu0 0.0
    %2737 = vmatprep.subr.mxu0 0.0
    %2738 = vmatpush1.msra.mxu0 0.0
    %2739 = vmatprep.subr.mxu0 0.0
    %2740 = vmatpush1.msra.mxu0 0.0
    %2741 = vmatprep.subr.mxu0 0.0
    %2742 = vmatpush1.msra.mxu0 0.0
    %2743 = vmatprep.subr.mxu0 0.0
    %2744 = vmatpush1.msra.mxu0 0.0
    %2745 = vmatprep.subr.mxu0 0.0
    %2746 = vmatpush1.msra.mxu0 0.0
    %2747 = vmatprep.subr.mxu0 0.0
    %2748 = vmatpush1.msra.mxu0 0.0
    %2749 = vmatprep.subr.mxu0 0.0
    %2750 = vmatpush1.msra.mxu0 0.0
    %2751 = vmatprep.subr.mxu0 0.0
    %2752 = vmatpush1.msra.mxu0 0.0
    %2753 = vmatprep.subr.mxu0 0.0
    %2754 = vmatpush1.msra.mxu0 0.0
    %2755 = vmatprep.subr.mxu0 0.0
    %2756 = vmatpush1.msra.mxu0 0.0
    %2757 = vmatprep.subr.mxu0 0.0
    %2758 = vmatpush1.msra.mxu0 0.0
    %2759 = vmatprep.subr.mxu0 0.0
    %2760 = vmatpush1.msra.mxu0 0.0
    %2761 = vmatprep.subr.mxu0 0.0
    %2762 = vmatpush1.msra.mxu0 0.0
    %2763 = vmatprep.subr.mxu0 0.0
    %2764 = vmatpush1.msra.mxu0 0.0
    %2765 = vmatprep.subr.mxu0 0.0
    %2766 = vmatpush1.msra.mxu0 0.0
    %2767 = vmatprep.subr.mxu0 0.0
    %2768 = vmatpush1.msra.mxu0 0.0
    %2769 = vmatprep.subr.mxu0 0.0
    %2770 = vmatpush1.msra.mxu0 0.0
    %2771 = vmatprep.mubr.f32.mxu0 0.0
    %2772 = vmatmul.mubr.f32.gmra.mrb[0].mxu0 %v2227
    %v2773 = vpop.f32.mrb[0].mxu0
    %v2774 = vadd.f32 0.0, %v2773
    %v2775 = vpop.f32.mrb[0].mxu0
    %2776 = vdwg.mxu0
    %2777 = vmatprep.subr.mxu0 0.0
    %2778 = vmatpush1.msra.mxu0 %v2636
    %2779 = vmatprep.subr.mxu0 0.0
    %2780 = vmatpush1.msra.mxu0 0.0
    %2781 = vmatprep.subr.mxu0 0.0
    %2782 = vmatpush1.msra.mxu0 0.0
    %2783 = vmatprep.subr.mxu0 0.0
    %2784 = vmatpush1.msra.mxu0 0.0
    %2785 = vmatprep.subr.mxu0 0.0
    %2786 = vmatpush1.msra.mxu0 0.0
    %2787 = vmatprep.subr.mxu0 0.0
    %2788 = vmatpush1.msra.mxu0 0.0
    %2789 = vmatprep.subr.mxu0 0.0
    %2790 = vmatpush1.msra.mxu0 0.0
    %2791 = vmatprep.subr.mxu0 0.0
    %2792 = vmatpush1.msra.mxu0 0.0
    %2793 = vmatprep.subr.mxu0 0.0
    %2794 = vmatpush1.msra.mxu0 0.0
    %2795 = vmatprep.subr.mxu0 0.0
    %2796 = vmatpush1.msra.mxu0 0.0
    %2797 = vmatprep.subr.mxu0 0.0
    %2798 = vmatpush1.msra.mxu0 0.0
    %2799 = vmatprep.subr.mxu0 0.0
    %2800 = vmatpush1.msra.mxu0 0.0
    %2801 = vmatprep.subr.mxu0 0.0
    %2802 = vmatpush1.msra.mxu0 0.0
    %2803 = vmatprep.subr.mxu0 0.0
    %2804 = vmatpush1.msra.mxu0 0.0
    %2805 = vmatprep.subr.mxu0 0.0
    %2806 = vmatpush1.msra.mxu0 0.0
    %2807 = vmatprep.subr.mxu0 0.0
    %2808 = vmatpush1.msra.mxu0 0.0
    %2809 = vmatprep.subr.mxu0 0.0
    %2810 = vmatpush1.msra.mxu0 0.0
    %2811 = vmatprep.subr.mxu0 0.0
    %2812 = vmatpush1.msra.mxu0 0.0
    %2813 = vmatprep.subr.mxu0 0.0
    %2814 = vmatpush1.msra.mxu0 0.0
    %2815 = vmatprep.subr.mxu0 0.0
    %2816 = vmatpush1.msra.mxu0 0.0
    %2817 = vmatprep.subr.mxu0 0.0
    %2818 = vmatpush1.msra.mxu0 0.0
    %2819 = vmatprep.subr.mxu0 0.0
    %2820 = vmatpush1.msra.mxu0 0.0
    %2821 = vmatprep.subr.mxu0 0.0
    %2822 = vmatpush1.msra.mxu0 0.0
    %2823 = vmatprep.subr.mxu0 0.0
    %2824 = vmatpush1.msra.mxu0 0.0
    %2825 = vmatprep.subr.mxu0 0.0
    %2826 = vmatpush1.msra.mxu0 0.0
    %2827 = vmatprep.subr.mxu0 0.0
    %2828 = vmatpush1.msra.mxu0 0.0
    %2829 = vmatprep.subr.mxu0 0.0
    %2830 = vmatpush1.msra.mxu0 0.0
    %2831 = vmatprep.subr.mxu0 0.0
    %2832 = vmatpush1.msra.mxu0 0.0
    %2833 = vmatprep.subr.mxu0 0.0
    %2834 = vmatpush1.msra.mxu0 0.0
    %2835 = vmatprep.subr.mxu0 0.0
    %2836 = vmatpush1.msra.mxu0 0.0
    %2837 = vmatprep.subr.mxu0 0.0
    %2838 = vmatpush1.msra.mxu0 0.0
    %2839 = vmatprep.subr.mxu0 0.0
    %2840 = vmatpush1.msra.mxu0 0.0
    %2841 = vmatprep.mubr.f32.mxu0 0.0
    %2842 = vmatmul.mubr.f32.gmra.mrb[0].mxu0 %v2300
    %v2843 = vpop.f32.mrb[0].mxu0
    %v2844 = vadd.f32 0.0, %v2843
    %v2845 = vpop.f32.mrb[0].mxu0
    %2846 = vdwg.mxu0
    %2847 = vxpose.xlu0.b32.start [1/16] %v2704, 128
    %2848 = vxpose.xlu0.b32.cont [2/16] 0.0, 128
    %2849 = vxpose.xlu0.b32.cont [3/16] 0.0, 128
    %2850 = vxpose.xlu0.b32.cont [4/16] 0.0, 128
    %2851 = vxpose.xlu0.b32.cont [5/16] 0.0, 128
    %2852 = vxpose.xlu0.b32.cont [6/16] 0.0, 128
    %2853 = vxpose.xlu0.b32.cont [7/16] 0.0, 128
    %2854 = vxpose.xlu0.b32.cont [8/16] 0.0, 128
    %2855 = vxpose.xlu0.b32.cont [9/16] 0.0, 128
    %2856 = vxpose.xlu0.b32.cont [10/16] 0.0, 128
    %2857 = vxpose.xlu0.b32.cont [11/16] 0.0, 128
    %2858 = vxpose.xlu0.b32.cont [12/16] 0.0, 128
    %2859 = vxpose.xlu0.b32.cont [13/16] 0.0, 128
    %2860 = vxpose.xlu0.b32.cont [14/16] 0.0, 128
    %2861 = vxpose.xlu0.b32.cont [15/16] 0.0, 128
    %2862 = vxpose.xlu0.b32.end [16/16] 0.0, 128
    %v2863 = vpop.trf.xlu0
    %v2864 = vpop.trf.xlu0
    %v2865 = vpop.trf.xlu0
    %v2866 = vpop.trf.xlu0
    %v2867 = vpop.trf.xlu0
    %v2868 = vpop.trf.xlu0
    %v2869 = vpop.trf.xlu0
    %v2870 = vpop.trf.xlu0
    %v2871 = vpop.trf.xlu0
    %v2872 = vpop.trf.xlu0
    %v2873 = vpop.trf.xlu0
    %v2874 = vpop.trf.xlu0
    %v2875 = vpop.trf.xlu0
    %v2876 = vpop.trf.xlu0
    %v2877 = vpop.trf.xlu0
    %v2878 = vpop.trf.xlu0
    %v2880 = vsel %vm2152, %v2863, 0
    %v2883 = vsel %vm2152, %v2864, 0
    %v2886 = vsel %vm2152, %v2865, 0
    %v2889 = vsel %vm2152, %v2866, 0
    %2891 = vmatprep.subr.mxu0 0.0
    %2892 = vmatpush1.msra.mxu0 %v2774
    %2893 = vmatprep.subr.mxu0 0.0
    %2894 = vmatpush1.msra.mxu0 0.0
    %2895 = vmatprep.subr.mxu0 0.0
    %2896 = vmatpush1.msra.mxu0 0.0
    %2897 = vmatprep.subr.mxu0 0.0
    %2898 = vmatpush1.msra.mxu0 0.0
    %2899 = vmatprep.subr.mxu0 0.0
    %2900 = vmatpush1.msra.mxu0 0.0
    %2901 = vmatprep.subr.mxu0 0.0
    %2902 = vmatpush1.msra.mxu0 0.0
    %2903 = vmatprep.subr.mxu0 0.0
    %2904 = vmatpush1.msra.mxu0 0.0
    %2905 = vmatprep.subr.mxu0 0.0
    %2906 = vmatpush1.msra.mxu0 0.0
    %2907 = vmatprep.subr.mxu0 0.0
    %2908 = vmatpush1.msra.mxu0 0.0
    %2909 = vmatprep.subr.mxu0 0.0
    %2910 = vmatpush1.msra.mxu0 0.0
    %2911 = vmatprep.subr.mxu0 0.0
    %2912 = vmatpush1.msra.mxu0 0.0
    %2913 = vmatprep.subr.mxu0 0.0
    %2914 = vmatpush1.msra.mxu0 0.0
    %2915 = vmatprep.subr.mxu0 0.0
    %2916 = vmatpush1.msra.mxu0 0.0
    %2917 = vmatprep.subr.mxu0 0.0
    %2918 = vmatpush1.msra.mxu0 0.0
    %2919 = vmatprep.subr.mxu0 0.0
    %2920 = vmatpush1.msra.mxu0 0.0
    %2921 = vmatprep.subr.mxu0 0.0
    %2922 = vmatpush1.msra.mxu0 0.0
    %2923 = vmatprep.subr.mxu0 0.0
    %2924 = vmatpush1.msra.mxu0 0.0
    %2925 = vmatprep.subr.mxu0 0.0
    %2926 = vmatpush1.msra.mxu0 0.0
    %2927 = vmatprep.subr.mxu0 0.0
    %2928 = vmatpush1.msra.mxu0 0.0
    %2929 = vmatprep.subr.mxu0 0.0
    %2930 = vmatpush1.msra.mxu0 0.0
    %2931 = vmatprep.subr.mxu0 0.0
    %2932 = vmatpush1.msra.mxu0 0.0
    %2933 = vmatprep.subr.mxu0 0.0
    %2934 = vmatpush1.msra.mxu0 0.0
    %2935 = vmatprep.subr.mxu0 0.0
    %2936 = vmatpush1.msra.mxu0 0.0
    %2937 = vmatprep.subr.mxu0 0.0
    %2938 = vmatpush1.msra.mxu0 0.0
    %2939 = vmatprep.subr.mxu0 0.0
    %2940 = vmatpush1.msra.mxu0 0.0
    %2941 = vmatprep.subr.mxu0 0.0
    %2942 = vmatpush1.msra.mxu0 0.0
    %2943 = vmatprep.subr.mxu0 0.0
    %2944 = vmatpush1.msra.mxu0 0.0
    %2945 = vmatprep.subr.mxu0 0.0
    %2946 = vmatpush1.msra.mxu0 0.0
    %2947 = vmatprep.subr.mxu0 0.0
    %2948 = vmatpush1.msra.mxu0 0.0
    %2949 = vmatprep.subr.mxu0 0.0
    %2950 = vmatpush1.msra.mxu0 0.0
    %2951 = vmatprep.subr.mxu0 0.0
    %2952 = vmatpush1.msra.mxu0 0.0
    %2953 = vmatprep.subr.mxu0 0.0
    %2954 = vmatpush1.msra.mxu0 0.0
    %2955 = vmatprep.mubr.f32.mxu0 0.0
    %2956 = vmatmul.mubr.f32.gmra.mrb[0].mxu0 %v2880
    %v2957 = vpop.f32.mrb[0].mxu0
    %v2958 = vadd.f32 0.0, %v2957
    %v2959 = vpop.f32.mrb[0].mxu0
    %2960 = vmatprep.mubr.f32.mxu0 0.0
    %2961 = vmatmul.mubr.f32.gmra.mrb[0].mxu0 %v2883
    %v2962 = vpop.f32.mrb[0].mxu0
    %v2963 = vadd.f32 0.0, %v2962
    %v2964 = vpop.f32.mrb[0].mxu0
    %2965 = vmatprep.mubr.f32.mxu0 0.0
    %2966 = vmatmul.mubr.f32.gmra.mrb[0].mxu0 %v2886
    %v2967 = vpop.f32.mrb[0].mxu0
    %v2968 = vadd.f32 0.0, %v2967
    %v2969 = vpop.f32.mrb[0].mxu0
    %2970 = vmatprep.mubr.f32.mxu0 0.0
    %2971 = vmatmul.mubr.f32.gmra.mrb[0].mxu0 %v2889
    %v2972 = vpop.f32.mrb[0].mxu0
    %v2973 = vadd.f32 0.0, %v2972
    %v2974 = vpop.f32.mrb[0].mxu0
    %2975 = vdwg.mxu0
    %v2976 = vmul.f32 %v2958, 0.03125
    %v2977 = vmul.f32 %v2963, 0.03125
    %v2978 = vmul.f32 %v2968, 0.03125
    %v2979 = vmul.f32 %v2973, 0.03125
    %v2980 = vsel %vm60, %v2976, -inf
    %2981 = vmax.xlane.f32.xlu0 %v2980
    %v2982 = vpop.xlane.xlu0 %2981
    %v2983 = vsel %vm60, %v2977, -inf
    %2984 = vmax.xlane.f32.xlu0 %v2983
    %v2985 = vpop.xlane.xlu0 %2984
    %v2986 = vsel %vm60, %v2978, -inf
    %2987 = vmax.xlane.f32.xlu0 %v2986
    %v2988 = vpop.xlane.xlu0 %2987
    %v2989 = vsel %vm60, %v2979, -inf
    %2990 = vmax.xlane.f32.xlu0 %v2989
    %v2991 = vpop.xlane.xlu0 %2990
    %v2992 = vsub.f32 %v2976, %v2982
    %v2993 = vsub.f32 %v2977, %v2985
    %v2994 = vsub.f32 %v2978, %v2988
    %v2995 = vsub.f32 %v2979, %v2991
    %v2996 = vmul.f32 %v2992, 1.442695
    %v2997 = vpow.pop %v2996
    %v2998 = vmul.f32 %v2993, 1.442695
    %v2999 = vpow.pop %v2998
    %v3000 = vmul.f32 %v2994, 1.442695
    %v3001 = vpow.pop %v3000
    %v3002 = vmul.f32 %v2995, 1.442695
    %v3003 = vpow.pop %v3002
    %v3004 = vsel %vm60, %v2997, 0.0
    %3005 = vadd.xlane.f32.xlu0 %v3004
    %v3006 = vpop.xlane.xlu0 %3005
    %v3007 = vsel %vm60, %v2999, 0.0
    %3008 = vadd.xlane.f32.xlu0 %v3007
    %v3009 = vpop.xlane.xlu0 %3008
    %v3010 = vsel %vm60, %v3001, 0.0
    %3011 = vadd.xlane.f32.xlu0 %v3010
    %v3012 = vpop.xlane.xlu0 %3011
    %v3013 = vsel %vm60, %v3003, 0.0
    %3014 = vadd.xlane.f32.xlu0 %v3013
    %v3015 = vpop.xlane.xlu0 %3014
    %v3016 = vrcp.pop %v3006
    %v3017 = vrcp.pop %v3009
    %v3018 = vrcp.pop %v3012
    %v3019 = vrcp.pop %v3015
    %v3020 = vmul.f32 %v2997, %v3016
    %v3021 = vmul.f32 %v2999, %v3017
    %v3022 = vmul.f32 %v3001, %v3018
    %v3023 = vmul.f32 %v3003, %v3019
    %v3025 = vsel %vm60, %v2844, 0
    %v3028 = vsel %vm60, %v3020, 0
    %v3031 = vsel %vm60, %v3021, 0
    %v3034 = vsel %vm60, %v3022, 0
    %v3037 = vsel %vm60, %v3023, 0
    %3039 = vmatprep.subr.mxu0 0.0
    %3040 = vmatpush1.xpose.msra.mxu0 %v3028
    %3041 = vmatprep.subr.mxu0 0.0
    %3042 = vmatpush1.xpose.msra.mxu0 %v3031
    %3043 = vmatprep.subr.mxu0 0.0
    %3044 = vmatpush1.xpose.msra.mxu0 %v3034
    %3045 = vmatprep.subr.mxu0 0.0
    %3046 = vmatpush1.xpose.msra.mxu0 %v3037
    %3047 = vmatprep.subr.mxu0 0.0
    %3048 = vmatpush1.xpose.msra.mxu0 0.0
    %3049 = vmatprep.subr.mxu0 0.0
    %3050 = vmatpush1.xpose.msra.mxu0 0.0
    %3051 = vmatprep.subr.mxu0 0.0
    %3052 = vmatpush1.xpose.msra.mxu0 0.0
    %3053 = vmatprep.subr.mxu0 0.0
    %3054 = vmatpush1.xpose.msra.mxu0 0.0
    %3055 = vmatprep.subr.mxu0 0.0
    %3056 = vmatpush1.xpose.msra.mxu0 0.0
    %3057 = vmatprep.subr.mxu0 0.0
    %3058 = vmatpush1.xpose.msra.mxu0 0.0
    %3059 = vmatprep.subr.mxu0 0.0
    %3060 = vmatpush1.xpose.msra.mxu0 0.0
    %3061 = vmatprep.subr.mxu0 0.0
    %3062 = vmatpush1.xpose.msra.mxu0 0.0
    %3063 = vmatprep.subr.mxu0 0.0
    %3064 = vmatpush1.xpose.msra.mxu0 0.0
    %3065 = vmatprep.subr.mxu0 0.0
    %3066 = vmatpush1.xpose.msra.mxu0 0.0
    %3067 = vmatprep.subr.mxu0 0.0
    %3068 = vmatpush1.xpose.msra.mxu0 0.0
    %3069 = vmatprep.subr.mxu0 0.0
    %3070 = vmatpush1.xpose.msra.mxu0 0.0
    %3071 = vmatprep.subr.mxu0 0.0
    %3072 = vmatpush1.xpose.msra.mxu0 0.0
    %3073 = vmatprep.subr.mxu0 0.0
    %3074 = vmatpush1.xpose.msra.mxu0 0.0
    %3075 = vmatprep.subr.mxu0 0.0
    %3076 = vmatpush1.xpose.msra.mxu0 0.0
    %3077 = vmatprep.subr.mxu0 0.0
    %3078 = vmatpush1.xpose.msra.mxu0 0.0
    %3079 = vmatprep.subr.mxu0 0.0
    %3080 = vmatpush1.xpose.msra.mxu0 0.0
    %3081 = vmatprep.subr.mxu0 0.0
    %3082 = vmatpush1.xpose.msra.mxu0 0.0
    %3083 = vmatprep.subr.mxu0 0.0
    %3084 = vmatpush1.xpose.msra.mxu0 0.0
    %3085 = vmatprep.subr.mxu0 0.0
    %3086 = vmatpush1.xpose.msra.mxu0 0.0
    %3087 = vmatprep.subr.mxu0 0.0
    %3088 = vmatpush1.xpose.msra.mxu0 0.0
    %3089 = vmatprep.subr.mxu0 0.0
    %3090 = vmatpush1.xpose.msra.mxu0 0.0
    %3091 = vmatprep.subr.mxu0 0.0
    %3092 = vmatpush1.xpose.msra.mxu0 0.0
    %3093 = vmatprep.subr.mxu0 0.0
    %3094 = vmatpush1.xpose.msra.mxu0 0.0
    %3095 = vmatprep.subr.mxu0 0.0
    %3096 = vmatpush1.xpose.msra.mxu0 0.0
    %3097 = vmatprep.subr.mxu0 0.0
    %3098 = vmatpush1.xpose.msra.mxu0 0.0
    %3099 = vmatprep.subr.mxu0 0.0
    %3100 = vmatpush1.xpose.msra.mxu0 0.0
    %3101 = vmatprep.subr.mxu0 0.0
    %3102 = vmatpush1.xpose.msra.mxu0 0.0
    %3103 = vmatprep.mubr.f32.mxu0 0.0
    %3104 = vmatmul.mubr.f32.gmra.mrb[0].mxu0 %v3025
    %v3105 = vpop.f32.mrb[0].mxu0
    %v3106 = vadd.f32 0.0, %v3105
    %v3107 = vpop.f32.mrb[0].mxu0
    %3108 = vdwg.mxu0
    %s3109 = scalar_lea.vmem [#allocation3], 8
    %3110 = vst.msk [vmem:[%s3109] sm:$0xff] %vm60, %v3106
    // Predicated region
    $region38: #{temporal_forward.1} parent=1 // pred_check
      _
    $region39: #{temporal_forward.1} parent=1 // pred_check_branch
      %3112 = sbr.rel (0) target = $region41
    $region40: #{temporal_forward.1} parent=1 // pred_region
      %s3114 = ssub.s32 256, 256
      %3115 = vsyncadd [#allocation4], %s3114
      %s3116 = sshll.u32 [#allocation3], 4
      %s3117 = int_to_ptr.vmem [resolvable:$true] %s3116
      %3122 = dma.vmem_to_hbm [thread:$0]  %s3117, 256, %s9, [#allocation4], 128, 128, 8
    $region41: #{temporal_forward.1} parent=1 // pred_fallthru
      _
    // Predicated region
    $region42: #{temporal_forward.1} parent=1 // pred_check
      _
    $region43: #{temporal_forward.1} parent=1 // pred_check_branch
      %3124 = sbr.rel (0) target = $region45
    $region44: #{temporal_forward.1} parent=1 // pred_region
      _
    $region45: #{temporal_forward.1} parent=1 // pred_fallthru
      _
    // Predicated region
    $region46: #{temporal_forward.1} parent=1 // pred_check
      _
    $region47: #{temporal_forward.1} parent=1 // pred_check_branch
      %3126 = sbr.rel (0) target = $region49
    $region48: #{temporal_forward.1} parent=1 // pred_region
      %3127 = dma.done [#allocation4], 256
    $region49: #{temporal_forward.1} parent=1 // pred_fallthru
      _
    // Predicated region
    $region50: #{temporal_forward.1} parent=1 // pred_check
      _
    $region51: #{temporal_forward.1} parent=1 // pred_check_branch
      %3129 = sbr.rel (0) target = $region53
    $region52: #{temporal_forward.1} parent=1 // pred_region
      _
    $region53: #{temporal_forward.1} parent=1 // pred_fallthru
      _
    %3130 = vsyncpa [#allocation4], 1

</llo_original>
